<compile_context>
chip_gen: v7x
topology: tpu7x:2x2x1
jax: 0.10.0
libtpu: 0.0.40
codegen_flags: <defaults>
</compile_context>

<pallas_src>
import functools

import jax
import jax.numpy as jnp
from jax import lax
from jax.experimental import pallas as pl
from jax.experimental.pallas import tpu as pltpu

# ----------------------- small config consistent with TST --------------------
B = 2
T_STEPS = 3           # T
INPUT_C = 4           # input_c
IMAGE_SIZE = 16       # image_size
DIMS = (8, 16, 32)    # leve_dims
LEVELS = len(DIMS)
EPS = 1e-5

_CP = pltpu.CompilerParams(dimension_semantics=("arbitrary",))


# --------------------------- single-block pallas glue -------------------------
def _block_all(shape):
    zeros = (0,) * len(shape)
    return pl.BlockSpec(shape, lambda i, _z=zeros: _z)


def _pallas_full(kernel, args, out_shapes):
    """One grid step, every operand/result is a full-array VMEM block."""
    single = not isinstance(out_shapes, (tuple, list))
    outs = (out_shapes,) if single else tuple(out_shapes)
    res = pl.pallas_call(
        kernel,
        out_shape=outs,
        grid=(1,),
        in_specs=[_block_all(a.shape) for a in args],
        out_specs=tuple(_block_all(o.shape) for o in outs),
        compiler_params=_CP,
    )(*args)
    return res[0] if single else res


# ------------------------------ Pallas kernels --------------------------------
def _ta_body(x, wqkv_ref, bqkv_ref, wo_ref, bo_ref, out_ref, *, t, c, p):
    """Temporal self-attention on x:(C, T*P) channel-major; writes x + proj."""
    scale = 1.0 / float(c) ** 0.5
    qkv = jnp.dot(wqkv_ref[...], x.astype(jnp.bfloat16),
                  preferred_element_type=jnp.float32) + bqkv_ref[...]   # (3C,T*P)
    qs = [qkv[0:c,         i * p:(i + 1) * p] * scale for i in range(t)]
    ks = [qkv[c:2 * c,     i * p:(i + 1) * p] for i in range(t)]
    vs = [qkv[2 * c:3 * c, i * p:(i + 1) * p] for i in range(t)]
    attns = []
    for i in range(t):
        # per-pixel scores over T key steps: sublane (channel) reduce -> (1, P)
        s = [jnp.sum(qs[i] * ks[j], axis=0, keepdims=True) for j in range(t)]
        m = s[0]
        for j in range(1, t):
            m = jnp.maximum(m, s[j])
        e = [jnp.exp(sj - m) for sj in s]
        den = e[0]
        for j in range(1, t):
            den = den + e[j]
        inv = pl.reciprocal(den, approx=True)                # EUP slot
        acc = (e[0] * inv) * vs[0]
        for j in range(1, t):
            acc = acc + (e[j] * inv) * vs[j]
        attns.append(acc)                                    # (C, P)
    attn = jnp.concatenate(attns, axis=1)                    # (C, T*P)
    proj = jnp.dot(wo_ref[...], attn.astype(jnp.bfloat16),
                   preferred_element_type=jnp.float32) + bo_ref[...]
    out_ref[...] = (x + proj).astype(out_ref.dtype)


def _star_ta_kernel(patch_ref, wc_ref, bc_ref, g_ref, beta_ref,
                    wqkv_ref, bqkv_ref, wo_ref, bo_ref,
                    star_ref, ta_ref, *, t, c, p):
    """3x3 conv (as matmul on pre-built patches) + BN(batch stats) + ReLU + TA0."""
    conv = jnp.dot(wc_ref[...], patch_ref[...],
                   preferred_element_type=jnp.float32) + bc_ref[...]     # (C, M)
    mean = jnp.mean(conv, axis=1, keepdims=True)
    var = jnp.mean(jnp.square(conv - mean), axis=1, keepdims=True)
    scale = g_ref[...] * lax.rsqrt(var + EPS)
    shift = beta_ref[...] - mean * scale
    x = jnp.maximum(conv * scale + shift, 0.0)
    star_ref[...] = x.astype(star_ref.dtype)                 # skip (level 0)
    _ta_body(x, wqkv_ref, bqkv_ref, wo_ref, bo_ref, ta_ref, t=t, c=c, p=p)


def _sa_ta_kernel(m_ref, wsa_ref, bsa_ref, wqkv_ref, bqkv_ref, wo_ref, bo_ref,
                  skip_ref, ta_ref, *, t, c, p):
    """SA (2x2 patch-merge projection + ReLU) followed by TA, fused."""
    x = jnp.dot(wsa_ref[...], m_ref[...].astype(jnp.bfloat16),
                preferred_element_type=jnp.float32) + bsa_ref[...]
    x = jnp.maximum(x, 0.0)                                   # (C, T*P)
    skip_ref[...] = x.astype(skip_ref.dtype)                  # SA output = skip
    _ta_body(x, wqkv_ref, bqkv_ref, wo_ref, bo_ref, ta_ref, t=t, c=c, p=p)


def _matmul_bias_kernel(x_ref, w_ref, b_ref, o_ref, *, relu):
    """Y = W^T @ X + b (optional ReLU); bf16 operands, f32 accumulation."""
    y = jnp.dot(w_ref[...], x_ref[...].astype(jnp.bfloat16),
                preferred_element_type=jnp.float32) + b_ref[...]
    if relu:
        y = jnp.maximum(y, 0.0)
    o_ref[...] = y.astype(o_ref.dtype)


def _convt_skip_kernel(p_ref, w_ref, b_ref, skip_ref, o_ref):
    """4-phase ConvTranspose2d matmul + bias + fused skip residual add."""
    y = jnp.dot(w_ref[...], p_ref[...].astype(jnp.bfloat16),
                preferred_element_type=jnp.float32) + b_ref[...] + skip_ref[...]
    o_ref[...] = y.astype(o_ref.dtype)


def _convt_skip_head_kernel(p_ref, w_ref, b_ref, skip_ref, w3_ref, b3_ref,
                            o_ref, *, t, c0, pq):
    """Last ConvTranspose2d + skip add + Conv3d(T,1,1) head, all fused.

    p_ref:    (4*C1, T*PQ) conv-transpose taps (PQ = B*(H/2)*(W/2))
    skip_ref: (4*C0, T*PQ) level-0 skip in 4-phase layout
    w3_ref:   (T, 4*C0, C0) conv3d weight, per-time slabs
    o_ref:    (4*C0, 4*PQ)  head output, columns (phase, b, m, n)
    """
    y4 = jnp.dot(w_ref[...], p_ref[...].astype(jnp.bfloat16),
                 preferred_element_type=jnp.float32) + b_ref[...] + skip_ref[...]
    head = None
    for step in range(t):
        # gather the 4 phase blocks of this time step on the lane axis: (C0, 4*PQ)
        xt = jnp.concatenate(
            [y4[q * c0:(q + 1) * c0, step * pq:(step + 1) * pq] for q in range(4)],
            axis=1).astype(jnp.bfloat16)
        part = jnp.dot(w3_ref[step], xt, preferred_element_type=jnp.float32)
        head = part if head is None else head + part
    o_ref[...] = (head + b3_ref[...]).astype(o_ref.dtype)


# --------------------------- wrapper layout helpers ----------------------------
def _space_to_depth(y, c, t, b, hh, ww):
    """(C, T*B*H*W) -> (4*C, T*B*(H/2)*(W/2)); rows (r, s, c), cols (t,b,m,n).
    Used both for the SA 2x2 patch merge and for the convT phase/skip layout."""
    yr = y.reshape(c, t, b, hh // 2, 2, ww // 2, 2)
    yr = yr.transpose(4, 6, 0, 1, 2, 3, 5)
    return yr.reshape(4 * c, t * b * (hh // 2) * (ww // 2))


def _from_phase(y4, c, t, b, hh2, ww2):
    """(4*C, T*B*h*w) phase layout -> (C, T*B*(2h)*(2w)) spatial CM layout."""
    yr = y4.reshape(2, 2, c, t, b, hh2, ww2)
    yr = yr.transpose(2, 3, 4, 5, 0, 6, 1)
    return yr.reshape(c, t * b * (2 * hh2) * (2 * ww2))


def _convt_taps(xsp, c, t, b, hh, ww):
    """Build the 4 taps x[m,n], x[m,n+1], x[m+1,n], x[m+1,n+1] (zero-padded
    bottom/right) for the 4-phase ConvTranspose2d.  -> (4*C, T*B*h*w)."""
    xr = xsp.reshape(c, t, b, hh, ww)
    xr = jnp.pad(xr, ((0, 0), (0, 0), (0, 0), (0, 1), (0, 1)))
    taps = [xr[:, :, :, dh:dh + hh, dw:dw + ww] for dh in (0, 1) for dw in (0, 1)]
    return jnp.stack(taps, axis=0).reshape(4 * c, t * b * hh * ww)


def _convT_phase_weight(w):
    """Fused 4-phase weight (4*Cin, 4*Cout) for ConvTranspose2d(k=3,s=2,p=1,op=1).
    w: (Cin, Cout, 3, 3) torch layout.  Rows (tap, cin), cols (phase, cout)."""
    cin, cout = w.shape[0], w.shape[1]
    z = jnp.zeros((cin, cout), w.dtype)
    tap = lambda kh, kw: w[:, :, kh, kw]
    blocks = [
        # tap x[m,   n  ]
        [tap(1, 1), tap(1, 2), tap(2, 1), tap(2, 2)],
        # tap x[m,   n+1]
        [z,         tap(1, 0), z,         tap(2, 0)],
        # tap x[m+1, n  ]
        [z,         z,         tap(0, 1), tap(0, 2)],
        # tap x[m+1, n+1]
        [z,         z,         z,         tap(0, 0)],
    ]
    return jnp.concatenate([jnp.concatenate(r, axis=1) for r in blocks], axis=0)


# -------------------------------- parameters -----------------------------------
def init_params(key):
    """Torch-equivalent random init, pre-flipped / pre-fused / pre-cast to bf16."""
    kit = iter(jax.random.split(key, 48))

    def uni(shape, fan_in):
        bound = 1.0 / float(fan_in) ** 0.5
        return jax.random.uniform(next(kit), shape, jnp.float32, -bound, bound)

    d0 = DIMS[0]
    p = {}

    w = uni((d0, INPUT_C, 3, 3), INPUT_C * 9)                  # torch (O,Cin,3,3)
    p["star_w"] = w.transpose(0, 2, 3, 1).reshape(d0, 9 * INPUT_C).astype(jnp.bfloat16)
    p["star_b"] = uni((d0,), INPUT_C * 9).reshape(d0, 1)
    p["star_g"] = jnp.ones((d0, 1), jnp.float32)
    p["star_beta"] = jnp.zeros((d0, 1), jnp.float32)

    p["ta"], p["sa"] = [], []
    for i in range(LEVELS - 1):
        c, cout = DIMS[i], DIMS[i + 1]
        wq, wk, wv, wo = uni((c, c), c), uni((c, c), c), uni((c, c), c), uni((c, c), c)
        bq, bk, bv, bo = uni((c,), c), uni((c,), c), uni((c,), c), uni((c,), c)
        p["ta"].append({
            "wqkv_t": jnp.concatenate([wq, wk, wv], axis=1).T.astype(jnp.bfloat16),
            "bqkv": jnp.concatenate([bq, bk, bv]).reshape(3 * c, 1),
            "wo_t": wo.T.astype(jnp.bfloat16),
            "bo": bo.reshape(c, 1),
        })
        wsa = uni((4 * c, cout), 4 * c)
        p["sa"].append({"w_t": wsa.T.astype(jnp.bfloat16),
                        "b": uni((cout,), 4 * c).reshape(cout, 1)})

    p["ct"] = []
    for i in range(LEVELS - 1):
        cin = DIMS[LEVELS - 1 - i]
        cout = DIMS[LEVELS - 2 - i]
        wct = uni((cin, cout, 3, 3), cin * 9)                  # torch convT layout
        bct = uni((cout,), cin * 9)
        wph = _convT_phase_weight(wct)                         # (4*cin, 4*cout)
        p["ct"].append({"w_t": wph.T.astype(jnp.bfloat16),     # (4*cout, 4*cin)
                        "b": jnp.tile(bct, 4).reshape(4 * cout, 1)})

    w3 = uni((4 * d0, d0, T_STEPS, 1, 1), d0 * T_STEPS)
    p["c3d_w"] = w3[:, :, :, 0, 0].transpose(2, 0, 1).astype(jnp.bfloat16)  # (T,O,C0)
    p["c3d_b"] = uni((4 * d0,), d0 * T_STEPS).reshape(4 * d0, 1)
    # conv_one / bn_one / shortcut_one / conv_two / bn_two / shortcut_two are
    # dead code in the reference forward (`x = x_up`) and are omitted.
    return p


# -------------------------------- TST forward -----------------------------------
def tst_forward(params, x):
    bb, t, e, h, w = x.shape
    d0, d1, d2 = DIMS

    # ---- layout boundary + im2col (flipped): rows (kh,kw,c), cols (t,b,h,w) ----
    x_cm = x.transpose(2, 1, 0, 3, 4)                          # (C, T, B, H, W)
    xp = jnp.pad(x_cm, ((0, 0), (0, 0), (0, 0), (1, 1), (1, 1)))
    taps = [xp[:, :, :, kh:kh + h, kw:kw + w] for kh in range(3) for kw in range(3)]
    patches = jnp.stack(taps, axis=0).reshape(9 * e, t * bb * h * w)
    patches = patches.astype(jnp.bfloat16)                     # (36, 1536)

    # ---- K1: star conv + BN + ReLU + TA0 ----
    M0 = t * bb * h * w
    P0 = bb * h * w
    ta0 = params["ta"][0]
    star_out, ta0_out = _pallas_full(
        functools.partial(_star_ta_kernel, t=t, c=d0, p=P0),
        (patches, params["star_w"], params["star_b"], params["star_g"],
         params["star_beta"], ta0["wqkv_t"], ta0["bqkv"], ta0["wo_t"], ta0["bo"]),
        (jax.ShapeDtypeStruct((d0, M0), jnp.float32),
         jax.ShapeDtypeStruct((d0, M0), jnp.float32)))

    # ---- K2: SA0 + TA1 (SA0 output is also the decoder skip-1) ----
    merged0 = _space_to_depth(ta0_out, d0, t, bb, h, w)        # (32, 384)
    P1 = bb * (h // 2) * (w // 2)
    ta1, sa0 = params["ta"][1], params["sa"][0]
    skip1, ta1_out = _pallas_full(
        functools.partial(_sa_ta_kernel, t=t, c=d1, p=P1),
        (merged0, sa0["w_t"], sa0["b"],
         ta1["wqkv_t"], ta1["bqkv"], ta1["wo_t"], ta1["bo"]),
        (jax.ShapeDtypeStruct((d1, t * P1), jnp.float32),
         jax.ShapeDtypeStruct((d1, t * P1), jnp.float32)))

    # ---- K3: SA1 (top-level feature) ----
    merged1 = _space_to_depth(ta1_out, d1, t, bb, h // 2, w // 2)   # (64, 96)
    P2 = bb * (h // 4) * (w // 4)
    sa1 = params["sa"][1]
    top = _pallas_full(
        functools.partial(_matmul_bias_kernel, relu=True),
        (merged1, sa1["w_t"], sa1["b"]),
        jax.ShapeDtypeStruct((d2, t * P2), jnp.float32))            # (32, 96)

    # ---- K4: ConvTranspose2d[0] (4x4 -> 8x8, d2 -> d1) + skip-1 add ----
    h2, w2 = h // 4, w // 4
    taps0 = _convt_taps(top, d2, t, bb, h2, w2)                     # (128, 96)
    skip1_ph = _space_to_depth(skip1, d1, t, bb, 2 * h2, 2 * w2)    # (64, 96)
    ct0 = params["ct"][0]
    y0 = _pallas_full(
        _convt_skip_kernel,
        (taps0, ct0["w_t"], ct0["b"], skip1_ph),
        jax.ShapeDtypeStruct((4 * d1, t * P2), jnp.float32))        # (64, 96)
    xup0 = _from_phase(y0, d1, t, bb, h2, w2)                       # (16, 384)

    # ---- K5: ConvTranspose2d[1] (8x8 -> 16x16, d1 -> d0) + skip-0 + Conv3d ----
    h1, w1 = h // 2, w // 2
    taps1 = _convt_taps(xup0, d1, t, bb, h1, w1)                    # (64, 384)
    skip0_ph = _space_to_depth(star_out, d0, t, bb, h, w)           # (32, 384)
    ct1 = params["ct"][1]
    pq = bb * h1 * w1                                               # 128
    head = _pallas_full(
        functools.partial(_convt_skip_head_kernel, t=t, c0=d0, pq=pq),
        (taps1, ct1["w_t"], ct1["b"], skip0_ph, params["c3d_w"], params["c3d_b"]),
        jax.ShapeDtypeStruct((4 * d0, 4 * pq), jnp.float32))        # (32, 512)

    # ---- final pixel shuffle to NCHW (the reference output is the squeezed
    #      Conv3d result; the conv_one/conv_two branch is dead: `x = x_up`) ----
    out = head.reshape(4 * d0, 2, 2, bb, h1, w1)                    # (o,r,s,b,m,n)
    out = out.transpose(3, 0, 4, 1, 5, 2).reshape(bb, 4 * d0, h, w)
    return out


tst_forward_jit = jax.jit(tst_forward)


# ------------------------------------ main ---------------------------------------
if __name__ == "__main__":
    key = jax.random.PRNGKey(0)
    pkey, xkey = jax.random.split(key)
    params = init_params(pkey)
    x = jax.random.normal(xkey, (B, T_STEPS, INPUT_C, IMAGE_SIZE, IMAGE_SIZE),
                          dtype=jnp.float32)
    out = tst_forward_jit(params, x)
    out = jax.block_until_ready(out)
    assert out.shape == (B, 4 * DIMS[0], IMAGE_SIZE, IMAGE_SIZE), out.shape
    assert bool(jnp.all(jnp.isfinite(out)))
    print("KERNEL_OK")
</pallas_src>

<mosaic_0001>
module attributes {stable_mosaic.version = 11 : i64} {
  func.func @_star_ta_kernel(%arg0: i32, %arg1: memref<36x1536xbf16, #tpu.memory_space<vmem>>, %arg2: memref<8x36xbf16, #tpu.memory_space<vmem>>, %arg3: memref<8x1xf32, #tpu.memory_space<vmem>>, %arg4: memref<8x1xf32, #tpu.memory_space<vmem>>, %arg5: memref<8x1xf32, #tpu.memory_space<vmem>>, %arg6: memref<24x8xbf16, #tpu.memory_space<vmem>>, %arg7: memref<24x1xf32, #tpu.memory_space<vmem>>, %arg8: memref<8x8xbf16, #tpu.memory_space<vmem>>, %arg9: memref<8x1xf32, #tpu.memory_space<vmem>>, %arg10: memref<8x1536xf32, #tpu.memory_space<vmem>>, %arg11: memref<8x1536xf32, #tpu.memory_space<vmem>>) attributes {dimension_semantics = [#tpu.dimension_semantics<arbitrary>], iteration_bounds = array<i64: 1>, scalar_prefetch = 0 : i64, scratch_operands = 0 : i64, tpu.core_type = #tpu.core_type<tc>, window_params = [{pipeline_mode = #tpu.pipeline_mode<synchronous>, transform_indices = @transform_0, window_bounds = array<i64: 36, 1536>}, {pipeline_mode = #tpu.pipeline_mode<synchronous>, transform_indices = @transform_1, window_bounds = array<i64: 8, 36>}, {pipeline_mode = #tpu.pipeline_mode<synchronous>, transform_indices = @transform_2, window_bounds = array<i64: 8, 1>}, {pipeline_mode = #tpu.pipeline_mode<synchronous>, transform_indices = @transform_3, window_bounds = array<i64: 8, 1>}, {pipeline_mode = #tpu.pipeline_mode<synchronous>, transform_indices = @transform_4, window_bounds = array<i64: 8, 1>}, {pipeline_mode = #tpu.pipeline_mode<synchronous>, transform_indices = @transform_5, window_bounds = array<i64: 24, 8>}, {pipeline_mode = #tpu.pipeline_mode<synchronous>, transform_indices = @transform_6, window_bounds = array<i64: 24, 1>}, {pipeline_mode = #tpu.pipeline_mode<synchronous>, transform_indices = @transform_7, window_bounds = array<i64: 8, 8>}, {pipeline_mode = #tpu.pipeline_mode<synchronous>, transform_indices = @transform_8, window_bounds = array<i64: 8, 1>}, {pipeline_mode = #tpu.pipeline_mode<synchronous>, transform_indices = @transform_9, window_bounds = array<i64: 8, 1536>}, {pipeline_mode = #tpu.pipeline_mode<synchronous>, transform_indices = @transform_10, window_bounds = array<i64: 8, 1536>}]} {
    %c0 = arith.constant 0 : index
    %c0_0 = arith.constant 0 : index
    %0 = vector.load %arg2[%c0, %c0_0] : memref<8x36xbf16, #tpu.memory_space<vmem>>, vector<8x36xbf16>
    %c0_1 = arith.constant 0 : index
    %c0_2 = arith.constant 0 : index
    %1 = vector.load %arg1[%c0_1, %c0_2] : memref<36x1536xbf16, #tpu.memory_space<vmem>>, vector<36x1536xbf16>
    %cst = arith.constant dense<0.000000e+00> : vector<8x1536xf32>
    %2 = tpu.matmul %0, %1, %cst {dimension_numbers = #tpu.dot_dimension_numbers<[1], [0], [0], [1], [0, 0, 1, 1], [], []>} : vector<8x36xbf16>, vector<36x1536xbf16>, vector<8x1536xf32> -> vector<8x1536xf32>
    %c0_3 = arith.constant 0 : index
    %c0_4 = arith.constant 0 : index
    %3 = vector.load %arg3[%c0_3, %c0_4] : memref<8x1xf32, #tpu.memory_space<vmem>>, vector<8x1xf32>
    %4 = vector.broadcast %3 : vector<8x1xf32> to vector<8x1536xf32>
    %5 = arith.addf %2, %4 : vector<8x1536xf32>
    %cst_5 = arith.constant dense<0.000000e+00> : vector<8xf32>
    %6 = vector.multi_reduction <add>, %5, %cst_5 [1] : vector<8x1536xf32> to vector<8xf32>
    %7 = vector.shape_cast %6 : vector<8xf32> to vector<8x1xf32>
    %cst_6 = arith.constant 1.536000e+03 : f32
    %8 = vector.broadcast %cst_6 : f32 to vector<8x1xf32>
    %9 = arith.divf %7, %8 : vector<8x1xf32>
    %10 = vector.broadcast %9 : vector<8x1xf32> to vector<8x1536xf32>
    %11 = arith.subf %5, %10 : vector<8x1536xf32>
    %12 = arith.mulf %11, %11 : vector<8x1536xf32>
    %cst_7 = arith.constant dense<0.000000e+00> : vector<8xf32>
    %13 = vector.multi_reduction <add>, %12, %cst_7 [1] : vector<8x1536xf32> to vector<8xf32>
    %14 = vector.shape_cast %13 : vector<8xf32> to vector<8x1xf32>
    %cst_8 = arith.constant 1.536000e+03 : f32
    %15 = vector.broadcast %cst_8 : f32 to vector<8x1xf32>
    %16 = arith.divf %14, %15 : vector<8x1xf32>
    %c0_9 = arith.constant 0 : index
    %c0_10 = arith.constant 0 : index
    %17 = vector.load %arg4[%c0_9, %c0_10] : memref<8x1xf32, #tpu.memory_space<vmem>>, vector<8x1xf32>
    %cst_11 = arith.constant 9.99999974E-6 : f32
    %18 = vector.broadcast %cst_11 : f32 to vector<8x1xf32>
    %19 = arith.addf %16, %18 : vector<8x1xf32>
    %20 = math.rsqrt %19 : vector<8x1xf32>
    %21 = arith.mulf %17, %20 : vector<8x1xf32>
    %c0_12 = arith.constant 0 : index
    %c0_13 = arith.constant 0 : index
    %22 = vector.load %arg5[%c0_12, %c0_13] : memref<8x1xf32, #tpu.memory_space<vmem>>, vector<8x1xf32>
    %23 = arith.mulf %9, %21 : vector<8x1xf32>
    %24 = arith.subf %22, %23 : vector<8x1xf32>
    %25 = vector.broadcast %21 : vector<8x1xf32> to vector<8x1536xf32>
    %26 = arith.mulf %5, %25 : vector<8x1536xf32>
    %27 = vector.broadcast %24 : vector<8x1xf32> to vector<8x1536xf32>
    %28 = arith.addf %26, %27 : vector<8x1536xf32>
    %cst_14 = arith.constant 0.000000e+00 : f32
    %29 = vector.broadcast %cst_14 : f32 to vector<8x1536xf32>
    %30 = arith.maximumf %28, %29 : vector<8x1536xf32>
    %c0_15 = arith.constant 0 : index
    %c0_16 = arith.constant 0 : index
    %31 = vector.load %arg10[%c0_15, %c0_16] : memref<8x1536xf32, #tpu.memory_space<vmem>>, vector<8x1536xf32>
    tpu.vector_store %arg10[%c0_15, %c0_16], %30 {strides = array<i32>} : memref<8x1536xf32, #tpu.memory_space<vmem>>, vector<8x1536xf32>,
    %c0_17 = arith.constant 0 : index
    %c0_18 = arith.constant 0 : index
    %32 = vector.load %arg6[%c0_17, %c0_18] : memref<24x8xbf16, #tpu.memory_space<vmem>>, vector<24x8xbf16>
    %33 = arith.truncf %30 : vector<8x1536xf32> to vector<8x1536xbf16>
    %cst_19 = arith.constant dense<0.000000e+00> : vector<24x1536xf32>
    %34 = tpu.matmul %32, %33, %cst_19 {dimension_numbers = #tpu.dot_dimension_numbers<[1], [0], [0], [1], [0, 0, 1, 1], [], []>} : vector<24x8xbf16>, vector<8x1536xbf16>, vector<24x1536xf32> -> vector<24x1536xf32>
    %c0_20 = arith.constant 0 : index
    %c0_21 = arith.constant 0 : index
    %35 = vector.load %arg7[%c0_20, %c0_21] : memref<24x1xf32, #tpu.memory_space<vmem>>, vector<24x1xf32>
    %36 = vector.broadcast %35 : vector<24x1xf32> to vector<24x1536xf32>
    %37 = arith.addf %34, %36 : vector<24x1536xf32>
    %38 = vector.extract_strided_slice %37 {offsets = [0, 0], sizes = [8, 512], strides = [1, 1]} : vector<24x1536xf32> to vector<8x512xf32>
    %cst_22 = arith.constant 0.353553385 : f32
    %39 = vector.broadcast %cst_22 : f32 to vector<8x512xf32>
    %40 = arith.mulf %38, %39 : vector<8x512xf32>
    %41 = vector.extract_strided_slice %37 {offsets = [0, 512], sizes = [8, 512], strides = [1, 1]} : vector<24x1536xf32> to vector<8x512xf32>
    %cst_23 = arith.constant 0.353553385 : f32
    %42 = vector.broadcast %cst_23 : f32 to vector<8x512xf32>
    %43 = arith.mulf %41, %42 : vector<8x512xf32>
    %44 = vector.extract_strided_slice %37 {offsets = [0, 1024], sizes = [8, 512], strides = [1, 1]} : vector<24x1536xf32> to vector<8x512xf32>
    %cst_24 = arith.constant 0.353553385 : f32
    %45 = vector.broadcast %cst_24 : f32 to vector<8x512xf32>
    %46 = arith.mulf %44, %45 : vector<8x512xf32>
    %47 = vector.extract_strided_slice %37 {offsets = [8, 0], sizes = [8, 512], strides = [1, 1]} : vector<24x1536xf32> to vector<8x512xf32>
    %48 = vector.extract_strided_slice %37 {offsets = [8, 512], sizes = [8, 512], strides = [1, 1]} : vector<24x1536xf32> to vector<8x512xf32>
    %49 = vector.extract_strided_slice %37 {offsets = [8, 1024], sizes = [8, 512], strides = [1, 1]} : vector<24x1536xf32> to vector<8x512xf32>
    %50 = vector.extract_strided_slice %37 {offsets = [16, 0], sizes = [8, 512], strides = [1, 1]} : vector<24x1536xf32> to vector<8x512xf32>
    %51 = vector.extract_strided_slice %37 {offsets = [16, 512], sizes = [8, 512], strides = [1, 1]} : vector<24x1536xf32> to vector<8x512xf32>
    %52 = vector.extract_strided_slice %37 {offsets = [16, 1024], sizes = [8, 512], strides = [1, 1]} : vector<24x1536xf32> to vector<8x512xf32>
    %53 = arith.mulf %40, %47 : vector<8x512xf32>
    %cst_25 = arith.constant dense<0.000000e+00> : vector<512xf32>
    %54 = vector.multi_reduction <add>, %53, %cst_25 [0] : vector<8x512xf32> to vector<512xf32>
    %55 = vector.shape_cast %54 : vector<512xf32> to vector<1x512xf32>
    %56 = arith.mulf %40, %48 : vector<8x512xf32>
    %cst_26 = arith.constant dense<0.000000e+00> : vector<512xf32>
    %57 = vector.multi_reduction <add>, %56, %cst_26 [0] : vector<8x512xf32> to vector<512xf32>
    %58 = vector.shape_cast %57 : vector<512xf32> to vector<1x512xf32>
    %59 = arith.mulf %40, %49 : vector<8x512xf32>
    %cst_27 = arith.constant dense<0.000000e+00> : vector<512xf32>
    %60 = vector.multi_reduction <add>, %59, %cst_27 [0] : vector<8x512xf32> to vector<512xf32>
    %61 = vector.shape_cast %60 : vector<512xf32> to vector<1x512xf32>
    %62 = arith.maximumf %55, %58 : vector<1x512xf32>
    %63 = arith.maximumf %62, %61 : vector<1x512xf32>
    %64 = arith.subf %55, %63 : vector<1x512xf32>
    %65 = math.exp %64 : vector<1x512xf32>
    %66 = arith.subf %58, %63 : vector<1x512xf32>
    %67 = math.exp %66 : vector<1x512xf32>
    %68 = arith.subf %61, %63 : vector<1x512xf32>
    %69 = math.exp %68 : vector<1x512xf32>
    %70 = arith.addf %65, %67 : vector<1x512xf32>
    %71 = arith.addf %70, %69 : vector<1x512xf32>
    %72 = tpu.reciprocal %71 {approx = true} : vector<1x512xf32> -> vector<1x512xf32>
    %73 = arith.mulf %65, %72 : vector<1x512xf32>
    %74 = vector.broadcast %73 : vector<1x512xf32> to vector<8x512xf32>
    %75 = arith.mulf %74, %50 : vector<8x512xf32>
    %76 = arith.mulf %67, %72 : vector<1x512xf32>
    %77 = vector.broadcast %76 : vector<1x512xf32> to vector<8x512xf32>
    %78 = arith.mulf %77, %51 : vector<8x512xf32>
    %79 = arith.addf %75, %78 : vector<8x512xf32>
    %80 = arith.mulf %69, %72 : vector<1x512xf32>
    %81 = vector.broadcast %80 : vector<1x512xf32> to vector<8x512xf32>
    %82 = arith.mulf %81, %52 : vector<8x512xf32>
    %83 = arith.addf %79, %82 : vector<8x512xf32>
    %84 = arith.mulf %43, %47 : vector<8x512xf32>
    %cst_28 = arith.constant dense<0.000000e+00> : vector<512xf32>
    %85 = vector.multi_reduction <add>, %84, %cst_28 [0] : vector<8x512xf32> to vector<512xf32>
    %86 = vector.shape_cast %85 : vector<512xf32> to vector<1x512xf32>
    %87 = arith.mulf %43, %48 : vector<8x512xf32>
    %cst_29 = arith.constant dense<0.000000e+00> : vector<512xf32>
    %88 = vector.multi_reduction <add>, %87, %cst_29 [0] : vector<8x512xf32> to vector<512xf32>
    %89 = vector.shape_cast %88 : vector<512xf32> to vector<1x512xf32>
    %90 = arith.mulf %43, %49 : vector<8x512xf32>
    %cst_30 = arith.constant dense<0.000000e+00> : vector<512xf32>
    %91 = vector.multi_reduction <add>, %90, %cst_30 [0] : vector<8x512xf32> to vector<512xf32>
    %92 = vector.shape_cast %91 : vector<512xf32> to vector<1x512xf32>
    %93 = arith.maximumf %86, %89 : vector<1x512xf32>
    %94 = arith.maximumf %93, %92 : vector<1x512xf32>
    %95 = arith.subf %86, %94 : vector<1x512xf32>
    %96 = math.exp %95 : vector<1x512xf32>
    %97 = arith.subf %89, %94 : vector<1x512xf32>
    %98 = math.exp %97 : vector<1x512xf32>
    %99 = arith.subf %92, %94 : vector<1x512xf32>
    %100 = math.exp %99 : vector<1x512xf32>
    %101 = arith.addf %96, %98 : vector<1x512xf32>
    %102 = arith.addf %101, %100 : vector<1x512xf32>
    %103 = tpu.reciprocal %102 {approx = true} : vector<1x512xf32> -> vector<1x512xf32>
    %104 = arith.mulf %96, %103 : vector<1x512xf32>
    %105 = vector.broadcast %104 : vector<1x512xf32> to vector<8x512xf32>
    %106 = arith.mulf %105, %50 : vector<8x512xf32>
    %107 = arith.mulf %98, %103 : vector<1x512xf32>
    %108 = vector.broadcast %107 : vector<1x512xf32> to vector<8x512xf32>
    %109 = arith.mulf %108, %51 : vector<8x512xf32>
    %110 = arith.addf %106, %109 : vector<8x512xf32>
    %111 = arith.mulf %100, %103 : vector<1x512xf32>
    %112 = vector.broadcast %111 : vector<1x512xf32> to vector<8x512xf32>
    %113 = arith.mulf %112, %52 : vector<8x512xf32>
    %114 = arith.addf %110, %113 : vector<8x512xf32>
    %115 = arith.mulf %46, %47 : vector<8x512xf32>
    %cst_31 = arith.constant dense<0.000000e+00> : vector<512xf32>
    %116 = vector.multi_reduction <add>, %115, %cst_31 [0] : vector<8x512xf32> to vector<512xf32>
    %117 = vector.shape_cast %116 : vector<512xf32> to vector<1x512xf32>
    %118 = arith.mulf %46, %48 : vector<8x512xf32>
    %cst_32 = arith.constant dense<0.000000e+00> : vector<512xf32>
    %119 = vector.multi_reduction <add>, %118, %cst_32 [0] : vector<8x512xf32> to vector<512xf32>
    %120 = vector.shape_cast %119 : vector<512xf32> to vector<1x512xf32>
    %121 = arith.mulf %46, %49 : vector<8x512xf32>
    %cst_33 = arith.constant dense<0.000000e+00> : vector<512xf32>
    %122 = vector.multi_reduction <add>, %121, %cst_33 [0] : vector<8x512xf32> to vector<512xf32>
    %123 = vector.shape_cast %122 : vector<512xf32> to vector<1x512xf32>
    %124 = arith.maximumf %117, %120 : vector<1x512xf32>
    %125 = arith.maximumf %124, %123 : vector<1x512xf32>
    %126 = arith.subf %117, %125 : vector<1x512xf32>
    %127 = math.exp %126 : vector<1x512xf32>
    %128 = arith.subf %120, %125 : vector<1x512xf32>
    %129 = math.exp %128 : vector<1x512xf32>
    %130 = arith.subf %123, %125 : vector<1x512xf32>
    %131 = math.exp %130 : vector<1x512xf32>
    %132 = arith.addf %127, %129 : vector<1x512xf32>
    %133 = arith.addf %132, %131 : vector<1x512xf32>
    %134 = tpu.reciprocal %133 {approx = true} : vector<1x512xf32> -> vector<1x512xf32>
    %135 = arith.mulf %127, %134 : vector<1x512xf32>
    %136 = vector.broadcast %135 : vector<1x512xf32> to vector<8x512xf32>
    %137 = arith.mulf %136, %50 : vector<8x512xf32>
    %138 = arith.mulf %129, %134 : vector<1x512xf32>
    %139 = vector.broadcast %138 : vector<1x512xf32> to vector<8x512xf32>
    %140 = arith.mulf %139, %51 : vector<8x512xf32>
    %141 = arith.addf %137, %140 : vector<8x512xf32>
    %142 = arith.mulf %131, %134 : vector<1x512xf32>
    %143 = vector.broadcast %142 : vector<1x512xf32> to vector<8x512xf32>
    %144 = arith.mulf %143, %52 : vector<8x512xf32>
    %145 = arith.addf %141, %144 : vector<8x512xf32>
    %146 = tpu.concatenate %83, %114, %145 in 1 : vector<8x512xf32>, vector<8x512xf32>, vector<8x512xf32> -> vector<8x1536xf32>
    %c0_34 = arith.constant 0 : index
    %c0_35 = arith.constant 0 : index
    %147 = vector.load %arg8[%c0_34, %c0_35] : memref<8x8xbf16, #tpu.memory_space<vmem>>, vector<8x8xbf16>
    %148 = arith.truncf %146 : vector<8x1536xf32> to vector<8x1536xbf16>
    %cst_36 = arith.constant dense<0.000000e+00> : vector<8x1536xf32>
    %149 = tpu.matmul %147, %148, %cst_36 {dimension_numbers = #tpu.dot_dimension_numbers<[1], [0], [0], [1], [0, 0, 1, 1], [], []>} : vector<8x8xbf16>, vector<8x1536xbf16>, vector<8x1536xf32> -> vector<8x1536xf32>
    %c0_37 = arith.constant 0 : index
    %c0_38 = arith.constant 0 : index
    %150 = vector.load %arg9[%c0_37, %c0_38] : memref<8x1xf32, #tpu.memory_space<vmem>>, vector<8x1xf32>
    %151 = vector.broadcast %150 : vector<8x1xf32> to vector<8x1536xf32>
    %152 = arith.addf %149, %151 : vector<8x1536xf32>
    %153 = arith.addf %30, %152 : vector<8x1536xf32>
    %c0_39 = arith.constant 0 : index
    %c0_40 = arith.constant 0 : index
    %154 = vector.load %arg11[%c0_39, %c0_40] : memref<8x1536xf32, #tpu.memory_space<vmem>>, vector<8x1536xf32>
    tpu.vector_store %arg11[%c0_39, %c0_40], %153 {strides = array<i32>} : memref<8x1536xf32, #tpu.memory_space<vmem>>, vector<8x1536xf32>,
    return
  }
  func.func @transform_0(%arg0: i32) -> (i32, i32) {
    %c0_i32 = arith.constant 0 : i32
    %c0_i32_0 = arith.constant 0 : i32
    %c0_i32_1 = arith.constant 0 : i32
    return %c0_i32, %c0_i32_0 : i32, i32
  }
  func.func @transform_1(%arg0: i32) -> (i32, i32) {
    %c0_i32 = arith.constant 0 : i32
    %c0_i32_0 = arith.constant 0 : i32
    %c0_i32_1 = arith.constant 0 : i32
    return %c0_i32, %c0_i32_0 : i32, i32
  }
  func.func @transform_2(%arg0: i32) -> (i32, i32) {
    %c0_i32 = arith.constant 0 : i32
    %c0_i32_0 = arith.constant 0 : i32
    %c0_i32_1 = arith.constant 0 : i32
    return %c0_i32, %c0_i32_0 : i32, i32
  }
  func.func @transform_3(%arg0: i32) -> (i32, i32) {
    %c0_i32 = arith.constant 0 : i32
    %c0_i32_0 = arith.constant 0 : i32
    %c0_i32_1 = arith.constant 0 : i32
    return %c0_i32, %c0_i32_0 : i32, i32
  }
  func.func @transform_4(%arg0: i32) -> (i32, i32) {
    %c0_i32 = arith.constant 0 : i32
    %c0_i32_0 = arith.constant 0 : i32
    %c0_i32_1 = arith.constant 0 : i32
    return %c0_i32, %c0_i32_0 : i32, i32
  }
  func.func @transform_5(%arg0: i32) -> (i32, i32) {
    %c0_i32 = arith.constant 0 : i32
    %c0_i32_0 = arith.constant 0 : i32
    %c0_i32_1 = arith.constant 0 : i32
    return %c0_i32, %c0_i32_0 : i32, i32
  }
  func.func @transform_6(%arg0: i32) -> (i32, i32) {
    %c0_i32 = arith.constant 0 : i32
    %c0_i32_0 = arith.constant 0 : i32
    %c0_i32_1 = arith.constant 0 : i32
    return %c0_i32, %c0_i32_0 : i32, i32
  }
  func.func @transform_7(%arg0: i32) -> (i32, i32) {
    %c0_i32 = arith.constant 0 : i32
    %c0_i32_0 = arith.constant 0 : i32
    %c0_i32_1 = arith.constant 0 : i32
    return %c0_i32, %c0_i32_0 : i32, i32
  }
  func.func @transform_8(%arg0: i32) -> (i32, i32) {
    %c0_i32 = arith.constant 0 : i32
    %c0_i32_0 = arith.constant 0 : i32
    %c0_i32_1 = arith.constant 0 : i32
    return %c0_i32, %c0_i32_0 : i32, i32
  }
  func.func @transform_9(%arg0: i32) -> (i32, i32) {
    %c0_i32 = arith.constant 0 : i32
    %c0_i32_0 = arith.constant 0 : i32
    %c0_i32_1 = arith.constant 0 : i32
    return %c0_i32, %c0_i32_0 : i32, i32
  }
  func.func @transform_10(%arg0: i32) -> (i32, i32) {
    %c0_i32 = arith.constant 0 : i32
    %c0_i32_0 = arith.constant 0 : i32
    %c0_i32_1 = arith.constant 0 : i32
    return %c0_i32, %c0_i32_0 : i32, i32
  }
}

module attributes {stable_mosaic.version = 11 : i64} {
  func.func @_sa_ta_kernel(%arg0: i32, %arg1: memref<32x384xf32, #tpu.memory_space<vmem>>, %arg2: memref<16x32xbf16, #tpu.memory_space<vmem>>, %arg3: memref<16x1xf32, #tpu.memory_space<vmem>>, %arg4: memref<48x16xbf16, #tpu.memory_space<vmem>>, %arg5: memref<48x1xf32, #tpu.memory_space<vmem>>, %arg6: memref<16x16xbf16, #tpu.memory_space<vmem>>, %arg7: memref<16x1xf32, #tpu.memory_space<vmem>>, %arg8: memref<16x384xf32, #tpu.memory_space<vmem>>, %arg9: memref<16x384xf32, #tpu.memory_space<vmem>>) attributes {dimension_semantics = [#tpu.dimension_semantics<arbitrary>], iteration_bounds = array<i64: 1>, scalar_prefetch = 0 : i64, scratch_operands = 0 : i64, tpu.core_type = #tpu.core_type<tc>, window_params = [{pipeline_mode = #tpu.pipeline_mode<synchronous>, transform_indices = @transform_0, window_bounds = array<i64: 32, 384>}, {pipeline_mode = #tpu.pipeline_mode<synchronous>, transform_indices = @transform_1, window_bounds = array<i64: 16, 32>}, {pipeline_mode = #tpu.pipeline_mode<synchronous>, transform_indices = @transform_2, window_bounds = array<i64: 16, 1>}, {pipeline_mode = #tpu.pipeline_mode<synchronous>, transform_indices = @transform_3, window_bounds = array<i64: 48, 16>}, {pipeline_mode = #tpu.pipeline_mode<synchronous>, transform_indices = @transform_4, window_bounds = array<i64: 48, 1>}, {pipeline_mode = #tpu.pipeline_mode<synchronous>, transform_indices = @transform_5, window_bounds = array<i64: 16, 16>}, {pipeline_mode = #tpu.pipeline_mode<synchronous>, transform_indices = @transform_6, window_bounds = array<i64: 16, 1>}, {pipeline_mode = #tpu.pipeline_mode<synchronous>, transform_indices = @transform_7, window_bounds = array<i64: 16, 384>}, {pipeline_mode = #tpu.pipeline_mode<synchronous>, transform_indices = @transform_8, window_bounds = array<i64: 16, 384>}]} {
    %c0 = arith.constant 0 : index
    %c0_0 = arith.constant 0 : index
    %0 = vector.load %arg2[%c0, %c0_0] : memref<16x32xbf16, #tpu.memory_space<vmem>>, vector<16x32xbf16>
    %c0_1 = arith.constant 0 : index
    %c0_2 = arith.constant 0 : index
    %1 = vector.load %arg1[%c0_1, %c0_2] : memref<32x384xf32, #tpu.memory_space<vmem>>, vector<32x384xf32>
    %2 = arith.truncf %1 : vector<32x384xf32> to vector<32x384xbf16>
    %cst = arith.constant dense<0.000000e+00> : vector<16x384xf32>
    %3 = tpu.matmul %0, %2, %cst {dimension_numbers = #tpu.dot_dimension_numbers<[1], [0], [0], [1], [0, 0, 1, 1], [], []>} : vector<16x32xbf16>, vector<32x384xbf16>, vector<16x384xf32> -> vector<16x384xf32>
    %c0_3 = arith.constant 0 : index
    %c0_4 = arith.constant 0 : index
    %4 = vector.load %arg3[%c0_3, %c0_4] : memref<16x1xf32, #tpu.memory_space<vmem>>, vector<16x1xf32>
    %5 = vector.broadcast %4 : vector<16x1xf32> to vector<16x384xf32>
    %6 = arith.addf %3, %5 : vector<16x384xf32>
    %cst_5 = arith.constant 0.000000e+00 : f32
    %7 = vector.broadcast %cst_5 : f32 to vector<16x384xf32>
    %8 = arith.maximumf %6, %7 : vector<16x384xf32>
    %c0_6 = arith.constant 0 : index
    %c0_7 = arith.constant 0 : index
    %9 = vector.load %arg8[%c0_6, %c0_7] : memref<16x384xf32, #tpu.memory_space<vmem>>, vector<16x384xf32>
    tpu.vector_store %arg8[%c0_6, %c0_7], %8 {strides = array<i32>} : memref<16x384xf32, #tpu.memory_space<vmem>>, vector<16x384xf32>,
    %c0_8 = arith.constant 0 : index
    %c0_9 = arith.constant 0 : index
    %10 = vector.load %arg4[%c0_8, %c0_9] : memref<48x16xbf16, #tpu.memory_space<vmem>>, vector<48x16xbf16>
    %11 = arith.truncf %8 : vector<16x384xf32> to vector<16x384xbf16>
    %cst_10 = arith.constant dense<0.000000e+00> : vector<48x384xf32>
    %12 = tpu.matmul %10, %11, %cst_10 {dimension_numbers = #tpu.dot_dimension_numbers<[1], [0], [0], [1], [0, 0, 1, 1], [], []>} : vector<48x16xbf16>, vector<16x384xbf16>, vector<48x384xf32> -> vector<48x384xf32>
    %c0_11 = arith.constant 0 : index
    %c0_12 = arith.constant 0 : index
    %13 = vector.load %arg5[%c0_11, %c0_12] : memref<48x1xf32, #tpu.memory_space<vmem>>, vector<48x1xf32>
    %14 = vector.broadcast %13 : vector<48x1xf32> to vector<48x384xf32>
    %15 = arith.addf %12, %14 : vector<48x384xf32>
    %16 = vector.extract_strided_slice %15 {offsets = [0, 0], sizes = [16, 128], strides = [1, 1]} : vector<48x384xf32> to vector<16x128xf32>
    %cst_13 = arith.constant 2.500000e-01 : f32
    %17 = vector.broadcast %cst_13 : f32 to vector<16x128xf32>
    %18 = arith.mulf %16, %17 : vector<16x128xf32>
    %19 = vector.extract_strided_slice %15 {offsets = [0, 128], sizes = [16, 128], strides = [1, 1]} : vector<48x384xf32> to vector<16x128xf32>
    %cst_14 = arith.constant 2.500000e-01 : f32
    %20 = vector.broadcast %cst_14 : f32 to vector<16x128xf32>
    %21 = arith.mulf %19, %20 : vector<16x128xf32>
    %22 = vector.extract_strided_slice %15 {offsets = [0, 256], sizes = [16, 128], strides = [1, 1]} : vector<48x384xf32> to vector<16x128xf32>
    %cst_15 = arith.constant 2.500000e-01 : f32
    %23 = vector.broadcast %cst_15 : f32 to vector<16x128xf32>
    %24 = arith.mulf %22, %23 : vector<16x128xf32>
    %25 = vector.extract_strided_slice %15 {offsets = [16, 0], sizes = [16, 128], strides = [1, 1]} : vector<48x384xf32> to vector<16x128xf32>
    %26 = vector.extract_strided_slice %15 {offsets = [16, 128], sizes = [16, 128], strides = [1, 1]} : vector<48x384xf32> to vector<16x128xf32>
    %27 = vector.extract_strided_slice %15 {offsets = [16, 256], sizes = [16, 128], strides = [1, 1]} : vector<48x384xf32> to vector<16x128xf32>
    %28 = vector.extract_strided_slice %15 {offsets = [32, 0], sizes = [16, 128], strides = [1, 1]} : vector<48x384xf32> to vector<16x128xf32>
    %29 = vector.extract_strided_slice %15 {offsets = [32, 128], sizes = [16, 128], strides = [1, 1]} : vector<48x384xf32> to vector<16x128xf32>
    %30 = vector.extract_strided_slice %15 {offsets = [32, 256], sizes = [16, 128], strides = [1, 1]} : vector<48x384xf32> to vector<16x128xf32>
    %31 = arith.mulf %18, %25 : vector<16x128xf32>
    %cst_16 = arith.constant dense<0.000000e+00> : vector<128xf32>
    %32 = vector.multi_reduction <add>, %31, %cst_16 [0] : vector<16x128xf32> to vector<128xf32>
    %33 = vector.shape_cast %32 : vector<128xf32> to vector<1x128xf32>
    %34 = arith.mulf %18, %26 : vector<16x128xf32>
    %cst_17 = arith.constant dense<0.000000e+00> : vector<128xf32>
    %35 = vector.multi_reduction <add>, %34, %cst_17 [0] : vector<16x128xf32> to vector<128xf32>
    %36 = vector.shape_cast %35 : vector<128xf32> to vector<1x128xf32>
    %37 = arith.mulf %18, %27 : vector<16x128xf32>
    %cst_18 = arith.constant dense<0.000000e+00> : vector<128xf32>
    %38 = vector.multi_reduction <add>, %37, %cst_18 [0] : vector<16x128xf32> to vector<128xf32>
    %39 = vector.shape_cast %38 : vector<128xf32> to vector<1x128xf32>
    %40 = arith.maximumf %33, %36 : vector<1x128xf32>
    %41 = arith.maximumf %40, %39 : vector<1x128xf32>
    %42 = arith.subf %33, %41 : vector<1x128xf32>
    %43 = math.exp %42 : vector<1x128xf32>
    %44 = arith.subf %36, %41 : vector<1x128xf32>
    %45 = math.exp %44 : vector<1x128xf32>
    %46 = arith.subf %39, %41 : vector<1x128xf32>
    %47 = math.exp %46 : vector<1x128xf32>
    %48 = arith.addf %43, %45 : vector<1x128xf32>
    %49 = arith.addf %48, %47 : vector<1x128xf32>
    %50 = tpu.reciprocal %49 {approx = true} : vector<1x128xf32> -> vector<1x128xf32>
    %51 = arith.mulf %43, %50 : vector<1x128xf32>
    %52 = vector.broadcast %51 : vector<1x128xf32> to vector<16x128xf32>
    %53 = arith.mulf %52, %28 : vector<16x128xf32>
    %54 = arith.mulf %45, %50 : vector<1x128xf32>
    %55 = vector.broadcast %54 : vector<1x128xf32> to vector<16x128xf32>
    %56 = arith.mulf %55, %29 : vector<16x128xf32>
    %57 = arith.addf %53, %56 : vector<16x128xf32>
    %58 = arith.mulf %47, %50 : vector<1x128xf32>
    %59 = vector.broadcast %58 : vector<1x128xf32> to vector<16x128xf32>
    %60 = arith.mulf %59, %30 : vector<16x128xf32>
    %61 = arith.addf %57, %60 : vector<16x128xf32>
    %62 = arith.mulf %21, %25 : vector<16x128xf32>
    %cst_19 = arith.constant dense<0.000000e+00> : vector<128xf32>
    %63 = vector.multi_reduction <add>, %62, %cst_19 [0] : vector<16x128xf32> to vector<128xf32>
    %64 = vector.shape_cast %63 : vector<128xf32> to vector<1x128xf32>
    %65 = arith.mulf %21, %26 : vector<16x128xf32>
    %cst_20 = arith.constant dense<0.000000e+00> : vector<128xf32>
    %66 = vector.multi_reduction <add>, %65, %cst_20 [0] : vector<16x128xf32> to vector<128xf32>
    %67 = vector.shape_cast %66 : vector<128xf32> to vector<1x128xf32>
    %68 = arith.mulf %21, %27 : vector<16x128xf32>
    %cst_21 = arith.constant dense<0.000000e+00> : vector<128xf32>
    %69 = vector.multi_reduction <add>, %68, %cst_21 [0] : vector<16x128xf32> to vector<128xf32>
    %70 = vector.shape_cast %69 : vector<128xf32> to vector<1x128xf32>
    %71 = arith.maximumf %64, %67 : vector<1x128xf32>
    %72 = arith.maximumf %71, %70 : vector<1x128xf32>
    %73 = arith.subf %64, %72 : vector<1x128xf32>
    %74 = math.exp %73 : vector<1x128xf32>
    %75 = arith.subf %67, %72 : vector<1x128xf32>
    %76 = math.exp %75 : vector<1x128xf32>
    %77 = arith.subf %70, %72 : vector<1x128xf32>
    %78 = math.exp %77 : vector<1x128xf32>
    %79 = arith.addf %74, %76 : vector<1x128xf32>
    %80 = arith.addf %79, %78 : vector<1x128xf32>
    %81 = tpu.reciprocal %80 {approx = true} : vector<1x128xf32> -> vector<1x128xf32>
    %82 = arith.mulf %74, %81 : vector<1x128xf32>
    %83 = vector.broadcast %82 : vector<1x128xf32> to vector<16x128xf32>
    %84 = arith.mulf %83, %28 : vector<16x128xf32>
    %85 = arith.mulf %76, %81 : vector<1x128xf32>
    %86 = vector.broadcast %85 : vector<1x128xf32> to vector<16x128xf32>
    %87 = arith.mulf %86, %29 : vector<16x128xf32>
    %88 = arith.addf %84, %87 : vector<16x128xf32>
    %89 = arith.mulf %78, %81 : vector<1x128xf32>
    %90 = vector.broadcast %89 : vector<1x128xf32> to vector<16x128xf32>
    %91 = arith.mulf %90, %30 : vector<16x128xf32>
    %92 = arith.addf %88, %91 : vector<16x128xf32>
    %93 = arith.mulf %24, %25 : vector<16x128xf32>
    %cst_22 = arith.constant dense<0.000000e+00> : vector<128xf32>
    %94 = vector.multi_reduction <add>, %93, %cst_22 [0] : vector<16x128xf32> to vector<128xf32>
    %95 = vector.shape_cast %94 : vector<128xf32> to vector<1x128xf32>
    %96 = arith.mulf %24, %26 : vector<16x128xf32>
    %cst_23 = arith.constant dense<0.000000e+00> : vector<128xf32>
    %97 = vector.multi_reduction <add>, %96, %cst_23 [0] : vector<16x128xf32> to vector<128xf32>
    %98 = vector.shape_cast %97 : vector<128xf32> to vector<1x128xf32>
    %99 = arith.mulf %24, %27 : vector<16x128xf32>
    %cst_24 = arith.constant dense<0.000000e+00> : vector<128xf32>
    %100 = vector.multi_reduction <add>, %99, %cst_24 [0] : vector<16x128xf32> to vector<128xf32>
    %101 = vector.shape_cast %100 : vector<128xf32> to vector<1x128xf32>
    %102 = arith.maximumf %95, %98 : vector<1x128xf32>
    %103 = arith.maximumf %102, %101 : vector<1x128xf32>
    %104 = arith.subf %95, %103 : vector<1x128xf32>
    %105 = math.exp %104 : vector<1x128xf32>
    %106 = arith.subf %98, %103 : vector<1x128xf32>
    %107 = math.exp %106 : vector<1x128xf32>
    %108 = arith.subf %101, %103 : vector<1x128xf32>
    %109 = math.exp %108 : vector<1x128xf32>
    %110 = arith.addf %105, %107 : vector<1x128xf32>
    %111 = arith.addf %110, %109 : vector<1x128xf32>
    %112 = tpu.reciprocal %111 {approx = true} : vector<1x128xf32> -> vector<1x128xf32>
    %113 = arith.mulf %105, %112 : vector<1x128xf32>
    %114 = vector.broadcast %113 : vector<1x128xf32> to vector<16x128xf32>
    %115 = arith.mulf %114, %28 : vector<16x128xf32>
    %116 = arith.mulf %107, %112 : vector<1x128xf32>
    %117 = vector.broadcast %116 : vector<1x128xf32> to vector<16x128xf32>
    %118 = arith.mulf %117, %29 : vector<16x128xf32>
    %119 = arith.addf %115, %118 : vector<16x128xf32>
    %120 = arith.mulf %109, %112 : vector<1x128xf32>
    %121 = vector.broadcast %120 : vector<1x128xf32> to vector<16x128xf32>
    %122 = arith.mulf %121, %30 : vector<16x128xf32>
    %123 = arith.addf %119, %122 : vector<16x128xf32>
    %124 = tpu.concatenate %61, %92, %123 in 1 : vector<16x128xf32>, vector<16x128xf32>, vector<16x128xf32> -> vector<16x384xf32>
    %c0_25 = arith.constant 0 : index
    %c0_26 = arith.constant 0 : index
    %125 = vector.load %arg6[%c0_25, %c0_26] : memref<16x16xbf16, #tpu.memory_space<vmem>>, vector<16x16xbf16>
    %126 = arith.truncf %124 : vector<16x384xf32> to vector<16x384xbf16>
    %cst_27 = arith.constant dense<0.000000e+00> : vector<16x384xf32>
    %127 = tpu.matmul %125, %126, %cst_27 {dimension_numbers = #tpu.dot_dimension_numbers<[1], [0], [0], [1], [0, 0, 1, 1], [], []>} : vector<16x16xbf16>, vector<16x384xbf16>, vector<16x384xf32> -> vector<16x384xf32>
    %c0_28 = arith.constant 0 : index
    %c0_29 = arith.constant 0 : index
    %128 = vector.load %arg7[%c0_28, %c0_29] : memref<16x1xf32, #tpu.memory_space<vmem>>, vector<16x1xf32>
    %129 = vector.broadcast %128 : vector<16x1xf32> to vector<16x384xf32>
    %130 = arith.addf %127, %129 : vector<16x384xf32>
    %131 = arith.addf %8, %130 : vector<16x384xf32>
    %c0_30 = arith.constant 0 : index
    %c0_31 = arith.constant 0 : index
    %132 = vector.load %arg9[%c0_30, %c0_31] : memref<16x384xf32, #tpu.memory_space<vmem>>, vector<16x384xf32>
    tpu.vector_store %arg9[%c0_30, %c0_31], %131 {strides = array<i32>} : memref<16x384xf32, #tpu.memory_space<vmem>>, vector<16x384xf32>,
    return
  }
  func.func @transform_0(%arg0: i32) -> (i32, i32) {
    %c0_i32 = arith.constant 0 : i32
    %c0_i32_0 = arith.constant 0 : i32
    %c0_i32_1 = arith.constant 0 : i32
    return %c0_i32, %c0_i32_0 : i32, i32
  }
  func.func @transform_1(%arg0: i32) -> (i32, i32) {
    %c0_i32 = arith.constant 0 : i32
    %c0_i32_0 = arith.constant 0 : i32
    %c0_i32_1 = arith.constant 0 : i32
    return %c0_i32, %c0_i32_0 : i32, i32
  }
  func.func @transform_2(%arg0: i32) -> (i32, i32) {
    %c0_i32 = arith.constant 0 : i32
    %c0_i32_0 = arith.constant 0 : i32
    %c0_i32_1 = arith.constant 0 : i32
    return %c0_i32, %c0_i32_0 : i32, i32
  }
  func.func @transform_3(%arg0: i32) -> (i32, i32) {
    %c0_i32 = arith.constant 0 : i32
    %c0_i32_0 = arith.constant 0 : i32
    %c0_i32_1 = arith.constant 0 : i32
    return %c0_i32, %c0_i32_0 : i32, i32
  }
  func.func @transform_4(%arg0: i32) -> (i32, i32) {
    %c0_i32 = arith.constant 0 : i32
    %c0_i32_0 = arith.constant 0 : i32
    %c0_i32_1 = arith.constant 0 : i32
    return %c0_i32, %c0_i32_0 : i32, i32
  }
  func.func @transform_5(%arg0: i32) -> (i32, i32) {
    %c0_i32 = arith.constant 0 : i32
    %c0_i32_0 = arith.constant 0 : i32
    %c0_i32_1 = arith.constant 0 : i32
    return %c0_i32, %c0_i32_0 : i32, i32
  }
  func.func @transform_6(%arg0: i32) -> (i32, i32) {
    %c0_i32 = arith.constant 0 : i32
    %c0_i32_0 = arith.constant 0 : i32
    %c0_i32_1 = arith.constant 0 : i32
    return %c0_i32, %c0_i32_0 : i32, i32
  }
  func.func @transform_7(%arg0: i32) -> (i32, i32) {
    %c0_i32 = arith.constant 0 : i32
    %c0_i32_0 = arith.constant 0 : i32
    %c0_i32_1 = arith.constant 0 : i32
    return %c0_i32, %c0_i32_0 : i32, i32
  }
  func.func @transform_8(%arg0: i32) -> (i32, i32) {
    %c0_i32 = arith.constant 0 : i32
    %c0_i32_0 = arith.constant 0 : i32
    %c0_i32_1 = arith.constant 0 : i32
    return %c0_i32, %c0_i32_0 : i32, i32
  }
}

module attributes {stable_mosaic.version = 11 : i64} {
  func.func @_matmul_bias_kernel(%arg0: i32, %arg1: memref<64x96xf32, #tpu.memory_space<vmem>>, %arg2: memref<32x64xbf16, #tpu.memory_space<vmem>>, %arg3: memref<32x1xf32, #tpu.memory_space<vmem>>, %arg4: memref<32x96xf32, #tpu.memory_space<vmem>>) attributes {dimension_semantics = [#tpu.dimension_semantics<arbitrary>], iteration_bounds = array<i64: 1>, scalar_prefetch = 0 : i64, scratch_operands = 0 : i64, tpu.core_type = #tpu.core_type<tc>, window_params = [{pipeline_mode = #tpu.pipeline_mode<synchronous>, transform_indices = @transform_0, window_bounds = array<i64: 64, 96>}, {pipeline_mode = #tpu.pipeline_mode<synchronous>, transform_indices = @transform_1, window_bounds = array<i64: 32, 64>}, {pipeline_mode = #tpu.pipeline_mode<synchronous>, transform_indices = @transform_2, window_bounds = array<i64: 32, 1>}, {pipeline_mode = #tpu.pipeline_mode<synchronous>, transform_indices = @transform_3, window_bounds = array<i64: 32, 96>}]} {
    %c0 = arith.constant 0 : index
    %c0_0 = arith.constant 0 : index
    %0 = vector.load %arg2[%c0, %c0_0] : memref<32x64xbf16, #tpu.memory_space<vmem>>, vector<32x64xbf16>
    %c0_1 = arith.constant 0 : index
    %c0_2 = arith.constant 0 : index
    %1 = vector.load %arg1[%c0_1, %c0_2] : memref<64x96xf32, #tpu.memory_space<vmem>>, vector<64x96xf32>
    %2 = arith.truncf %1 : vector<64x96xf32> to vector<64x96xbf16>
    %cst = arith.constant dense<0.000000e+00> : vector<32x96xf32>
    %3 = tpu.matmul %0, %2, %cst {dimension_numbers = #tpu.dot_dimension_numbers<[1], [0], [0], [1], [0, 0, 1, 1], [], []>} : vector<32x64xbf16>, vector<64x96xbf16>, vector<32x96xf32> -> vector<32x96xf32>
    %c0_3 = arith.constant 0 : index
    %c0_4 = arith.constant 0 : index
    %4 = vector.load %arg3[%c0_3, %c0_4] : memref<32x1xf32, #tpu.memory_space<vmem>>, vector<32x1xf32>
    %5 = vector.broadcast %4 : vector<32x1xf32> to vector<32x96xf32>
    %6 = arith.addf %3, %5 : vector<32x96xf32>
    %cst_5 = arith.constant 0.000000e+00 : f32
    %7 = vector.broadcast %cst_5 : f32 to vector<32x96xf32>
    %8 = arith.maximumf %6, %7 : vector<32x96xf32>
    %c0_6 = arith.constant 0 : index
    %c0_7 = arith.constant 0 : index
    %9 = vector.load %arg4[%c0_6, %c0_7] : memref<32x96xf32, #tpu.memory_space<vmem>>, vector<32x96xf32>
    tpu.vector_store %arg4[%c0_6, %c0_7], %8 {strides = array<i32>} : memref<32x96xf32, #tpu.memory_space<vmem>>, vector<32x96xf32>,
    return
  }
  func.func @transform_0(%arg0: i32) -> (i32, i32) {
    %c0_i32 = arith.constant 0 : i32
    %c0_i32_0 = arith.constant 0 : i32
    %c0_i32_1 = arith.constant 0 : i32
    return %c0_i32, %c0_i32_0 : i32, i32
  }
  func.func @transform_1(%arg0: i32) -> (i32, i32) {
    %c0_i32 = arith.constant 0 : i32
    %c0_i32_0 = arith.constant 0 : i32
    %c0_i32_1 = arith.constant 0 : i32
    return %c0_i32, %c0_i32_0 : i32, i32
  }
  func.func @transform_2(%arg0: i32) -> (i32, i32) {
    %c0_i32 = arith.constant 0 : i32
    %c0_i32_0 = arith.constant 0 : i32
    %c0_i32_1 = arith.constant 0 : i32
    return %c0_i32, %c0_i32_0 : i32, i32
  }
  func.func @transform_3(%arg0: i32) -> (i32, i32) {
    %c0_i32 = arith.constant 0 : i32
    %c0_i32_0 = arith.constant 0 : i32
    %c0_i32_1 = arith.constant 0 : i32
    return %c0_i32, %c0_i32_0 : i32, i32
  }
}

module attributes {stable_mosaic.version = 11 : i64} {
  func.func @_convt_skip_kernel(%arg0: i32, %arg1: memref<128x96xf32, #tpu.memory_space<vmem>>, %arg2: memref<64x128xbf16, #tpu.memory_space<vmem>>, %arg3: memref<64x1xf32, #tpu.memory_space<vmem>>, %arg4: memref<64x96xf32, #tpu.memory_space<vmem>>, %arg5: memref<64x96xf32, #tpu.memory_space<vmem>>) attributes {dimension_semantics = [#tpu.dimension_semantics<arbitrary>], iteration_bounds = array<i64: 1>, scalar_prefetch = 0 : i64, scratch_operands = 0 : i64, tpu.core_type = #tpu.core_type<tc>, window_params = [{pipeline_mode = #tpu.pipeline_mode<synchronous>, transform_indices = @transform_0, window_bounds = array<i64: 128, 96>}, {pipeline_mode = #tpu.pipeline_mode<synchronous>, transform_indices = @transform_1, window_bounds = array<i64: 64, 128>}, {pipeline_mode = #tpu.pipeline_mode<synchronous>, transform_indices = @transform_2, window_bounds = array<i64: 64, 1>}, {pipeline_mode = #tpu.pipeline_mode<synchronous>, transform_indices = @transform_3, window_bounds = array<i64: 64, 96>}, {pipeline_mode = #tpu.pipeline_mode<synchronous>, transform_indices = @transform_4, window_bounds = array<i64: 64, 96>}]} {
    %c0 = arith.constant 0 : index
    %c0_0 = arith.constant 0 : index
    %0 = vector.load %arg2[%c0, %c0_0] : memref<64x128xbf16, #tpu.memory_space<vmem>>, vector<64x128xbf16>
    %c0_1 = arith.constant 0 : index
    %c0_2 = arith.constant 0 : index
    %1 = vector.load %arg1[%c0_1, %c0_2] : memref<128x96xf32, #tpu.memory_space<vmem>>, vector<128x96xf32>
    %2 = arith.truncf %1 : vector<128x96xf32> to vector<128x96xbf16>
    %cst = arith.constant dense<0.000000e+00> : vector<64x96xf32>
    %3 = tpu.matmul %0, %2, %cst {dimension_numbers = #tpu.dot_dimension_numbers<[1], [0], [0], [1], [0, 0, 1, 1], [], []>} : vector<64x128xbf16>, vector<128x96xbf16>, vector<64x96xf32> -> vector<64x96xf32>
    %c0_3 = arith.constant 0 : index
    %c0_4 = arith.constant 0 : index
    %4 = vector.load %arg3[%c0_3, %c0_4] : memref<64x1xf32, #tpu.memory_space<vmem>>, vector<64x1xf32>
    %5 = vector.broadcast %4 : vector<64x1xf32> to vector<64x96xf32>
    %6 = arith.addf %3, %5 : vector<64x96xf32>
    %c0_5 = arith.constant 0 : index
    %c0_6 = arith.constant 0 : index
    %7 = vector.load %arg4[%c0_5, %c0_6] : memref<64x96xf32, #tpu.memory_space<vmem>>, vector<64x96xf32>
    %8 = arith.addf %6, %7 : vector<64x96xf32>
    %c0_7 = arith.constant 0 : index
    %c0_8 = arith.constant 0 : index
    %9 = vector.load %arg5[%c0_7, %c0_8] : memref<64x96xf32, #tpu.memory_space<vmem>>, vector<64x96xf32>
    tpu.vector_store %arg5[%c0_7, %c0_8], %8 {strides = array<i32>} : memref<64x96xf32, #tpu.memory_space<vmem>>, vector<64x96xf32>,
    return
  }
  func.func @transform_0(%arg0: i32) -> (i32, i32) {
    %c0_i32 = arith.constant 0 : i32
    %c0_i32_0 = arith.constant 0 : i32
    %c0_i32_1 = arith.constant 0 : i32
    return %c0_i32, %c0_i32_0 : i32, i32
  }
  func.func @transform_1(%arg0: i32) -> (i32, i32) {
    %c0_i32 = arith.constant 0 : i32
    %c0_i32_0 = arith.constant 0 : i32
    %c0_i32_1 = arith.constant 0 : i32
    return %c0_i32, %c0_i32_0 : i32, i32
  }
  func.func @transform_2(%arg0: i32) -> (i32, i32) {
    %c0_i32 = arith.constant 0 : i32
    %c0_i32_0 = arith.constant 0 : i32
    %c0_i32_1 = arith.constant 0 : i32
    return %c0_i32, %c0_i32_0 : i32, i32
  }
  func.func @transform_3(%arg0: i32) -> (i32, i32) {
    %c0_i32 = arith.constant 0 : i32
    %c0_i32_0 = arith.constant 0 : i32
    %c0_i32_1 = arith.constant 0 : i32
    return %c0_i32, %c0_i32_0 : i32, i32
  }
  func.func @transform_4(%arg0: i32) -> (i32, i32) {
    %c0_i32 = arith.constant 0 : i32
    %c0_i32_0 = arith.constant 0 : i32
    %c0_i32_1 = arith.constant 0 : i32
    return %c0_i32, %c0_i32_0 : i32, i32
  }
}

module attributes {stable_mosaic.version = 11 : i64} {
  func.func @_convt_skip_head_kernel(%arg0: i32, %arg1: memref<64x384xf32, #tpu.memory_space<vmem>>, %arg2: memref<32x64xbf16, #tpu.memory_space<vmem>>, %arg3: memref<32x1xf32, #tpu.memory_space<vmem>>, %arg4: memref<32x384xf32, #tpu.memory_space<vmem>>, %arg5: memref<3x32x8xbf16, #tpu.memory_space<vmem>>, %arg6: memref<32x1xf32, #tpu.memory_space<vmem>>, %arg7: memref<32x512xf32, #tpu.memory_space<vmem>>) attributes {dimension_semantics = [#tpu.dimension_semantics<arbitrary>], iteration_bounds = array<i64: 1>, scalar_prefetch = 0 : i64, scratch_operands = 0 : i64, tpu.core_type = #tpu.core_type<tc>, window_params = [{pipeline_mode = #tpu.pipeline_mode<synchronous>, transform_indices = @transform_0, window_bounds = array<i64: 64, 384>}, {pipeline_mode = #tpu.pipeline_mode<synchronous>, transform_indices = @transform_1, window_bounds = array<i64: 32, 64>}, {pipeline_mode = #tpu.pipeline_mode<synchronous>, transform_indices = @transform_2, window_bounds = array<i64: 32, 1>}, {pipeline_mode = #tpu.pipeline_mode<synchronous>, transform_indices = @transform_3, window_bounds = array<i64: 32, 384>}, {pipeline_mode = #tpu.pipeline_mode<synchronous>, transform_indices = @transform_4, window_bounds = array<i64: 3, 32, 8>}, {pipeline_mode = #tpu.pipeline_mode<synchronous>, transform_indices = @transform_5, window_bounds = array<i64: 32, 1>}, {pipeline_mode = #tpu.pipeline_mode<synchronous>, transform_indices = @transform_6, window_bounds = array<i64: 32, 512>}]} {
    %c0 = arith.constant 0 : index
    %c0_0 = arith.constant 0 : index
    %0 = vector.load %arg2[%c0, %c0_0] : memref<32x64xbf16, #tpu.memory_space<vmem>>, vector<32x64xbf16>
    %c0_1 = arith.constant 0 : index
    %c0_2 = arith.constant 0 : index
    %1 = vector.load %arg1[%c0_1, %c0_2] : memref<64x384xf32, #tpu.memory_space<vmem>>, vector<64x384xf32>
    %2 = arith.truncf %1 : vector<64x384xf32> to vector<64x384xbf16>
    %cst = arith.constant dense<0.000000e+00> : vector<32x384xf32>
    %3 = tpu.matmul %0, %2, %cst {dimension_numbers = #tpu.dot_dimension_numbers<[1], [0], [0], [1], [0, 0, 1, 1], [], []>} : vector<32x64xbf16>, vector<64x384xbf16>, vector<32x384xf32> -> vector<32x384xf32>
    %c0_3 = arith.constant 0 : index
    %c0_4 = arith.constant 0 : index
    %4 = vector.load %arg3[%c0_3, %c0_4] : memref<32x1xf32, #tpu.memory_space<vmem>>, vector<32x1xf32>
    %5 = vector.broadcast %4 : vector<32x1xf32> to vector<32x384xf32>
    %6 = arith.addf %3, %5 : vector<32x384xf32>
    %c0_5 = arith.constant 0 : index
    %c0_6 = arith.constant 0 : index
    %7 = vector.load %arg4[%c0_5, %c0_6] : memref<32x384xf32, #tpu.memory_space<vmem>>, vector<32x384xf32>
    %8 = arith.addf %6, %7 : vector<32x384xf32>
    %9 = vector.extract_strided_slice %8 {offsets = [0, 0], sizes = [8, 128], strides = [1, 1]} : vector<32x384xf32> to vector<8x128xf32>
    %10 = vector.extract_strided_slice %8 {offsets = [8, 0], sizes = [8, 128], strides = [1, 1]} : vector<32x384xf32> to vector<8x128xf32>
    %11 = vector.extract_strided_slice %8 {offsets = [16, 0], sizes = [8, 128], strides = [1, 1]} : vector<32x384xf32> to vector<8x128xf32>
    %12 = vector.extract_strided_slice %8 {offsets = [24, 0], sizes = [8, 128], strides = [1, 1]} : vector<32x384xf32> to vector<8x128xf32>
    %13 = tpu.concatenate %9, %10, %11, %12 in 1 : vector<8x128xf32>, vector<8x128xf32>, vector<8x128xf32>, vector<8x128xf32> -> vector<8x512xf32>
    %14 = arith.truncf %13 : vector<8x512xf32> to vector<8x512xbf16>
    %c0_7 = arith.constant 0 : index
    %c0_8 = arith.constant 0 : index
    %c0_9 = arith.constant 0 : index
    %15 = vector.load %arg5[%c0_7, %c0_8, %c0_9] : memref<3x32x8xbf16, #tpu.memory_space<vmem>>, vector<1x32x8xbf16>
    %16 = vector.shape_cast %15 : vector<1x32x8xbf16> to vector<32x8xbf16>
    %cst_10 = arith.constant dense<0.000000e+00> : vector<32x512xf32>
    %17 = tpu.matmul %16, %14, %cst_10 {dimension_numbers = #tpu.dot_dimension_numbers<[1], [0], [0], [1], [0, 0, 1, 1], [], []>} : vector<32x8xbf16>, vector<8x512xbf16>, vector<32x512xf32> -> vector<32x512xf32>
    %18 = vector.extract_strided_slice %8 {offsets = [0, 128], sizes = [8, 128], strides = [1, 1]} : vector<32x384xf32> to vector<8x128xf32>
    %19 = vector.extract_strided_slice %8 {offsets = [8, 128], sizes = [8, 128], strides = [1, 1]} : vector<32x384xf32> to vector<8x128xf32>
    %20 = vector.extract_strided_slice %8 {offsets = [16, 128], sizes = [8, 128], strides = [1, 1]} : vector<32x384xf32> to vector<8x128xf32>
    %21 = vector.extract_strided_slice %8 {offsets = [24, 128], sizes = [8, 128], strides = [1, 1]} : vector<32x384xf32> to vector<8x128xf32>
    %22 = tpu.concatenate %18, %19, %20, %21 in 1 : vector<8x128xf32>, vector<8x128xf32>, vector<8x128xf32>, vector<8x128xf32> -> vector<8x512xf32>
    %23 = arith.truncf %22 : vector<8x512xf32> to vector<8x512xbf16>
    %c1 = arith.constant 1 : index
    %c0_11 = arith.constant 0 : index
    %c0_12 = arith.constant 0 : index
    %24 = vector.load %arg5[%c1, %c0_11, %c0_12] : memref<3x32x8xbf16, #tpu.memory_space<vmem>>, vector<1x32x8xbf16>
    %25 = vector.shape_cast %24 : vector<1x32x8xbf16> to vector<32x8xbf16>
    %cst_13 = arith.constant dense<0.000000e+00> : vector<32x512xf32>
    %26 = tpu.matmul %25, %23, %cst_13 {dimension_numbers = #tpu.dot_dimension_numbers<[1], [0], [0], [1], [0, 0, 1, 1], [], []>} : vector<32x8xbf16>, vector<8x512xbf16>, vector<32x512xf32> -> vector<32x512xf32>
    %27 = arith.addf %17, %26 : vector<32x512xf32>
    %28 = vector.extract_strided_slice %8 {offsets = [0, 256], sizes = [8, 128], strides = [1, 1]} : vector<32x384xf32> to vector<8x128xf32>
    %29 = vector.extract_strided_slice %8 {offsets = [8, 256], sizes = [8, 128], strides = [1, 1]} : vector<32x384xf32> to vector<8x128xf32>
    %30 = vector.extract_strided_slice %8 {offsets = [16, 256], sizes = [8, 128], strides = [1, 1]} : vector<32x384xf32> to vector<8x128xf32>
    %31 = vector.extract_strided_slice %8 {offsets = [24, 256], sizes = [8, 128], strides = [1, 1]} : vector<32x384xf32> to vector<8x128xf32>
    %32 = tpu.concatenate %28, %29, %30, %31 in 1 : vector<8x128xf32>, vector<8x128xf32>, vector<8x128xf32>, vector<8x128xf32> -> vector<8x512xf32>
    %33 = arith.truncf %32 : vector<8x512xf32> to vector<8x512xbf16>
    %c2 = arith.constant 2 : index
    %c0_14 = arith.constant 0 : index
    %c0_15 = arith.constant 0 : index
    %34 = vector.load %arg5[%c2, %c0_14, %c0_15] : memref<3x32x8xbf16, #tpu.memory_space<vmem>>, vector<1x32x8xbf16>
    %35 = vector.shape_cast %34 : vector<1x32x8xbf16> to vector<32x8xbf16>
    %cst_16 = arith.constant dense<0.000000e+00> : vector<32x512xf32>
    %36 = tpu.matmul %35, %33, %cst_16 {dimension_numbers = #tpu.dot_dimension_numbers<[1], [0], [0], [1], [0, 0, 1, 1], [], []>} : vector<32x8xbf16>, vector<8x512xbf16>, vector<32x512xf32> -> vector<32x512xf32>
    %37 = arith.addf %27, %36 : vector<32x512xf32>
    %c0_17 = arith.constant 0 : index
    %c0_18 = arith.constant 0 : index
    %38 = vector.load %arg6[%c0_17, %c0_18] : memref<32x1xf32, #tpu.memory_space<vmem>>, vector<32x1xf32>
    %39 = vector.broadcast %38 : vector<32x1xf32> to vector<32x512xf32>
    %40 = arith.addf %37, %39 : vector<32x512xf32>
    %c0_19 = arith.constant 0 : index
    %c0_20 = arith.constant 0 : index
    %41 = vector.load %arg7[%c0_19, %c0_20] : memref<32x512xf32, #tpu.memory_space<vmem>>, vector<32x512xf32>
    tpu.vector_store %arg7[%c0_19, %c0_20], %40 {strides = array<i32>} : memref<32x512xf32, #tpu.memory_space<vmem>>, vector<32x512xf32>,
    return
  }
  func.func @transform_0(%arg0: i32) -> (i32, i32) {
    %c0_i32 = arith.constant 0 : i32
    %c0_i32_0 = arith.constant 0 : i32
    %c0_i32_1 = arith.constant 0 : i32
    return %c0_i32, %c0_i32_0 : i32, i32
  }
  func.func @transform_1(%arg0: i32) -> (i32, i32) {
    %c0_i32 = arith.constant 0 : i32
    %c0_i32_0 = arith.constant 0 : i32
    %c0_i32_1 = arith.constant 0 : i32
    return %c0_i32, %c0_i32_0 : i32, i32
  }
  func.func @transform_2(%arg0: i32) -> (i32, i32) {
    %c0_i32 = arith.constant 0 : i32
    %c0_i32_0 = arith.constant 0 : i32
    %c0_i32_1 = arith.constant 0 : i32
    return %c0_i32, %c0_i32_0 : i32, i32
  }
  func.func @transform_3(%arg0: i32) -> (i32, i32) {
    %c0_i32 = arith.constant 0 : i32
    %c0_i32_0 = arith.constant 0 : i32
    %c0_i32_1 = arith.constant 0 : i32
    return %c0_i32, %c0_i32_0 : i32, i32
  }
  func.func @transform_4(%arg0: i32) -> (i32, i32, i32) {
    %c0_i32 = arith.constant 0 : i32
    %c0_i32_0 = arith.constant 0 : i32
    %c0_i32_1 = arith.constant 0 : i32
    %c0_i32_2 = arith.constant 0 : i32
    return %c0_i32, %c0_i32_0, %c0_i32_1 : i32, i32, i32
  }
  func.func @transform_5(%arg0: i32) -> (i32, i32) {
    %c0_i32 = arith.constant 0 : i32
    %c0_i32_0 = arith.constant 0 : i32
    %c0_i32_1 = arith.constant 0 : i32
    return %c0_i32, %c0_i32_0 : i32, i32
  }
  func.func @transform_6(%arg0: i32) -> (i32, i32) {
    %c0_i32 = arith.constant 0 : i32
    %c0_i32_0 = arith.constant 0 : i32
    %c0_i32_1 = arith.constant 0 : i32
    return %c0_i32, %c0_i32_0 : i32, i32
  }
}

</mosaic_0001>

<llo_original>
// kernel: tst_forward.5
$region0: #{tst_forward.5}
  #allocation0 [shape = 'u32[]', space=smem, size = 0x4, offset = 0x4, fixed_abs, tag = 'smem constant byte address 0x4 - core index']
  #allocation1 [shape = 'u32[144,128]{1,0:T(1,128)}', space=vmem, size = 0x12000, scoped, tag = 'internal scratch']
  %s0 = inlined_call_operand.vmem [shape: bf16[36,1536], index: 0, kind: input, shape index: {}]
  %s1 = inlined_call_operand.vmem [shape: bf16[8,36], index: 1, kind: input, shape index: {}]
  %s2 = inlined_call_operand.vmem [shape: f32[8,1], index: 2, kind: input, shape index: {}]
  %s3 = inlined_call_operand.vmem [shape: f32[8,1], index: 3, kind: input, shape index: {}]
  %s4 = inlined_call_operand.vmem [shape: f32[8,1], index: 4, kind: input, shape index: {}]
  %s5 = inlined_call_operand.vmem [shape: bf16[24,8], index: 5, kind: input, shape index: {}]
  %s6 = inlined_call_operand.vmem [shape: f32[24,1], index: 6, kind: input, shape index: {}]
  %s7 = inlined_call_operand.vmem [shape: bf16[8,8], index: 7, kind: input, shape index: {}]
  %s8 = inlined_call_operand.vmem [shape: f32[8,1], index: 8, kind: input, shape index: {}]
  %s9 = inlined_call_operand.vmem [shape: f32[8,1536], index: 9, kind: output, shape index: {0}]
  %s10 = inlined_call_operand.vmem [shape: f32[8,1536], index: 10, kind: output, shape index: {1}]
  %11 = xla_tuple %s9, %s10
  %s12 = sld [smem:[#allocation0]]
  $region54: #{tst_forward.5} parent=0
    _
  %s14 = ssub.s32 1, %s12
  %s15 = scalar_select 0, %s14, %s12
  // Predicated region
  $region2: #{tst_forward.5} parent=0 // pred_check
    _
  $region3: #{tst_forward.5} parent=0 // pred_check_branch
    %17 = sbr.rel (0) target = $region5
  $region4: #{tst_forward.5} parent=0 // pred_region
    _
  $region5: #{tst_forward.5} parent=0 // pred_fallthru
    _
  // Predicated region
  $region6: #{tst_forward.5} parent=0 // pred_check
    _
  $region7: #{tst_forward.5} parent=0 // pred_check_branch
    %19 = sbr.rel (0) target = $region9
  $region8: #{tst_forward.5} parent=0 // pred_region
    _
  $region9: #{tst_forward.5} parent=0 // pred_fallthru
    _
  // Predicated region
  $region10: #{tst_forward.5} parent=0 // pred_check
    _
  $region11: #{tst_forward.5} parent=0 // pred_check_branch
    %21 = sbr.rel (0) target = $region13
  $region12: #{tst_forward.5} parent=0 // pred_region
    _
  $region13: #{tst_forward.5} parent=0 // pred_fallthru
    _
  // Predicated region
  $region14: #{tst_forward.5} parent=0 // pred_check
    _
  $region15: #{tst_forward.5} parent=0 // pred_check_branch
    %23 = sbr.rel (0) target = $region17
  $region16: #{tst_forward.5} parent=0 // pred_region
    _
  $region17: #{tst_forward.5} parent=0 // pred_fallthru
    _
  // Predicated region
  $region18: #{tst_forward.5} parent=0 // pred_check
    _
  $region19: #{tst_forward.5} parent=0 // pred_check_branch
    %25 = sbr.rel (0) target = $region21
  $region20: #{tst_forward.5} parent=0 // pred_region
    _
  $region21: #{tst_forward.5} parent=0 // pred_fallthru
    _
  // Predicated region
  $region22: #{tst_forward.5} parent=0 // pred_check
    _
  $region23: #{tst_forward.5} parent=0 // pred_check_branch
    %27 = sbr.rel (0) target = $region25
  $region24: #{tst_forward.5} parent=0 // pred_region
    _
  $region25: #{tst_forward.5} parent=0 // pred_fallthru
    _
  // Predicated region
  $region26: #{tst_forward.5} parent=0 // pred_check
    _
  $region27: #{tst_forward.5} parent=0 // pred_check_branch
    %29 = sbr.rel (0) target = $region29
  $region28: #{tst_forward.5} parent=0 // pred_region
    _
  $region29: #{tst_forward.5} parent=0 // pred_fallthru
    _
  // Predicated region
  $region30: #{tst_forward.5} parent=0 // pred_check
    _
  $region31: #{tst_forward.5} parent=0 // pred_check_branch
    %31 = sbr.rel (0) target = $region33
  $region32: #{tst_forward.5} parent=0 // pred_region
    _
  $region33: #{tst_forward.5} parent=0 // pred_fallthru
    _
  // Predicated region
  $region34: #{tst_forward.5} parent=0 // pred_check
    _
  $region35: #{tst_forward.5} parent=0 // pred_check_branch
    %33 = sbr.rel (0) target = $region37
  $region36: #{tst_forward.5} parent=0 // pred_region
    _
  $region37: #{tst_forward.5} parent=0 // pred_fallthru
    _
  %v35 = vld [vmem:[%s1] sm:$0xf]
  %v36 = vld [vmem:[%s0] sm:$0xff]
  %v37 = vld [vmem:[%s0 + $0x8] sm:$0xff]
  %v38 = vld [vmem:[%s0 + $0x10] sm:$0xff]
  %v39 = vld [vmem:[%s0 + $0x18] sm:$0xff]
  %v40 = vld [vmem:[%s0 + $0x20] sm:$0xff]
  %v41 = vld [vmem:[%s0 + $0x28] sm:$0xff]
  %v42 = vld [vmem:[%s0 + $0x30] sm:$0xff]
  %v43 = vld [vmem:[%s0 + $0x38] sm:$0xff]
  %v44 = vld [vmem:[%s0 + $0x40] sm:$0xff]
  %v45 = vld [vmem:[%s0 + $0x48] sm:$0xff]
  %v46 = vld [vmem:[%s0 + $0x50] sm:$0xff]
  %v47 = vld [vmem:[%s0 + $0x58] sm:$0xff]
  %v48 = vld [vmem:[%s0 + $0x60] sm:$0xff]
  %v49 = vld [vmem:[%s0 + $0x68] sm:$0xff]
  %v50 = vld [vmem:[%s0 + $0x70] sm:$0xff]
  %v51 = vld [vmem:[%s0 + $0x78] sm:$0xff]
  %v52 = vld [vmem:[%s0 + $0x80] sm:$0xff]
  %v53 = vld [vmem:[%s0 + $0x88] sm:$0xff]
  %v54 = vld [vmem:[%s0 + $0x90] sm:$0xff]
  %v55 = vld [vmem:[%s0 + $0x98] sm:$0xff]
  %v56 = vld [vmem:[%s0 + $0xa0] sm:$0xff]
  %v57 = vld [vmem:[%s0 + $0xa8] sm:$0xff]
  %v58 = vld [vmem:[%s0 + $0xb0] sm:$0xff]
  %v59 = vld [vmem:[%s0 + $0xb8] sm:$0xff]
  %v60 = vld [vmem:[%s0 + $0xc0] sm:$0x33]
  %v61 = vld [vmem:[%s0 + $0xc8] sm:$0x33]
  %v62 = vld [vmem:[%s0 + $0xd0] sm:$0x33]
  %v63 = vld [vmem:[%s0 + $0xd8] sm:$0x33]
  %v64 = vld [vmem:[%s0 + $0xe0] sm:$0x33]
  %v65 = vld [vmem:[%s0 + $0xe8] sm:$0x33]
  %v66 = vld [vmem:[%s2] sm:$0xff]
  %68 = vset.pattern.permute.xlu0 0
  %69 = vperm.xlu0 %68, %v66
  %v70 = vpop.permute.xlu0 %69
  %v102 = vunpack.c.l.b16 %v36
  %v103 = vunpack.c.h.b16 %v36
  %v104 = vunpack.c.l.b16 %v37
  %v105 = vunpack.c.h.b16 %v37
  %v106 = vunpack.c.l.b16 %v38
  %v107 = vunpack.c.h.b16 %v38
  %v108 = vunpack.c.l.b16 %v39
  %v109 = vunpack.c.h.b16 %v39
  %v110 = vunpack.c.l.b16 %v40
  %v111 = vunpack.c.h.b16 %v40
  %v112 = vunpack.c.l.b16 %v41
  %v113 = vunpack.c.h.b16 %v41
  %v114 = vunpack.c.l.b16 %v42
  %v115 = vunpack.c.h.b16 %v42
  %v116 = vunpack.c.l.b16 %v43
  %v117 = vunpack.c.h.b16 %v43
  %v118 = vunpack.c.l.b16 %v44
  %v119 = vunpack.c.h.b16 %v44
  %v120 = vunpack.c.l.b16 %v45
  %v121 = vunpack.c.h.b16 %v45
  %v122 = vunpack.c.l.b16 %v46
  %v123 = vunpack.c.h.b16 %v46
  %v124 = vunpack.c.l.b16 %v47
  %v125 = vunpack.c.h.b16 %v47
  %v126 = vunpack.c.l.b16 %v48
  %v127 = vunpack.c.h.b16 %v48
  %v128 = vunpack.c.l.b16 %v49
  %v129 = vunpack.c.h.b16 %v49
  %v130 = vunpack.c.l.b16 %v50
  %v131 = vunpack.c.h.b16 %v50
  %v132 = vunpack.c.l.b16 %v51
  %v133 = vunpack.c.h.b16 %v51
  %v134 = vunpack.c.l.b16 %v52
  %v135 = vunpack.c.h.b16 %v52
  %v136 = vunpack.c.l.b16 %v53
  %v137 = vunpack.c.h.b16 %v53
  %v138 = vunpack.c.l.b16 %v54
  %v139 = vunpack.c.h.b16 %v54
  %v140 = vunpack.c.l.b16 %v55
  %v141 = vunpack.c.h.b16 %v55
  %v142 = vunpack.c.l.b16 %v56
  %v143 = vunpack.c.h.b16 %v56
  %v144 = vunpack.c.l.b16 %v57
  %v145 = vunpack.c.h.b16 %v57
  %v146 = vunpack.c.l.b16 %v58
  %v147 = vunpack.c.h.b16 %v58
  %v148 = vunpack.c.l.b16 %v59
  %v149 = vunpack.c.h.b16 %v59
  %v150 = vunpack.c.l.b16 %v60
  %v151 = vunpack.c.h.b16 %v60
  %v152 = vunpack.c.l.b16 %v61
  %v153 = vunpack.c.h.b16 %v61
  %v154 = vunpack.c.l.b16 %v62
  %v155 = vunpack.c.h.b16 %v62
  %v156 = vunpack.c.l.b16 %v63
  %v157 = vunpack.c.h.b16 %v63
  %v158 = vunpack.c.l.b16 %v64
  %v159 = vunpack.c.h.b16 %v64
  %v160 = vunpack.c.l.b16 %v65
  %v161 = vunpack.c.h.b16 %v65
  %v162 = vpack.c.b16 %v114, %v102
  %v163 = vpack.c.b16 %v115, %v103
  %v164 = vpack.c.b16 %v116, %v104
  %v165 = vpack.c.b16 %v117, %v105
  %v166 = vpack.c.b16 %v118, %v106
  %v167 = vpack.c.b16 %v119, %v107
  %v168 = vpack.c.b16 %v120, %v108
  %v169 = vpack.c.b16 %v121, %v109
  %v170 = vpack.c.b16 %v122, %v110
  %v171 = vpack.c.b16 %v123, %v111
  %v172 = vpack.c.b16 %v124, %v112
  %v173 = vpack.c.b16 %v125, %v113
  %v174 = vpack.c.b16 %v138, %v126
  %v175 = vpack.c.b16 %v139, %v127
  %v176 = vpack.c.b16 %v140, %v128
  %v177 = vpack.c.b16 %v141, %v129
  %v178 = vpack.c.b16 %v142, %v130
  %v179 = vpack.c.b16 %v143, %v131
  %v180 = vpack.c.b16 %v144, %v132
  %v181 = vpack.c.b16 %v145, %v133
  %v182 = vpack.c.b16 %v146, %v134
  %v183 = vpack.c.b16 %v147, %v135
  %v184 = vpack.c.b16 %v148, %v136
  %v185 = vpack.c.b16 %v149, %v137
  %v186 = vpack.c.b16 %v150, %v150
  %v187 = vpack.c.b16 %v151, %v151
  %v188 = vpack.c.b16 %v152, %v152
  %v189 = vpack.c.b16 %v153, %v153
  %v190 = vpack.c.b16 %v154, %v154
  %v191 = vpack.c.b16 %v155, %v155
  %v192 = vpack.c.b16 %v156, %v156
  %v193 = vpack.c.b16 %v157, %v157
  %v194 = vpack.c.b16 %v158, %v158
  %v195 = vpack.c.b16 %v159, %v159
  %v196 = vpack.c.b16 %v160, %v160
  %v197 = vpack.c.b16 %v161, %v161
  %vm222 = vcmask 293888
  %v224 = vsel %vm222, %v35, 0
  %vm226 = vcmask 1041408
  %v228 = vsel %vm226, %v186, 0
  %v231 = vsel %vm226, %v187, 0
  %v234 = vsel %vm226, %v188, 0
  %v237 = vsel %vm226, %v189, 0
  %v240 = vsel %vm226, %v190, 0
  %v243 = vsel %vm226, %v191, 0
  %v246 = vsel %vm226, %v192, 0
  %v249 = vsel %vm226, %v193, 0
  %v252 = vsel %vm226, %v194, 0
  %v255 = vsel %vm226, %v195, 0
  %v258 = vsel %vm226, %v196, 0
  %v261 = vsel %vm226, %v197, 0
  %263 = vmatprep.subr.bf16.mxu0 %v163
  %264 = vmatpush1.bf16.msra.mxu0 %v162
  %265 = vmatprep.subr.bf16.mxu0 %v175
  %266 = vmatpush1.bf16.msra.mxu0 %v174
  %267 = vmatprep.subr.bf16.mxu0 %v231
  %268 = vmatpush1.bf16.msra.mxu0 %v228
  %269 = vmatprep.subr.bf16.mxu0 0
  %270 = vmatpush1.bf16.msra.mxu0 0
  %271 = vmatprep.subr.bf16.mxu0 0
  %272 = vmatpush1.bf16.msra.mxu0 0
  %273 = vmatprep.subr.bf16.mxu0 0
  %274 = vmatpush1.bf16.msra.mxu0 0
  %275 = vmatprep.subr.bf16.mxu0 0
  %276 = vmatpush1.bf16.msra.mxu0 0
  %277 = vmatprep.subr.bf16.mxu0 0
  %278 = vmatpush1.bf16.msra.mxu0 0
  %279 = vmatprep.subr.bf16.mxu0 0
  %280 = vmatpush1.bf16.msra.mxu0 0
  %281 = vmatprep.subr.bf16.mxu0 0
  %282 = vmatpush1.bf16.msra.mxu0 0
  %283 = vmatprep.subr.bf16.mxu0 0
  %284 = vmatpush1.bf16.msra.mxu0 0
  %285 = vmatprep.subr.bf16.mxu0 0
  %286 = vmatpush1.bf16.msra.mxu0 0
  %287 = vmatprep.subr.bf16.mxu0 0
  %288 = vmatpush1.bf16.msra.mxu0 0
  %289 = vmatprep.subr.bf16.mxu0 0
  %290 = vmatpush1.bf16.msra.mxu0 0
  %291 = vmatprep.subr.bf16.mxu0 0
  %292 = vmatpush1.bf16.msra.mxu0 0
  %293 = vmatprep.subr.bf16.mxu0 0
  %294 = vmatpush1.bf16.msra.mxu0 0
  %295 = vmatprep.mubr.bf16.mxu0 0
  %296 = vmatmul.mubr.bf16.gmra.mrb[0].mxu0 %v224
  %v297 = vpop.f32.mrb[0].mxu0
  %v298 = vadd.f32 %v70, %v297
  %v299 = vpop.f32.mrb[0].mxu0
  %v300 = vadd.f32 %v70, %v299
  %v301 = vpop.f32.mrb[0].mxu0
  %v302 = vpop.f32.mrb[0].mxu0
  %303 = vdwg.mxu0
  %304 = vmatprep.subr.bf16.mxu0 %v165
  %305 = vmatpush1.bf16.msra.mxu0 %v164
  %306 = vmatprep.subr.bf16.mxu0 %v177
  %307 = vmatpush1.bf16.msra.mxu0 %v176
  %308 = vmatprep.subr.bf16.mxu0 %v237
  %309 = vmatpush1.bf16.msra.mxu0 %v234
  %310 = vmatprep.subr.bf16.mxu0 0
  %311 = vmatpush1.bf16.msra.mxu0 0
  %312 = vmatprep.subr.bf16.mxu0 0
  %313 = vmatpush1.bf16.msra.mxu0 0
  %314 = vmatprep.subr.bf16.mxu0 0
  %315 = vmatpush1.bf16.msra.mxu0 0
  %316 = vmatprep.subr.bf16.mxu0 0
  %317 = vmatpush1.bf16.msra.mxu0 0
  %318 = vmatprep.subr.bf16.mxu0 0
  %319 = vmatpush1.bf16.msra.mxu0 0
  %320 = vmatprep.subr.bf16.mxu0 0
  %321 = vmatpush1.bf16.msra.mxu0 0
  %322 = vmatprep.subr.bf16.mxu0 0
  %323 = vmatpush1.bf16.msra.mxu0 0
  %324 = vmatprep.subr.bf16.mxu0 0
  %325 = vmatpush1.bf16.msra.mxu0 0
  %326 = vmatprep.subr.bf16.mxu0 0
  %327 = vmatpush1.bf16.msra.mxu0 0
  %328 = vmatprep.subr.bf16.mxu0 0
  %329 = vmatpush1.bf16.msra.mxu0 0
  %330 = vmatprep.subr.bf16.mxu0 0
  %331 = vmatpush1.bf16.msra.mxu0 0
  %332 = vmatprep.subr.bf16.mxu0 0
  %333 = vmatpush1.bf16.msra.mxu0 0
  %334 = vmatprep.subr.bf16.mxu0 0
  %335 = vmatpush1.bf16.msra.mxu0 0
  %336 = vmatprep.mubr.bf16.mxu0 0
  %337 = vmatmul.mubr.bf16.gmra.mrb[0].mxu0 %v224
  %v338 = vpop.f32.mrb[0].mxu0
  %v339 = vadd.f32 %v70, %v338
  %v340 = vpop.f32.mrb[0].mxu0
  %v341 = vadd.f32 %v70, %v340
  %v342 = vpop.f32.mrb[0].mxu0
  %v343 = vpop.f32.mrb[0].mxu0
  %344 = vdwg.mxu0
  %345 = vmatprep.subr.bf16.mxu0 %v167
  %346 = vmatpush1.bf16.msra.mxu0 %v166
  %347 = vmatprep.subr.bf16.mxu0 %v179
  %348 = vmatpush1.bf16.msra.mxu0 %v178
  %349 = vmatprep.subr.bf16.mxu0 %v243
  %350 = vmatpush1.bf16.msra.mxu0 %v240
  %351 = vmatprep.subr.bf16.mxu0 0
  %352 = vmatpush1.bf16.msra.mxu0 0
  %353 = vmatprep.subr.bf16.mxu0 0
  %354 = vmatpush1.bf16.msra.mxu0 0
  %355 = vmatprep.subr.bf16.mxu0 0
  %356 = vmatpush1.bf16.msra.mxu0 0
  %357 = vmatprep.subr.bf16.mxu0 0
  %358 = vmatpush1.bf16.msra.mxu0 0
  %359 = vmatprep.subr.bf16.mxu0 0
  %360 = vmatpush1.bf16.msra.mxu0 0
  %361 = vmatprep.subr.bf16.mxu0 0
  %362 = vmatpush1.bf16.msra.mxu0 0
  %363 = vmatprep.subr.bf16.mxu0 0
  %364 = vmatpush1.bf16.msra.mxu0 0
  %365 = vmatprep.subr.bf16.mxu0 0
  %366 = vmatpush1.bf16.msra.mxu0 0
  %367 = vmatprep.subr.bf16.mxu0 0
  %368 = vmatpush1.bf16.msra.mxu0 0
  %369 = vmatprep.subr.bf16.mxu0 0
  %370 = vmatpush1.bf16.msra.mxu0 0
  %371 = vmatprep.subr.bf16.mxu0 0
  %372 = vmatpush1.bf16.msra.mxu0 0
  %373 = vmatprep.subr.bf16.mxu0 0
  %374 = vmatpush1.bf16.msra.mxu0 0
  %375 = vmatprep.subr.bf16.mxu0 0
  %376 = vmatpush1.bf16.msra.mxu0 0
  %377 = vmatprep.mubr.bf16.mxu0 0
  %378 = vmatmul.mubr.bf16.gmra.mrb[0].mxu0 %v224
  %v379 = vpop.f32.mrb[0].mxu0
  %v380 = vadd.f32 %v70, %v379
  %v381 = vpop.f32.mrb[0].mxu0
  %v382 = vadd.f32 %v70, %v381
  %v383 = vpop.f32.mrb[0].mxu0
  %v384 = vpop.f32.mrb[0].mxu0
  %385 = vdwg.mxu0
  %386 = vmatprep.subr.bf16.mxu0 %v169
  %387 = vmatpush1.bf16.msra.mxu0 %v168
  %388 = vmatprep.subr.bf16.mxu0 %v181
  %389 = vmatpush1.bf16.msra.mxu0 %v180
  %390 = vmatprep.subr.bf16.mxu0 %v249
  %391 = vmatpush1.bf16.msra.mxu0 %v246
  %392 = vmatprep.subr.bf16.mxu0 0
  %393 = vmatpush1.bf16.msra.mxu0 0
  %394 = vmatprep.subr.bf16.mxu0 0
  %395 = vmatpush1.bf16.msra.mxu0 0
  %396 = vmatprep.subr.bf16.mxu0 0
  %397 = vmatpush1.bf16.msra.mxu0 0
  %398 = vmatprep.subr.bf16.mxu0 0
  %399 = vmatpush1.bf16.msra.mxu0 0
  %400 = vmatprep.subr.bf16.mxu0 0
  %401 = vmatpush1.bf16.msra.mxu0 0
  %402 = vmatprep.subr.bf16.mxu0 0
  %403 = vmatpush1.bf16.msra.mxu0 0
  %404 = vmatprep.subr.bf16.mxu0 0
  %405 = vmatpush1.bf16.msra.mxu0 0
  %406 = vmatprep.subr.bf16.mxu0 0
  %407 = vmatpush1.bf16.msra.mxu0 0
  %408 = vmatprep.subr.bf16.mxu0 0
  %409 = vmatpush1.bf16.msra.mxu0 0
  %410 = vmatprep.subr.bf16.mxu0 0
  %411 = vmatpush1.bf16.msra.mxu0 0
  %412 = vmatprep.subr.bf16.mxu0 0
  %413 = vmatpush1.bf16.msra.mxu0 0
  %414 = vmatprep.subr.bf16.mxu0 0
  %415 = vmatpush1.bf16.msra.mxu0 0
  %416 = vmatprep.subr.bf16.mxu0 0
  %417 = vmatpush1.bf16.msra.mxu0 0
  %418 = vmatprep.mubr.bf16.mxu0 0
  %419 = vmatmul.mubr.bf16.gmra.mrb[0].mxu0 %v224
  %v420 = vpop.f32.mrb[0].mxu0
  %v421 = vadd.f32 %v70, %v420
  %v422 = vpop.f32.mrb[0].mxu0
  %v423 = vadd.f32 %v70, %v422
  %v424 = vpop.f32.mrb[0].mxu0
  %v425 = vpop.f32.mrb[0].mxu0
  %426 = vdwg.mxu0
  %427 = vmatprep.subr.bf16.mxu0 %v171
  %428 = vmatpush1.bf16.msra.mxu0 %v170
  %429 = vmatprep.subr.bf16.mxu0 %v183
  %430 = vmatpush1.bf16.msra.mxu0 %v182
  %431 = vmatprep.subr.bf16.mxu0 %v255
  %432 = vmatpush1.bf16.msra.mxu0 %v252
  %433 = vmatprep.subr.bf16.mxu0 0
  %434 = vmatpush1.bf16.msra.mxu0 0
  %435 = vmatprep.subr.bf16.mxu0 0
  %436 = vmatpush1.bf16.msra.mxu0 0
  %437 = vmatprep.subr.bf16.mxu0 0
  %438 = vmatpush1.bf16.msra.mxu0 0
  %439 = vmatprep.subr.bf16.mxu0 0
  %440 = vmatpush1.bf16.msra.mxu0 0
  %441 = vmatprep.subr.bf16.mxu0 0
  %442 = vmatpush1.bf16.msra.mxu0 0
  %443 = vmatprep.subr.bf16.mxu0 0
  %444 = vmatpush1.bf16.msra.mxu0 0
  %445 = vmatprep.subr.bf16.mxu0 0
  %446 = vmatpush1.bf16.msra.mxu0 0
  %447 = vmatprep.subr.bf16.mxu0 0
  %448 = vmatpush1.bf16.msra.mxu0 0
  %449 = vmatprep.subr.bf16.mxu0 0
  %450 = vmatpush1.bf16.msra.mxu0 0
  %451 = vmatprep.subr.bf16.mxu0 0
  %452 = vmatpush1.bf16.msra.mxu0 0
  %453 = vmatprep.subr.bf16.mxu0 0
  %454 = vmatpush1.bf16.msra.mxu0 0
  %455 = vmatprep.subr.bf16.mxu0 0
  %456 = vmatpush1.bf16.msra.mxu0 0
  %457 = vmatprep.subr.bf16.mxu0 0
  %458 = vmatpush1.bf16.msra.mxu0 0
  %459 = vmatprep.mubr.bf16.mxu0 0
  %460 = vmatmul.mubr.bf16.gmra.mrb[0].mxu0 %v224
  %v461 = vpop.f32.mrb[0].mxu0
  %v462 = vadd.f32 %v70, %v461
  %v463 = vpop.f32.mrb[0].mxu0
  %v464 = vadd.f32 %v70, %v463
  %v465 = vpop.f32.mrb[0].mxu0
  %v466 = vpop.f32.mrb[0].mxu0
  %467 = vdwg.mxu0
  %468 = vmatprep.subr.bf16.mxu0 %v173
  %469 = vmatpush1.bf16.msra.mxu0 %v172
  %470 = vmatprep.subr.bf16.mxu0 %v185
  %471 = vmatpush1.bf16.msra.mxu0 %v184
  %472 = vmatprep.subr.bf16.mxu0 %v261
  %473 = vmatpush1.bf16.msra.mxu0 %v258
  %474 = vmatprep.subr.bf16.mxu0 0
  %475 = vmatpush1.bf16.msra.mxu0 0
  %476 = vmatprep.subr.bf16.mxu0 0
  %477 = vmatpush1.bf16.msra.mxu0 0
  %478 = vmatprep.subr.bf16.mxu0 0
  %479 = vmatpush1.bf16.msra.mxu0 0
  %480 = vmatprep.subr.bf16.mxu0 0
  %481 = vmatpush1.bf16.msra.mxu0 0
  %482 = vmatprep.subr.bf16.mxu0 0
  %483 = vmatpush1.bf16.msra.mxu0 0
  %484 = vmatprep.subr.bf16.mxu0 0
  %485 = vmatpush1.bf16.msra.mxu0 0
  %486 = vmatprep.subr.bf16.mxu0 0
  %487 = vmatpush1.bf16.msra.mxu0 0
  %488 = vmatprep.subr.bf16.mxu0 0
  %489 = vmatpush1.bf16.msra.mxu0 0
  %490 = vmatprep.subr.bf16.mxu0 0
  %491 = vmatpush1.bf16.msra.mxu0 0
  %492 = vmatprep.subr.bf16.mxu0 0
  %493 = vmatpush1.bf16.msra.mxu0 0
  %494 = vmatprep.subr.bf16.mxu0 0
  %495 = vmatpush1.bf16.msra.mxu0 0
  %496 = vmatprep.subr.bf16.mxu0 0
  %497 = vmatpush1.bf16.msra.mxu0 0
  %498 = vmatprep.subr.bf16.mxu0 0
  %499 = vmatpush1.bf16.msra.mxu0 0
  %500 = vmatprep.mubr.bf16.mxu0 0
  %501 = vmatmul.mubr.bf16.gmra.mrb[0].mxu0 %v224
  %v502 = vpop.f32.mrb[0].mxu0
  %v503 = vadd.f32 %v70, %v502
  %v504 = vpop.f32.mrb[0].mxu0
  %v505 = vadd.f32 %v70, %v504
  %v506 = vpop.f32.mrb[0].mxu0
  %v507 = vpop.f32.mrb[0].mxu0
  %508 = vdwg.mxu0
  %v509 = vadd.f32 %v298, %v300
  %v510 = vadd.f32 %v509, %v339
  %v511 = vadd.f32 %v510, %v341
  %v512 = vadd.f32 %v511, %v380
  %v513 = vadd.f32 %v512, %v382
  %v514 = vadd.f32 %v513, %v421
  %v515 = vadd.f32 %v514, %v423
  %v516 = vadd.f32 %v515, %v462
  %v517 = vadd.f32 %v516, %v464
  %v518 = vadd.f32 %v517, %v503
  %v519 = vadd.f32 %v518, %v505
  %520 = vadd.xlane.f32.xlu0 %v519
  %v521 = vpop.xlane.xlu0 %520
  %v522 = vrcp.pop 1536.0
  %v523 = vmul.f32 %v521, %v522
  %v524 = vsub.f32 %v298, %v523
  %v525 = vsub.f32 %v300, %v523
  %v526 = vsub.f32 %v339, %v523
  %v527 = vsub.f32 %v341, %v523
  %v528 = vsub.f32 %v380, %v523
  %v529 = vsub.f32 %v382, %v523
  %v530 = vsub.f32 %v421, %v523
  %v531 = vsub.f32 %v423, %v523
  %v532 = vsub.f32 %v462, %v523
  %v533 = vsub.f32 %v464, %v523
  %v534 = vsub.f32 %v503, %v523
  %v535 = vsub.f32 %v505, %v523
  %v536 = vmul.f32 %v524, %v524
  %v537 = vmul.f32 %v525, %v525
  %v538 = vmul.f32 %v526, %v526
  %v539 = vmul.f32 %v527, %v527
  %v540 = vmul.f32 %v528, %v528
  %v541 = vmul.f32 %v529, %v529
  %v542 = vmul.f32 %v530, %v530
  %v543 = vmul.f32 %v531, %v531
  %v544 = vmul.f32 %v532, %v532
  %v545 = vmul.f32 %v533, %v533
  %v546 = vmul.f32 %v534, %v534
  %v547 = vmul.f32 %v535, %v535
  %v548 = vadd.f32 %v536, %v537
  %v549 = vadd.f32 %v548, %v538
  %v550 = vadd.f32 %v549, %v539
  %v551 = vadd.f32 %v550, %v540
  %v552 = vadd.f32 %v551, %v541
  %v553 = vadd.f32 %v552, %v542
  %v554 = vadd.f32 %v553, %v543
  %v555 = vadd.f32 %v554, %v544
  %v556 = vadd.f32 %v555, %v545
  %v557 = vadd.f32 %v556, %v546
  %v558 = vadd.f32 %v557, %v547
  %559 = vadd.xlane.f32.xlu0 %v558
  %v560 = vpop.xlane.xlu0 %559
  %v561 = vmul.f32 %v560, %v522
  %v562 = vld [vmem:[%s3] sm:$0xff]
  %v563 = vadd.f32 %v561, 1e-05
  %v564 = vrsqrt.pop %v563
  %v565 = vmul.f32 %v562, %v564
  %v566 = vld [vmem:[%s4] sm:$0xff]
  %v567 = vmul.f32 %v523, %v565
  %v568 = vsub.f32 %v566, %v567
  %570 = vset.pattern.permute.xlu0 0
  %571 = vperm.xlu0 %570, %v565
  %v572 = vpop.permute.xlu0 %571
  %v574 = vmul.f32 %v298, %v572
  %v575 = vmul.f32 %v300, %v572
  %v576 = vmul.f32 %v339, %v572
  %v577 = vmul.f32 %v341, %v572
  %v578 = vmul.f32 %v380, %v572
  %v579 = vmul.f32 %v382, %v572
  %v580 = vmul.f32 %v421, %v572
  %v581 = vmul.f32 %v423, %v572
  %v582 = vmul.f32 %v462, %v572
  %v583 = vmul.f32 %v464, %v572
  %v584 = vmul.f32 %v503, %v572
  %v585 = vmul.f32 %v505, %v572
  %587 = vset.pattern.permute.xlu0 0
  %588 = vperm.xlu0 %587, %v568
  %v589 = vpop.permute.xlu0 %588
  %v591 = vadd.f32 %v574, %v589
  %v592 = vadd.f32 %v575, %v589
  %v593 = vadd.f32 %v576, %v589
  %v594 = vadd.f32 %v577, %v589
  %v595 = vadd.f32 %v578, %v589
  %v596 = vadd.f32 %v579, %v589
  %v597 = vadd.f32 %v580, %v589
  %v598 = vadd.f32 %v581, %v589
  %v599 = vadd.f32 %v582, %v589
  %v600 = vadd.f32 %v583, %v589
  %v601 = vadd.f32 %v584, %v589
  %v602 = vadd.f32 %v585, %v589
  %v603 = vmax.f32 %v591, 0.0
  %v604 = vmax.f32 %v592, 0.0
  %v605 = vmax.f32 %v593, 0.0
  %v606 = vmax.f32 %v594, 0.0
  %v607 = vmax.f32 %v595, 0.0
  %v608 = vmax.f32 %v596, 0.0
  %v609 = vmax.f32 %v597, 0.0
  %v610 = vmax.f32 %v598, 0.0
  %v611 = vmax.f32 %v599, 0.0
  %v612 = vmax.f32 %v600, 0.0
  %v613 = vmax.f32 %v601, 0.0
  %v614 = vmax.f32 %v602, 0.0
  %615 = vst [vmem:[%s9] sm:$0xff] %v603
  %616 = vst [vmem:[%s9 + $0x8] sm:$0xff] %v604
  %617 = vst [vmem:[%s9 + $0x10] sm:$0xff] %v605
  %618 = vst [vmem:[%s9 + $0x18] sm:$0xff] %v606
  %619 = vst [vmem:[%s9 + $0x20] sm:$0xff] %v607
  %620 = vst [vmem:[%s9 + $0x28] sm:$0xff] %v608
  %621 = vst [vmem:[%s9 + $0x30] sm:$0xff] %v609
  %622 = vst [vmem:[%s9 + $0x38] sm:$0xff] %v610
  %623 = vst [vmem:[%s9 + $0x40] sm:$0xff] %v611
  %624 = vst [vmem:[%s9 + $0x48] sm:$0xff] %v612
  %625 = vst [vmem:[%s9 + $0x50] sm:$0xff] %v613
  %626 = vst [vmem:[%s9 + $0x58] sm:$0xff] %v614
  %v627 = vld [vmem:[%s5] sm:$0xf]
  %v628 = vld [vmem:[%s5 + $0x4] sm:$0xf]
  %v629 = vld [vmem:[%s5 + $0x8] sm:$0xf]
  %v630 = vpack.c.bf16 %v603, %v603
  %v631 = vpack.c.bf16 %v604, %v604
  %v632 = vpack.c.bf16 %v605, %v605
  %v633 = vpack.c.bf16 %v606, %v606
  %v634 = vpack.c.bf16 %v607, %v607
  %v635 = vpack.c.bf16 %v608, %v608
  %v636 = vpack.c.bf16 %v609, %v609
  %v637 = vpack.c.bf16 %v610, %v610
  %v638 = vpack.c.bf16 %v611, %v611
  %v639 = vpack.c.bf16 %v612, %v612
  %v640 = vpack.c.bf16 %v613, %v613
  %v641 = vpack.c.bf16 %v614, %v614
  %v642 = vld [vmem:[%s6] sm:$0xff]
  %v643 = vld [vmem:[%s6 + $0x8] sm:$0xff]
  %v644 = vld [vmem:[%s6 + $0x10] sm:$0xff]
  %646 = vset.pattern.permute.xlu0 0
  %647 = vperm.xlu0 %646, %v642
  %v648 = vpop.permute.xlu0 %647
  %651 = vset.pattern.permute.xlu0 0
  %652 = vperm.xlu0 %651, %v643
  %v653 = vpop.permute.xlu0 %652
  %656 = vset.pattern.permute.xlu0 0
  %657 = vperm.xlu0 %656, %v644
  %v658 = vpop.permute.xlu0 %657
  %v663 = vunpack.c.l.b16 %v627
  %v664 = vunpack.c.l.b16 %v628
  %v665 = vunpack.c.l.b16 %v629
  %v666 = vpack.c.b16 %v664, %v663
  %v667 = vpack.c.b16 %v665, %v665
  %vm668 = vcmask 64512
  %v670 = vsel %vm668, %v666, 0
  %v673 = vsel %vm668, %v667, 0
  %vm675 = vcmask 1043456
  %v677 = vsel %vm675, %v630, 0
  %v680 = vsel %vm675, %v631, 0
  %v683 = vsel %vm675, %v632, 0
  %v686 = vsel %vm675, %v633, 0
  %v689 = vsel %vm675, %v634, 0
  %v692 = vsel %vm675, %v635, 0
  %v695 = vsel %vm675, %v636, 0
  %v698 = vsel %vm675, %v637, 0
  %v701 = vsel %vm675, %v638, 0
  %v704 = vsel %vm675, %v639, 0
  %v707 = vsel %vm675, %v640, 0
  %v710 = vsel %vm675, %v641, 0
  %712 = vmatprep.subr.bf16.mxu0 %v680
  %713 = vmatpush1.bf16.msra.mxu0 %v677
  %714 = vmatprep.subr.bf16.mxu0 0
  %715 = vmatpush1.bf16.msra.mxu0 0
  %716 = vmatprep.subr.bf16.mxu0 0
  %717 = vmatpush1.bf16.msra.mxu0 0
  %718 = vmatprep.subr.bf16.mxu0 0
  %719 = vmatpush1.bf16.msra.mxu0 0
  %720 = vmatprep.subr.bf16.mxu0 0
  %721 = vmatpush1.bf16.msra.mxu0 0
  %722 = vmatprep.subr.bf16.mxu0 0
  %723 = vmatpush1.bf16.msra.mxu0 0
  %724 = vmatprep.subr.bf16.mxu0 0
  %725 = vmatpush1.bf16.msra.mxu0 0
  %726 = vmatprep.subr.bf16.mxu0 0
  %727 = vmatpush1.bf16.msra.mxu0 0
  %728 = vmatprep.subr.bf16.mxu0 0
  %729 = vmatpush1.bf16.msra.mxu0 0
  %730 = vmatprep.subr.bf16.mxu0 0
  %731 = vmatpush1.bf16.msra.mxu0 0
  %732 = vmatprep.subr.bf16.mxu0 0
  %733 = vmatpush1.bf16.msra.mxu0 0
  %734 = vmatprep.subr.bf16.mxu0 0
  %735 = vmatpush1.bf16.msra.mxu0 0
  %736 = vmatprep.subr.bf16.mxu0 0
  %737 = vmatpush1.bf16.msra.mxu0 0
  %738 = vmatprep.subr.bf16.mxu0 0
  %739 = vmatpush1.bf16.msra.mxu0 0
  %740 = vmatprep.subr.bf16.mxu0 0
  %741 = vmatpush1.bf16.msra.mxu0 0
  %742 = vmatprep.subr.bf16.mxu0 0
  %743 = vmatpush1.bf16.msra.mxu0 0
  %744 = vmatprep.mubr.bf16.mxu0 0
  %745 = vmatmul.mubr.bf16.gmra.mrb[0].mxu0 %v670
  %v746 = vpop.f32.mrb[0].mxu0
  %v747 = vadd.f32 %v648, %v746
  %v748 = vpop.f32.mrb[0].mxu0
  %v749 = vadd.f32 %v648, %v748
  %v750 = vpop.f32.mrb[0].mxu0
  %v751 = vadd.f32 %v653, %v750
  %v752 = vpop.f32.mrb[0].mxu0
  %v753 = vadd.f32 %v653, %v752
  %754 = vmatprep.mubr.bf16.mxu0 0
  %755 = vmatmul.mubr.bf16.gmra.mrb[0].mxu0 %v673
  %v756 = vpop.f32.mrb[0].mxu0
  %v757 = vadd.f32 %v658, %v756
  %v758 = vpop.f32.mrb[0].mxu0
  %v759 = vadd.f32 %v658, %v758
  %v760 = vpop.f32.mrb[0].mxu0
  %v761 = vpop.f32.mrb[0].mxu0
  %762 = vdwg.mxu0
  %763 = vmatprep.subr.bf16.mxu0 %v686
  %764 = vmatpush1.bf16.msra.mxu0 %v683
  %765 = vmatprep.subr.bf16.mxu0 0
  %766 = vmatpush1.bf16.msra.mxu0 0
  %767 = vmatprep.subr.bf16.mxu0 0
  %768 = vmatpush1.bf16.msra.mxu0 0
  %769 = vmatprep.subr.bf16.mxu0 0
  %770 = vmatpush1.bf16.msra.mxu0 0
  %771 = vmatprep.subr.bf16.mxu0 0
  %772 = vmatpush1.bf16.msra.mxu0 0
  %773 = vmatprep.subr.bf16.mxu0 0
  %774 = vmatpush1.bf16.msra.mxu0 0
  %775 = vmatprep.subr.bf16.mxu0 0
  %776 = vmatpush1.bf16.msra.mxu0 0
  %777 = vmatprep.subr.bf16.mxu0 0
  %778 = vmatpush1.bf16.msra.mxu0 0
  %779 = vmatprep.subr.bf16.mxu0 0
  %780 = vmatpush1.bf16.msra.mxu0 0
  %781 = vmatprep.subr.bf16.mxu0 0
  %782 = vmatpush1.bf16.msra.mxu0 0
  %783 = vmatprep.subr.bf16.mxu0 0
  %784 = vmatpush1.bf16.msra.mxu0 0
  %785 = vmatprep.subr.bf16.mxu0 0
  %786 = vmatpush1.bf16.msra.mxu0 0
  %787 = vmatprep.subr.bf16.mxu0 0
  %788 = vmatpush1.bf16.msra.mxu0 0
  %789 = vmatprep.subr.bf16.mxu0 0
  %790 = vmatpush1.bf16.msra.mxu0 0
  %791 = vmatprep.subr.bf16.mxu0 0
  %792 = vmatpush1.bf16.msra.mxu0 0
  %793 = vmatprep.subr.bf16.mxu0 0
  %794 = vmatpush1.bf16.msra.mxu0 0
  %795 = vmatprep.mubr.bf16.mxu0 0
  %796 = vmatmul.mubr.bf16.gmra.mrb[0].mxu0 %v670
  %v797 = vpop.f32.mrb[0].mxu0
  %v798 = vadd.f32 %v648, %v797
  %v799 = vpop.f32.mrb[0].mxu0
  %v800 = vadd.f32 %v648, %v799
  %v801 = vpop.f32.mrb[0].mxu0
  %v802 = vadd.f32 %v653, %v801
  %v803 = vpop.f32.mrb[0].mxu0
  %v804 = vadd.f32 %v653, %v803
  %805 = vmatprep.mubr.bf16.mxu0 0
  %806 = vmatmul.mubr.bf16.gmra.mrb[0].mxu0 %v673
  %v807 = vpop.f32.mrb[0].mxu0
  %v808 = vadd.f32 %v658, %v807
  %v809 = vpop.f32.mrb[0].mxu0
  %v810 = vadd.f32 %v658, %v809
  %v811 = vpop.f32.mrb[0].mxu0
  %v812 = vpop.f32.mrb[0].mxu0
  %813 = vdwg.mxu0
  %814 = vmatprep.subr.bf16.mxu0 %v692
  %815 = vmatpush1.bf16.msra.mxu0 %v689
  %816 = vmatprep.subr.bf16.mxu0 0
  %817 = vmatpush1.bf16.msra.mxu0 0
  %818 = vmatprep.subr.bf16.mxu0 0
  %819 = vmatpush1.bf16.msra.mxu0 0
  %820 = vmatprep.subr.bf16.mxu0 0
  %821 = vmatpush1.bf16.msra.mxu0 0
  %822 = vmatprep.subr.bf16.mxu0 0
  %823 = vmatpush1.bf16.msra.mxu0 0
  %824 = vmatprep.subr.bf16.mxu0 0
  %825 = vmatpush1.bf16.msra.mxu0 0
  %826 = vmatprep.subr.bf16.mxu0 0
  %827 = vmatpush1.bf16.msra.mxu0 0
  %828 = vmatprep.subr.bf16.mxu0 0
  %829 = vmatpush1.bf16.msra.mxu0 0
  %830 = vmatprep.subr.bf16.mxu0 0
  %831 = vmatpush1.bf16.msra.mxu0 0
  %832 = vmatprep.subr.bf16.mxu0 0
  %833 = vmatpush1.bf16.msra.mxu0 0
  %834 = vmatprep.subr.bf16.mxu0 0
  %835 = vmatpush1.bf16.msra.mxu0 0
  %836 = vmatprep.subr.bf16.mxu0 0
  %837 = vmatpush1.bf16.msra.mxu0 0
  %838 = vmatprep.subr.bf16.mxu0 0
  %839 = vmatpush1.bf16.msra.mxu0 0
  %840 = vmatprep.subr.bf16.mxu0 0
  %841 = vmatpush1.bf16.msra.mxu0 0
  %842 = vmatprep.subr.bf16.mxu0 0
  %843 = vmatpush1.bf16.msra.mxu0 0
  %844 = vmatprep.subr.bf16.mxu0 0
  %845 = vmatpush1.bf16.msra.mxu0 0
  %846 = vmatprep.mubr.bf16.mxu0 0
  %847 = vmatmul.mubr.bf16.gmra.mrb[0].mxu0 %v670
  %v848 = vpop.f32.mrb[0].mxu0
  %v849 = vadd.f32 %v648, %v848
  %v850 = vpop.f32.mrb[0].mxu0
  %v851 = vadd.f32 %v648, %v850
  %v852 = vpop.f32.mrb[0].mxu0
  %v853 = vadd.f32 %v653, %v852
  %v854 = vpop.f32.mrb[0].mxu0
  %v855 = vadd.f32 %v653, %v854
  %856 = vmatprep.mubr.bf16.mxu0 0
  %857 = vmatmul.mubr.bf16.gmra.mrb[0].mxu0 %v673
  %v858 = vpop.f32.mrb[0].mxu0
  %v859 = vadd.f32 %v658, %v858
  %v860 = vpop.f32.mrb[0].mxu0
  %v861 = vadd.f32 %v658, %v860
  %v862 = vpop.f32.mrb[0].mxu0
  %v863 = vpop.f32.mrb[0].mxu0
  %864 = vdwg.mxu0
  %865 = vmatprep.subr.bf16.mxu0 %v698
  %866 = vmatpush1.bf16.msra.mxu0 %v695
  %867 = vmatprep.subr.bf16.mxu0 0
  %868 = vmatpush1.bf16.msra.mxu0 0
  %869 = vmatprep.subr.bf16.mxu0 0
  %870 = vmatpush1.bf16.msra.mxu0 0
  %871 = vmatprep.subr.bf16.mxu0 0
  %872 = vmatpush1.bf16.msra.mxu0 0
  %873 = vmatprep.subr.bf16.mxu0 0
  %874 = vmatpush1.bf16.msra.mxu0 0
  %875 = vmatprep.subr.bf16.mxu0 0
  %876 = vmatpush1.bf16.msra.mxu0 0
  %877 = vmatprep.subr.bf16.mxu0 0
  %878 = vmatpush1.bf16.msra.mxu0 0
  %879 = vmatprep.subr.bf16.mxu0 0
  %880 = vmatpush1.bf16.msra.mxu0 0
  %881 = vmatprep.subr.bf16.mxu0 0
  %882 = vmatpush1.bf16.msra.mxu0 0
  %883 = vmatprep.subr.bf16.mxu0 0
  %884 = vmatpush1.bf16.msra.mxu0 0
  %885 = vmatprep.subr.bf16.mxu0 0
  %886 = vmatpush1.bf16.msra.mxu0 0
  %887 = vmatprep.subr.bf16.mxu0 0
  %888 = vmatpush1.bf16.msra.mxu0 0
  %889 = vmatprep.subr.bf16.mxu0 0
  %890 = vmatpush1.bf16.msra.mxu0 0
  %891 = vmatprep.subr.bf16.mxu0 0
  %892 = vmatpush1.bf16.msra.mxu0 0
  %893 = vmatprep.subr.bf16.mxu0 0
  %894 = vmatpush1.bf16.msra.mxu0 0
  %895 = vmatprep.subr.bf16.mxu0 0
  %896 = vmatpush1.bf16.msra.mxu0 0
  %897 = vmatprep.mubr.bf16.mxu0 0
  %898 = vmatmul.mubr.bf16.gmra.mrb[0].mxu0 %v670
  %v899 = vpop.f32.mrb[0].mxu0
  %v900 = vadd.f32 %v648, %v899
  %v901 = vpop.f32.mrb[0].mxu0
  %v902 = vadd.f32 %v648, %v901
  %v903 = vpop.f32.mrb[0].mxu0
  %v904 = vadd.f32 %v653, %v903
  %v905 = vpop.f32.mrb[0].mxu0
  %v906 = vadd.f32 %v653, %v905
  %907 = vmatprep.mubr.bf16.mxu0 0
  %908 = vmatmul.mubr.bf16.gmra.mrb[0].mxu0 %v673
  %v909 = vpop.f32.mrb[0].mxu0
  %v910 = vadd.f32 %v658, %v909
  %v911 = vpop.f32.mrb[0].mxu0
  %v912 = vadd.f32 %v658, %v911
  %v913 = vpop.f32.mrb[0].mxu0
  %v914 = vpop.f32.mrb[0].mxu0
  %915 = vdwg.mxu0
  %916 = vmatprep.subr.bf16.mxu0 %v704
  %917 = vmatpush1.bf16.msra.mxu0 %v701
  %918 = vmatprep.subr.bf16.mxu0 0
  %919 = vmatpush1.bf16.msra.mxu0 0
  %920 = vmatprep.subr.bf16.mxu0 0
  %921 = vmatpush1.bf16.msra.mxu0 0
  %922 = vmatprep.subr.bf16.mxu0 0
  %923 = vmatpush1.bf16.msra.mxu0 0
  %924 = vmatprep.subr.bf16.mxu0 0
  %925 = vmatpush1.bf16.msra.mxu0 0
  %926 = vmatprep.subr.bf16.mxu0 0
  %927 = vmatpush1.bf16.msra.mxu0 0
  %928 = vmatprep.subr.bf16.mxu0 0
  %929 = vmatpush1.bf16.msra.mxu0 0
  %930 = vmatprep.subr.bf16.mxu0 0
  %931 = vmatpush1.bf16.msra.mxu0 0
  %932 = vmatprep.subr.bf16.mxu0 0
  %933 = vmatpush1.bf16.msra.mxu0 0
  %934 = vmatprep.subr.bf16.mxu0 0
  %935 = vmatpush1.bf16.msra.mxu0 0
  %936 = vmatprep.subr.bf16.mxu0 0
  %937 = vmatpush1.bf16.msra.mxu0 0
  %938 = vmatprep.subr.bf16.mxu0 0
  %939 = vmatpush1.bf16.msra.mxu0 0
  %940 = vmatprep.subr.bf16.mxu0 0
  %941 = vmatpush1.bf16.msra.mxu0 0
  %942 = vmatprep.subr.bf16.mxu0 0
  %943 = vmatpush1.bf16.msra.mxu0 0
  %944 = vmatprep.subr.bf16.mxu0 0
  %945 = vmatpush1.bf16.msra.mxu0 0
  %946 = vmatprep.subr.bf16.mxu0 0
  %947 = vmatpush1.bf16.msra.mxu0 0
  %948 = vmatprep.mubr.bf16.mxu0 0
  %949 = vmatmul.mubr.bf16.gmra.mrb[0].mxu0 %v670
  %v950 = vpop.f32.mrb[0].mxu0
  %v951 = vadd.f32 %v648, %v950
  %v952 = vpop.f32.mrb[0].mxu0
  %v953 = vadd.f32 %v648, %v952
  %v954 = vpop.f32.mrb[0].mxu0
  %v955 = vadd.f32 %v653, %v954
  %v956 = vpop.f32.mrb[0].mxu0
  %v957 = vadd.f32 %v653, %v956
  %958 = vmatprep.mubr.bf16.mxu0 0
  %959 = vmatmul.mubr.bf16.gmra.mrb[0].mxu0 %v673
  %v960 = vpop.f32.mrb[0].mxu0
  %v961 = vadd.f32 %v658, %v960
  %v962 = vpop.f32.mrb[0].mxu0
  %v963 = vadd.f32 %v658, %v962
  %v964 = vpop.f32.mrb[0].mxu0
  %v965 = vpop.f32.mrb[0].mxu0
  %966 = vdwg.mxu0
  %967 = vmatprep.subr.bf16.mxu0 %v710
  %968 = vmatpush1.bf16.msra.mxu0 %v707
  %969 = vmatprep.subr.bf16.mxu0 0
  %970 = vmatpush1.bf16.msra.mxu0 0
  %971 = vmatprep.subr.bf16.mxu0 0
  %972 = vmatpush1.bf16.msra.mxu0 0
  %973 = vmatprep.subr.bf16.mxu0 0
  %974 = vmatpush1.bf16.msra.mxu0 0
  %975 = vmatprep.subr.bf16.mxu0 0
  %976 = vmatpush1.bf16.msra.mxu0 0
  %977 = vmatprep.subr.bf16.mxu0 0
  %978 = vmatpush1.bf16.msra.mxu0 0
  %979 = vmatprep.subr.bf16.mxu0 0
  %980 = vmatpush1.bf16.msra.mxu0 0
  %981 = vmatprep.subr.bf16.mxu0 0
  %982 = vmatpush1.bf16.msra.mxu0 0
  %983 = vmatprep.subr.bf16.mxu0 0
  %984 = vmatpush1.bf16.msra.mxu0 0
  %985 = vmatprep.subr.bf16.mxu0 0
  %986 = vmatpush1.bf16.msra.mxu0 0
  %987 = vmatprep.subr.bf16.mxu0 0
  %988 = vmatpush1.bf16.msra.mxu0 0
  %989 = vmatprep.subr.bf16.mxu0 0
  %990 = vmatpush1.bf16.msra.mxu0 0
  %991 = vmatprep.subr.bf16.mxu0 0
  %992 = vmatpush1.bf16.msra.mxu0 0
  %993 = vmatprep.subr.bf16.mxu0 0
  %994 = vmatpush1.bf16.msra.mxu0 0
  %995 = vmatprep.subr.bf16.mxu0 0
  %996 = vmatpush1.bf16.msra.mxu0 0
  %997 = vmatprep.subr.bf16.mxu0 0
  %998 = vmatpush1.bf16.msra.mxu0 0
  %999 = vmatprep.mubr.bf16.mxu0 0
  %1000 = vmatmul.mubr.bf16.gmra.mrb[0].mxu0 %v670
  %v1001 = vpop.f32.mrb[0].mxu0
  %v1002 = vadd.f32 %v648, %v1001
  %v1003 = vpop.f32.mrb[0].mxu0
  %v1004 = vadd.f32 %v648, %v1003
  %v1005 = vpop.f32.mrb[0].mxu0
  %v1006 = vadd.f32 %v653, %v1005
  %v1007 = vpop.f32.mrb[0].mxu0
  %v1008 = vadd.f32 %v653, %v1007
  %1009 = vmatprep.mubr.bf16.mxu0 0
  %1010 = vmatmul.mubr.bf16.gmra.mrb[0].mxu0 %v673
  %v1011 = vpop.f32.mrb[0].mxu0
  %v1012 = vadd.f32 %v658, %v1011
  %v1013 = vpop.f32.mrb[0].mxu0
  %v1014 = vadd.f32 %v658, %v1013
  %v1015 = vpop.f32.mrb[0].mxu0
  %v1016 = vpop.f32.mrb[0].mxu0
  %1017 = vdwg.mxu0
  %v1018 = vmul.f32 %v747, 0.35355338
  %v1019 = vmul.f32 %v749, 0.35355338
  %v1020 = vmul.f32 %v798, 0.35355338
  %v1021 = vmul.f32 %v800, 0.35355338
  %v1022 = vmul.f32 %v849, 0.35355338
  %v1023 = vmul.f32 %v851, 0.35355338
  %v1024 = vmul.f32 %v900, 0.35355338
  %v1025 = vmul.f32 %v902, 0.35355338
  %v1026 = vmul.f32 %v951, 0.35355338
  %v1027 = vmul.f32 %v953, 0.35355338
  %v1028 = vmul.f32 %v1002, 0.35355338
  %v1029 = vmul.f32 %v1004, 0.35355338
  %v1030 = vmul.f32 %v1018, %v751
  %v1031 = vmul.f32 %v1019, %v753
  %v1032 = vmul.f32 %v1020, %v802
  %v1033 = vmul.f32 %v1021, %v804
  %v1034 = vrot.slane %v1030, 4
  %v1035 = vadd.f32 %v1030, %v1034
  %v1036 = vrot.slane %v1035, 2
  %v1037 = vadd.f32 %v1035, %v1036
  %v1038 = vrot.slane %v1037, 1
  %v1039 = vadd.f32 %v1037, %v1038
  %v1040 = vrot.slane %v1031, 4
  %v1041 = vadd.f32 %v1031, %v1040
  %v1042 = vrot.slane %v1041, 2
  %v1043 = vadd.f32 %v1041, %v1042
  %v1044 = vrot.slane %v1043, 1
  %v1045 = vadd.f32 %v1043, %v1044
  %v1046 = vrot.slane %v1032, 4
  %v1047 = vadd.f32 %v1032, %v1046
  %v1048 = vrot.slane %v1047, 2
  %v1049 = vadd.f32 %v1047, %v1048
  %v1050 = vrot.slane %v1049, 1
  %v1051 = vadd.f32 %v1049, %v1050
  %v1052 = vrot.slane %v1033, 4
  %v1053 = vadd.f32 %v1033, %v1052
  %v1054 = vrot.slane %v1053, 2
  %v1055 = vadd.f32 %v1053, %v1054
  %v1056 = vrot.slane %v1055, 1
  %v1057 = vadd.f32 %v1055, %v1056
  %v1058 = vmul.f32 %v1018, %v853
  %v1059 = vmul.f32 %v1019, %v855
  %v1060 = vmul.f32 %v1020, %v904
  %v1061 = vmul.f32 %v1021, %v906
  %v1062 = vrot.slane %v1058, 4
  %v1063 = vadd.f32 %v1058, %v1062
  %v1064 = vrot.slane %v1063, 2
  %v1065 = vadd.f32 %v1063, %v1064
  %v1066 = vrot.slane %v1065, 1
  %v1067 = vadd.f32 %v1065, %v1066
  %v1068 = vrot.slane %v1059, 4
  %v1069 = vadd.f32 %v1059, %v1068
  %v1070 = vrot.slane %v1069, 2
  %v1071 = vadd.f32 %v1069, %v1070
  %v1072 = vrot.slane %v1071, 1
  %v1073 = vadd.f32 %v1071, %v1072
  %v1074 = vrot.slane %v1060, 4
  %v1075 = vadd.f32 %v1060, %v1074
  %v1076 = vrot.slane %v1075, 2
  %v1077 = vadd.f32 %v1075, %v1076
  %v1078 = vrot.slane %v1077, 1
  %v1079 = vadd.f32 %v1077, %v1078
  %v1080 = vrot.slane %v1061, 4
  %v1081 = vadd.f32 %v1061, %v1080
  %v1082 = vrot.slane %v1081, 2
  %v1083 = vadd.f32 %v1081, %v1082
  %v1084 = vrot.slane %v1083, 1
  %v1085 = vadd.f32 %v1083, %v1084
  %v1086 = vmul.f32 %v1018, %v955
  %v1087 = vmul.f32 %v1019, %v957
  %v1088 = vmul.f32 %v1020, %v1006
  %v1089 = vmul.f32 %v1021, %v1008
  %v1090 = vrot.slane %v1086, 4
  %v1091 = vadd.f32 %v1086, %v1090
  %v1092 = vrot.slane %v1091, 2
  %v1093 = vadd.f32 %v1091, %v1092
  %v1094 = vrot.slane %v1093, 1
  %v1095 = vadd.f32 %v1093, %v1094
  %v1096 = vrot.slane %v1087, 4
  %v1097 = vadd.f32 %v1087, %v1096
  %v1098 = vrot.slane %v1097, 2
  %v1099 = vadd.f32 %v1097, %v1098
  %v1100 = vrot.slane %v1099, 1
  %v1101 = vadd.f32 %v1099, %v1100
  %v1102 = vrot.slane %v1088, 4
  %v1103 = vadd.f32 %v1088, %v1102
  %v1104 = vrot.slane %v1103, 2
  %v1105 = vadd.f32 %v1103, %v1104
  %v1106 = vrot.slane %v1105, 1
  %v1107 = vadd.f32 %v1105, %v1106
  %v1108 = vrot.slane %v1089, 4
  %v1109 = vadd.f32 %v1089, %v1108
  %v1110 = vrot.slane %v1109, 2
  %v1111 = vadd.f32 %v1109, %v1110
  %v1112 = vrot.slane %v1111, 1
  %v1113 = vadd.f32 %v1111, %v1112
  %v1114 = vmax.f32 %v1039, %v1067
  %v1115 = vmax.f32 %v1045, %v1073
  %v1116 = vmax.f32 %v1051, %v1079
  %v1117 = vmax.f32 %v1057, %v1085
  %v1118 = vmax.f32 %v1114, %v1095
  %v1119 = vmax.f32 %v1115, %v1101
  %v1120 = vmax.f32 %v1116, %v1107
  %v1121 = vmax.f32 %v1117, %v1113
  %v1122 = vsub.f32 %v1039, %v1118
  %v1123 = vsub.f32 %v1045, %v1119
  %v1124 = vsub.f32 %v1051, %v1120
  %v1125 = vsub.f32 %v1057, %v1121
  %v1126 = vmul.f32 %v1122, 1.442695
  %v1127 = vpow.pop %v1126
  %v1128 = vmul.f32 %v1123, 1.442695
  %v1129 = vpow.pop %v1128
  %v1130 = vmul.f32 %v1124, 1.442695
  %v1131 = vpow.pop %v1130
  %v1132 = vmul.f32 %v1125, 1.442695
  %v1133 = vpow.pop %v1132
  %v1134 = vsub.f32 %v1067, %v1118
  %v1135 = vsub.f32 %v1073, %v1119
  %v1136 = vsub.f32 %v1079, %v1120
  %v1137 = vsub.f32 %v1085, %v1121
  %v1138 = vmul.f32 %v1134, 1.442695
  %v1139 = vpow.pop %v1138
  %v1140 = vmul.f32 %v1135, 1.442695
  %v1141 = vpow.pop %v1140
  %v1142 = vmul.f32 %v1136, 1.442695
  %v1143 = vpow.pop %v1142
  %v1144 = vmul.f32 %v1137, 1.442695
  %v1145 = vpow.pop %v1144
  %v1146 = vsub.f32 %v1095, %v1118
  %v1147 = vsub.f32 %v1101, %v1119
  %v1148 = vsub.f32 %v1107, %v1120
  %v1149 = vsub.f32 %v1113, %v1121
  %v1150 = vmul.f32 %v1146, 1.442695
  %v1151 = vpow.pop %v1150
  %v1152 = vmul.f32 %v1147, 1.442695
  %v1153 = vpow.pop %v1152
  %v1154 = vmul.f32 %v1148, 1.442695
  %v1155 = vpow.pop %v1154
  %v1156 = vmul.f32 %v1149, 1.442695
  %v1157 = vpow.pop %v1156
  %v1158 = vadd.f32 %v1127, %v1139
  %v1159 = vadd.f32 %v1129, %v1141
  %v1160 = vadd.f32 %v1131, %v1143
  %v1161 = vadd.f32 %v1133, %v1145
  %v1162 = vadd.f32 %v1158, %v1151
  %v1163 = vadd.f32 %v1159, %v1153
  %v1164 = vadd.f32 %v1160, %v1155
  %v1165 = vadd.f32 %v1161, %v1157
  %v1166 = vrcp.pop %v1162
  %v1167 = vrcp.pop %v1163
  %v1168 = vrcp.pop %v1164
  %v1169 = vrcp.pop %v1165
  %v1170 = vmul.f32 %v1127, %v1166
  %v1171 = vmul.f32 %v1129, %v1167
  %v1172 = vmul.f32 %v1131, %v1168
  %v1173 = vmul.f32 %v1133, %v1169
  %v1174 = vmul.f32 %v1170, %v757
  %v1175 = vmul.f32 %v1171, %v759
  %v1176 = vmul.f32 %v1172, %v808
  %v1177 = vmul.f32 %v1173, %v810
  %v1178 = vmul.f32 %v1139, %v1166
  %v1179 = vmul.f32 %v1141, %v1167
  %v1180 = vmul.f32 %v1143, %v1168
  %v1181 = vmul.f32 %v1145, %v1169
  %v1182 = vmul.f32 %v1178, %v859
  %v1183 = vmul.f32 %v1179, %v861
  %v1184 = vmul.f32 %v1180, %v910
  %v1185 = vmul.f32 %v1181, %v912
  %v1186 = vadd.f32 %v1174, %v1182
  %v1187 = vadd.f32 %v1175, %v1183
  %v1188 = vadd.f32 %v1176, %v1184
  %v1189 = vadd.f32 %v1177, %v1185
  %v1190 = vmul.f32 %v1151, %v1166
  %v1191 = vmul.f32 %v1153, %v1167
  %v1192 = vmul.f32 %v1155, %v1168
  %v1193 = vmul.f32 %v1157, %v1169
  %v1194 = vmul.f32 %v1190, %v961
  %v1195 = vmul.f32 %v1191, %v963
  %v1196 = vmul.f32 %v1192, %v1012
  %v1197 = vmul.f32 %v1193, %v1014
  %v1198 = vadd.f32 %v1186, %v1194
  %v1199 = vadd.f32 %v1187, %v1195
  %v1200 = vadd.f32 %v1188, %v1196
  %v1201 = vadd.f32 %v1189, %v1197
  %v1202 = vmul.f32 %v1022, %v751
  %v1203 = vmul.f32 %v1023, %v753
  %v1204 = vmul.f32 %v1024, %v802
  %v1205 = vmul.f32 %v1025, %v804
  %v1206 = vrot.slane %v1202, 4
  %v1207 = vadd.f32 %v1202, %v1206
  %v1208 = vrot.slane %v1207, 2
  %v1209 = vadd.f32 %v1207, %v1208
  %v1210 = vrot.slane %v1209, 1
  %v1211 = vadd.f32 %v1209, %v1210
  %v1212 = vrot.slane %v1203, 4
  %v1213 = vadd.f32 %v1203, %v1212
  %v1214 = vrot.slane %v1213, 2
  %v1215 = vadd.f32 %v1213, %v1214
  %v1216 = vrot.slane %v1215, 1
  %v1217 = vadd.f32 %v1215, %v1216
  %v1218 = vrot.slane %v1204, 4
  %v1219 = vadd.f32 %v1204, %v1218
  %v1220 = vrot.slane %v1219, 2
  %v1221 = vadd.f32 %v1219, %v1220
  %v1222 = vrot.slane %v1221, 1
  %v1223 = vadd.f32 %v1221, %v1222
  %v1224 = vrot.slane %v1205, 4
  %v1225 = vadd.f32 %v1205, %v1224
  %v1226 = vrot.slane %v1225, 2
  %v1227 = vadd.f32 %v1225, %v1226
  %v1228 = vrot.slane %v1227, 1
  %v1229 = vadd.f32 %v1227, %v1228
  %v1230 = vmul.f32 %v1022, %v853
  %v1231 = vmul.f32 %v1023, %v855
  %v1232 = vmul.f32 %v1024, %v904
  %v1233 = vmul.f32 %v1025, %v906
  %v1234 = vrot.slane %v1230, 4
  %v1235 = vadd.f32 %v1230, %v1234
  %v1236 = vrot.slane %v1235, 2
  %v1237 = vadd.f32 %v1235, %v1236
  %v1238 = vrot.slane %v1237, 1
  %v1239 = vadd.f32 %v1237, %v1238
  %v1240 = vrot.slane %v1231, 4
  %v1241 = vadd.f32 %v1231, %v1240
  %v1242 = vrot.slane %v1241, 2
  %v1243 = vadd.f32 %v1241, %v1242
  %v1244 = vrot.slane %v1243, 1
  %v1245 = vadd.f32 %v1243, %v1244
  %v1246 = vrot.slane %v1232, 4
  %v1247 = vadd.f32 %v1232, %v1246
  %v1248 = vrot.slane %v1247, 2
  %v1249 = vadd.f32 %v1247, %v1248
  %v1250 = vrot.slane %v1249, 1
  %v1251 = vadd.f32 %v1249, %v1250
  %v1252 = vrot.slane %v1233, 4
  %v1253 = vadd.f32 %v1233, %v1252
  %v1254 = vrot.slane %v1253, 2
  %v1255 = vadd.f32 %v1253, %v1254
  %v1256 = vrot.slane %v1255, 1
  %v1257 = vadd.f32 %v1255, %v1256
  %v1258 = vmul.f32 %v1022, %v955
  %v1259 = vmul.f32 %v1023, %v957
  %v1260 = vmul.f32 %v1024, %v1006
  %v1261 = vmul.f32 %v1025, %v1008
  %v1262 = vrot.slane %v1258, 4
  %v1263 = vadd.f32 %v1258, %v1262
  %v1264 = vrot.slane %v1263, 2
  %v1265 = vadd.f32 %v1263, %v1264
  %v1266 = vrot.slane %v1265, 1
  %v1267 = vadd.f32 %v1265, %v1266
  %v1268 = vrot.slane %v1259, 4
  %v1269 = vadd.f32 %v1259, %v1268
  %v1270 = vrot.slane %v1269, 2
  %v1271 = vadd.f32 %v1269, %v1270
  %v1272 = vrot.slane %v1271, 1
  %v1273 = vadd.f32 %v1271, %v1272
  %v1274 = vrot.slane %v1260, 4
  %v1275 = vadd.f32 %v1260, %v1274
  %v1276 = vrot.slane %v1275, 2
  %v1277 = vadd.f32 %v1275, %v1276
  %v1278 = vrot.slane %v1277, 1
  %v1279 = vadd.f32 %v1277, %v1278
  %v1280 = vrot.slane %v1261, 4
  %v1281 = vadd.f32 %v1261, %v1280
  %v1282 = vrot.slane %v1281, 2
  %v1283 = vadd.f32 %v1281, %v1282
  %v1284 = vrot.slane %v1283, 1
  %v1285 = vadd.f32 %v1283, %v1284
  %v1286 = vmax.f32 %v1211, %v1239
  %v1287 = vmax.f32 %v1217, %v1245
  %v1288 = vmax.f32 %v1223, %v1251
  %v1289 = vmax.f32 %v1229, %v1257
  %v1290 = vmax.f32 %v1286, %v1267
  %v1291 = vmax.f32 %v1287, %v1273
  %v1292 = vmax.f32 %v1288, %v1279
  %v1293 = vmax.f32 %v1289, %v1285
  %v1294 = vsub.f32 %v1211, %v1290
  %v1295 = vsub.f32 %v1217, %v1291
  %v1296 = vsub.f32 %v1223, %v1292
  %v1297 = vsub.f32 %v1229, %v1293
  %v1298 = vmul.f32 %v1294, 1.442695
  %v1299 = vpow.pop %v1298
  %v1300 = vmul.f32 %v1295, 1.442695
  %v1301 = vpow.pop %v1300
  %v1302 = vmul.f32 %v1296, 1.442695
  %v1303 = vpow.pop %v1302
  %v1304 = vmul.f32 %v1297, 1.442695
  %v1305 = vpow.pop %v1304
  %v1306 = vsub.f32 %v1239, %v1290
  %v1307 = vsub.f32 %v1245, %v1291
  %v1308 = vsub.f32 %v1251, %v1292
  %v1309 = vsub.f32 %v1257, %v1293
  %v1310 = vmul.f32 %v1306, 1.442695
  %v1311 = vpow.pop %v1310
  %v1312 = vmul.f32 %v1307, 1.442695
  %v1313 = vpow.pop %v1312
  %v1314 = vmul.f32 %v1308, 1.442695
  %v1315 = vpow.pop %v1314
  %v1316 = vmul.f32 %v1309, 1.442695
  %v1317 = vpow.pop %v1316
  %v1318 = vsub.f32 %v1267, %v1290
  %v1319 = vsub.f32 %v1273, %v1291
  %v1320 = vsub.f32 %v1279, %v1292
  %v1321 = vsub.f32 %v1285, %v1293
  %v1322 = vmul.f32 %v1318, 1.442695
  %v1323 = vpow.pop %v1322
  %v1324 = vmul.f32 %v1319, 1.442695
  %v1325 = vpow.pop %v1324
  %v1326 = vmul.f32 %v1320, 1.442695
  %v1327 = vpow.pop %v1326
  %v1328 = vmul.f32 %v1321, 1.442695
  %v1329 = vpow.pop %v1328
  %v1330 = vadd.f32 %v1299, %v1311
  %v1331 = vadd.f32 %v1301, %v1313
  %v1332 = vadd.f32 %v1303, %v1315
  %v1333 = vadd.f32 %v1305, %v1317
  %v1334 = vadd.f32 %v1330, %v1323
  %v1335 = vadd.f32 %v1331, %v1325
  %v1336 = vadd.f32 %v1332, %v1327
  %v1337 = vadd.f32 %v1333, %v1329
  %v1338 = vrcp.pop %v1334
  %v1339 = vrcp.pop %v1335
  %v1340 = vrcp.pop %v1336
  %v1341 = vrcp.pop %v1337
  %v1342 = vmul.f32 %v1299, %v1338
  %v1343 = vmul.f32 %v1301, %v1339
  %v1344 = vmul.f32 %v1303, %v1340
  %v1345 = vmul.f32 %v1305, %v1341
  %v1346 = vmul.f32 %v1342, %v757
  %v1347 = vmul.f32 %v1343, %v759
  %v1348 = vmul.f32 %v1344, %v808
  %v1349 = vmul.f32 %v1345, %v810
  %v1350 = vmul.f32 %v1311, %v1338
  %v1351 = vmul.f32 %v1313, %v1339
  %v1352 = vmul.f32 %v1315, %v1340
  %v1353 = vmul.f32 %v1317, %v1341
  %v1354 = vmul.f32 %v1350, %v859
  %v1355 = vmul.f32 %v1351, %v861
  %v1356 = vmul.f32 %v1352, %v910
  %v1357 = vmul.f32 %v1353, %v912
  %v1358 = vadd.f32 %v1346, %v1354
  %v1359 = vadd.f32 %v1347, %v1355
  %v1360 = vadd.f32 %v1348, %v1356
  %v1361 = vadd.f32 %v1349, %v1357
  %v1362 = vmul.f32 %v1323, %v1338
  %v1363 = vmul.f32 %v1325, %v1339
  %v1364 = vmul.f32 %v1327, %v1340
  %v1365 = vmul.f32 %v1329, %v1341
  %v1366 = vmul.f32 %v1362, %v961
  %v1367 = vmul.f32 %v1363, %v963
  %v1368 = vmul.f32 %v1364, %v1012
  %v1369 = vmul.f32 %v1365, %v1014
  %v1370 = vadd.f32 %v1358, %v1366
  %v1371 = vadd.f32 %v1359, %v1367
  %v1372 = vadd.f32 %v1360, %v1368
  %v1373 = vadd.f32 %v1361, %v1369
  %v1374 = vmul.f32 %v1026, %v751
  %v1375 = vmul.f32 %v1027, %v753
  %v1376 = vmul.f32 %v1028, %v802
  %v1377 = vmul.f32 %v1029, %v804
  %v1378 = vrot.slane %v1374, 4
  %v1379 = vadd.f32 %v1374, %v1378
  %v1380 = vrot.slane %v1379, 2
  %v1381 = vadd.f32 %v1379, %v1380
  %v1382 = vrot.slane %v1381, 1
  %v1383 = vadd.f32 %v1381, %v1382
  %v1384 = vrot.slane %v1375, 4
  %v1385 = vadd.f32 %v1375, %v1384
  %v1386 = vrot.slane %v1385, 2
  %v1387 = vadd.f32 %v1385, %v1386
  %v1388 = vrot.slane %v1387, 1
  %v1389 = vadd.f32 %v1387, %v1388
  %v1390 = vrot.slane %v1376, 4
  %v1391 = vadd.f32 %v1376, %v1390
  %v1392 = vrot.slane %v1391, 2
  %v1393 = vadd.f32 %v1391, %v1392
  %v1394 = vrot.slane %v1393, 1
  %v1395 = vadd.f32 %v1393, %v1394
  %v1396 = vrot.slane %v1377, 4
  %v1397 = vadd.f32 %v1377, %v1396
  %v1398 = vrot.slane %v1397, 2
  %v1399 = vadd.f32 %v1397, %v1398
  %v1400 = vrot.slane %v1399, 1
  %v1401 = vadd.f32 %v1399, %v1400
  %v1402 = vmul.f32 %v1026, %v853
  %v1403 = vmul.f32 %v1027, %v855
  %v1404 = vmul.f32 %v1028, %v904
  %v1405 = vmul.f32 %v1029, %v906
  %v1406 = vrot.slane %v1402, 4
  %v1407 = vadd.f32 %v1402, %v1406
  %v1408 = vrot.slane %v1407, 2
  %v1409 = vadd.f32 %v1407, %v1408
  %v1410 = vrot.slane %v1409, 1
  %v1411 = vadd.f32 %v1409, %v1410
  %v1412 = vrot.slane %v1403, 4
  %v1413 = vadd.f32 %v1403, %v1412
  %v1414 = vrot.slane %v1413, 2
  %v1415 = vadd.f32 %v1413, %v1414
  %v1416 = vrot.slane %v1415, 1
  %v1417 = vadd.f32 %v1415, %v1416
  %v1418 = vrot.slane %v1404, 4
  %v1419 = vadd.f32 %v1404, %v1418
  %v1420 = vrot.slane %v1419, 2
  %v1421 = vadd.f32 %v1419, %v1420
  %v1422 = vrot.slane %v1421, 1
  %v1423 = vadd.f32 %v1421, %v1422
  %v1424 = vrot.slane %v1405, 4
  %v1425 = vadd.f32 %v1405, %v1424
  %v1426 = vrot.slane %v1425, 2
  %v1427 = vadd.f32 %v1425, %v1426
  %v1428 = vrot.slane %v1427, 1
  %v1429 = vadd.f32 %v1427, %v1428
  %v1430 = vmul.f32 %v1026, %v955
  %v1431 = vmul.f32 %v1027, %v957
  %v1432 = vmul.f32 %v1028, %v1006
  %v1433 = vmul.f32 %v1029, %v1008
  %v1434 = vrot.slane %v1430, 4
  %v1435 = vadd.f32 %v1430, %v1434
  %v1436 = vrot.slane %v1435, 2
  %v1437 = vadd.f32 %v1435, %v1436
  %v1438 = vrot.slane %v1437, 1
  %v1439 = vadd.f32 %v1437, %v1438
  %v1440 = vrot.slane %v1431, 4
  %v1441 = vadd.f32 %v1431, %v1440
  %v1442 = vrot.slane %v1441, 2
  %v1443 = vadd.f32 %v1441, %v1442
  %v1444 = vrot.slane %v1443, 1
  %v1445 = vadd.f32 %v1443, %v1444
  %v1446 = vrot.slane %v1432, 4
  %v1447 = vadd.f32 %v1432, %v1446
  %v1448 = vrot.slane %v1447, 2
  %v1449 = vadd.f32 %v1447, %v1448
  %v1450 = vrot.slane %v1449, 1
  %v1451 = vadd.f32 %v1449, %v1450
  %v1452 = vrot.slane %v1433, 4
  %v1453 = vadd.f32 %v1433, %v1452
  %v1454 = vrot.slane %v1453, 2
  %v1455 = vadd.f32 %v1453, %v1454
  %v1456 = vrot.slane %v1455, 1
  %v1457 = vadd.f32 %v1455, %v1456
  %v1458 = vmax.f32 %v1383, %v1411
  %v1459 = vmax.f32 %v1389, %v1417
  %v1460 = vmax.f32 %v1395, %v1423
  %v1461 = vmax.f32 %v1401, %v1429
  %v1462 = vmax.f32 %v1458, %v1439
  %v1463 = vmax.f32 %v1459, %v1445
  %v1464 = vmax.f32 %v1460, %v1451
  %v1465 = vmax.f32 %v1461, %v1457
  %v1466 = vsub.f32 %v1383, %v1462
  %v1467 = vsub.f32 %v1389, %v1463
  %v1468 = vsub.f32 %v1395, %v1464
  %v1469 = vsub.f32 %v1401, %v1465
  %v1470 = vmul.f32 %v1466, 1.442695
  %v1471 = vpow.pop %v1470
  %v1472 = vmul.f32 %v1467, 1.442695
  %v1473 = vpow.pop %v1472
  %v1474 = vmul.f32 %v1468, 1.442695
  %v1475 = vpow.pop %v1474
  %v1476 = vmul.f32 %v1469, 1.442695
  %v1477 = vpow.pop %v1476
  %v1478 = vsub.f32 %v1411, %v1462
  %v1479 = vsub.f32 %v1417, %v1463
  %v1480 = vsub.f32 %v1423, %v1464
  %v1481 = vsub.f32 %v1429, %v1465
  %v1482 = vmul.f32 %v1478, 1.442695
  %v1483 = vpow.pop %v1482
  %v1484 = vmul.f32 %v1479, 1.442695
  %v1485 = vpow.pop %v1484
  %v1486 = vmul.f32 %v1480, 1.442695
  %v1487 = vpow.pop %v1486
  %v1488 = vmul.f32 %v1481, 1.442695
  %v1489 = vpow.pop %v1488
  %v1490 = vsub.f32 %v1439, %v1462
  %v1491 = vsub.f32 %v1445, %v1463
  %v1492 = vsub.f32 %v1451, %v1464
  %v1493 = vsub.f32 %v1457, %v1465
  %v1494 = vmul.f32 %v1490, 1.442695
  %v1495 = vpow.pop %v1494
  %v1496 = vmul.f32 %v1491, 1.442695
  %v1497 = vpow.pop %v1496
  %v1498 = vmul.f32 %v1492, 1.442695
  %v1499 = vpow.pop %v1498
  %v1500 = vmul.f32 %v1493, 1.442695
  %v1501 = vpow.pop %v1500
  %v1502 = vadd.f32 %v1471, %v1483
  %v1503 = vadd.f32 %v1473, %v1485
  %v1504 = vadd.f32 %v1475, %v1487
  %v1505 = vadd.f32 %v1477, %v1489
  %v1506 = vadd.f32 %v1502, %v1495
  %v1507 = vadd.f32 %v1503, %v1497
  %v1508 = vadd.f32 %v1504, %v1499
  %v1509 = vadd.f32 %v1505, %v1501
  %v1510 = vrcp.pop %v1506
  %v1511 = vrcp.pop %v1507
  %v1512 = vrcp.pop %v1508
  %v1513 = vrcp.pop %v1509
  %v1514 = vmul.f32 %v1471, %v1510
  %v1515 = vmul.f32 %v1473, %v1511
  %v1516 = vmul.f32 %v1475, %v1512
  %v1517 = vmul.f32 %v1477, %v1513
  %v1518 = vmul.f32 %v1514, %v757
  %v1519 = vmul.f32 %v1515, %v759
  %v1520 = vmul.f32 %v1516, %v808
  %v1521 = vmul.f32 %v1517, %v810
  %v1522 = vmul.f32 %v1483, %v1510
  %v1523 = vmul.f32 %v1485, %v1511
  %v1524 = vmul.f32 %v1487, %v1512
  %v1525 = vmul.f32 %v1489, %v1513
  %v1526 = vmul.f32 %v1522, %v859
  %v1527 = vmul.f32 %v1523, %v861
  %v1528 = vmul.f32 %v1524, %v910
  %v1529 = vmul.f32 %v1525, %v912
  %v1530 = vadd.f32 %v1518, %v1526
  %v1531 = vadd.f32 %v1519, %v1527
  %v1532 = vadd.f32 %v1520, %v1528
  %v1533 = vadd.f32 %v1521, %v1529
  %v1534 = vmul.f32 %v1495, %v1510
  %v1535 = vmul.f32 %v1497, %v1511
  %v1536 = vmul.f32 %v1499, %v1512
  %v1537 = vmul.f32 %v1501, %v1513
  %v1538 = vmul.f32 %v1534, %v961
  %v1539 = vmul.f32 %v1535, %v963
  %v1540 = vmul.f32 %v1536, %v1012
  %v1541 = vmul.f32 %v1537, %v1014
  %v1542 = vadd.f32 %v1530, %v1538
  %v1543 = vadd.f32 %v1531, %v1539
  %v1544 = vadd.f32 %v1532, %v1540
  %v1545 = vadd.f32 %v1533, %v1541
  %v1546 = vld [vmem:[%s7] sm:$0xf]
  %v1547 = vpack.c.bf16 %v1198, %v1198
  %v1548 = vpack.c.bf16 %v1199, %v1199
  %v1549 = vpack.c.bf16 %v1200, %v1200
  %v1550 = vpack.c.bf16 %v1201, %v1201
  %v1551 = vpack.c.bf16 %v1370, %v1370
  %v1552 = vpack.c.bf16 %v1371, %v1371
  %v1553 = vpack.c.bf16 %v1372, %v1372
  %v1554 = vpack.c.bf16 %v1373, %v1373
  %v1555 = vpack.c.bf16 %v1542, %v1542
  %v1556 = vpack.c.bf16 %v1543, %v1543
  %v1557 = vpack.c.bf16 %v1544, %v1544
  %v1558 = vpack.c.bf16 %v1545, %v1545
  %v1559 = vld [vmem:[%s8] sm:$0xff]
  %1561 = vset.pattern.permute.xlu0 0
  %1562 = vperm.xlu0 %1561, %v1559
  %v1563 = vpop.permute.xlu0 %1562
  %v1566 = vsel %vm668, %v1546, 0
  %v1569 = vsel %vm675, %v1547, 0
  %v1572 = vsel %vm675, %v1548, 0
  %v1575 = vsel %vm675, %v1549, 0
  %v1578 = vsel %vm675, %v1550, 0
  %v1581 = vsel %vm675, %v1551, 0
  %v1584 = vsel %vm675, %v1552, 0
  %v1587 = vsel %vm675, %v1553, 0
  %v1590 = vsel %vm675, %v1554, 0
  %v1593 = vsel %vm675, %v1555, 0
  %v1596 = vsel %vm675, %v1556, 0
  %v1599 = vsel %vm675, %v1557, 0
  %v1602 = vsel %vm675, %v1558, 0
  %1604 = vmatprep.subr.bf16.mxu0 %v1572
  %1605 = vmatpush1.bf16.msra.mxu0 %v1569
  %1606 = vmatprep.subr.bf16.mxu0 0
  %1607 = vmatpush1.bf16.msra.mxu0 0
  %1608 = vmatprep.subr.bf16.mxu0 0
  %1609 = vmatpush1.bf16.msra.mxu0 0
  %1610 = vmatprep.subr.bf16.mxu0 0
  %1611 = vmatpush1.bf16.msra.mxu0 0
  %1612 = vmatprep.subr.bf16.mxu0 0
  %1613 = vmatpush1.bf16.msra.mxu0 0
  %1614 = vmatprep.subr.bf16.mxu0 0
  %1615 = vmatpush1.bf16.msra.mxu0 0
  %1616 = vmatprep.subr.bf16.mxu0 0
  %1617 = vmatpush1.bf16.msra.mxu0 0
  %1618 = vmatprep.subr.bf16.mxu0 0
  %1619 = vmatpush1.bf16.msra.mxu0 0
  %1620 = vmatprep.subr.bf16.mxu0 0
  %1621 = vmatpush1.bf16.msra.mxu0 0
  %1622 = vmatprep.subr.bf16.mxu0 0
  %1623 = vmatpush1.bf16.msra.mxu0 0
  %1624 = vmatprep.subr.bf16.mxu0 0
  %1625 = vmatpush1.bf16.msra.mxu0 0
  %1626 = vmatprep.subr.bf16.mxu0 0
  %1627 = vmatpush1.bf16.msra.mxu0 0
  %1628 = vmatprep.subr.bf16.mxu0 0
  %1629 = vmatpush1.bf16.msra.mxu0 0
  %1630 = vmatprep.subr.bf16.mxu0 0
  %1631 = vmatpush1.bf16.msra.mxu0 0
  %1632 = vmatprep.subr.bf16.mxu0 0
  %1633 = vmatpush1.bf16.msra.mxu0 0
  %1634 = vmatprep.subr.bf16.mxu0 0
  %1635 = vmatpush1.bf16.msra.mxu0 0
  %1636 = vmatprep.mubr.bf16.mxu0 0
  %1637 = vmatmul.mubr.bf16.gmra.mrb[0].mxu0 %v1566
  %v1638 = vpop.f32.mrb[0].mxu0
  %v1639 = vadd.f32 %v1563, %v1638
  %v1640 = vpop.f32.mrb[0].mxu0
  %v1641 = vadd.f32 %v1563, %v1640
  %v1642 = vpop.f32.mrb[0].mxu0
  %v1643 = vpop.f32.mrb[0].mxu0
  %1644 = vdwg.mxu0
  %1645 = vmatprep.subr.bf16.mxu0 %v1578
  %1646 = vmatpush1.bf16.msra.mxu0 %v1575
  %1647 = vmatprep.subr.bf16.mxu0 0
  %1648 = vmatpush1.bf16.msra.mxu0 0
  %1649 = vmatprep.subr.bf16.mxu0 0
  %1650 = vmatpush1.bf16.msra.mxu0 0
  %1651 = vmatprep.subr.bf16.mxu0 0
  %1652 = vmatpush1.bf16.msra.mxu0 0
  %1653 = vmatprep.subr.bf16.mxu0 0
  %1654 = vmatpush1.bf16.msra.mxu0 0
  %1655 = vmatprep.subr.bf16.mxu0 0
  %1656 = vmatpush1.bf16.msra.mxu0 0
  %1657 = vmatprep.subr.bf16.mxu0 0
  %1658 = vmatpush1.bf16.msra.mxu0 0
  %1659 = vmatprep.subr.bf16.mxu0 0
  %1660 = vmatpush1.bf16.msra.mxu0 0
  %1661 = vmatprep.subr.bf16.mxu0 0
  %1662 = vmatpush1.bf16.msra.mxu0 0
  %1663 = vmatprep.subr.bf16.mxu0 0
  %1664 = vmatpush1.bf16.msra.mxu0 0
  %1665 = vmatprep.subr.bf16.mxu0 0
  %1666 = vmatpush1.bf16.msra.mxu0 0
  %1667 = vmatprep.subr.bf16.mxu0 0
  %1668 = vmatpush1.bf16.msra.mxu0 0
  %1669 = vmatprep.subr.bf16.mxu0 0
  %1670 = vmatpush1.bf16.msra.mxu0 0
  %1671 = vmatprep.subr.bf16.mxu0 0
  %1672 = vmatpush1.bf16.msra.mxu0 0
  %1673 = vmatprep.subr.bf16.mxu0 0
  %1674 = vmatpush1.bf16.msra.mxu0 0
  %1675 = vmatprep.subr.bf16.mxu0 0
  %1676 = vmatpush1.bf16.msra.mxu0 0
  %1677 = vmatprep.mubr.bf16.mxu0 0
  %1678 = vmatmul.mubr.bf16.gmra.mrb[0].mxu0 %v1566
  %v1679 = vpop.f32.mrb[0].mxu0
  %v1680 = vadd.f32 %v1563, %v1679
  %v1681 = vpop.f32.mrb[0].mxu0
  %v1682 = vadd.f32 %v1563, %v1681
  %v1683 = vpop.f32.mrb[0].mxu0
  %v1684 = vpop.f32.mrb[0].mxu0
  %1685 = vdwg.mxu0
  %1686 = vmatprep.subr.bf16.mxu0 %v1584
  %1687 = vmatpush1.bf16.msra.mxu0 %v1581
  %1688 = vmatprep.subr.bf16.mxu0 0
  %1689 = vmatpush1.bf16.msra.mxu0 0
  %1690 = vmatprep.subr.bf16.mxu0 0
  %1691 = vmatpush1.bf16.msra.mxu0 0
  %1692 = vmatprep.subr.bf16.mxu0 0
  %1693 = vmatpush1.bf16.msra.mxu0 0
  %1694 = vmatprep.subr.bf16.mxu0 0
  %1695 = vmatpush1.bf16.msra.mxu0 0
  %1696 = vmatprep.subr.bf16.mxu0 0
  %1697 = vmatpush1.bf16.msra.mxu0 0
  %1698 = vmatprep.subr.bf16.mxu0 0
  %1699 = vmatpush1.bf16.msra.mxu0 0
  %1700 = vmatprep.subr.bf16.mxu0 0
  %1701 = vmatpush1.bf16.msra.mxu0 0
  %1702 = vmatprep.subr.bf16.mxu0 0
  %1703 = vmatpush1.bf16.msra.mxu0 0
  %1704 = vmatprep.subr.bf16.mxu0 0
  %1705 = vmatpush1.bf16.msra.mxu0 0
  %1706 = vmatprep.subr.bf16.mxu0 0
  %1707 = vmatpush1.bf16.msra.mxu0 0
  %1708 = vmatprep.subr.bf16.mxu0 0
  %1709 = vmatpush1.bf16.msra.mxu0 0
  %1710 = vmatprep.subr.bf16.mxu0 0
  %1711 = vmatpush1.bf16.msra.mxu0 0
  %1712 = vmatprep.subr.bf16.mxu0 0
  %1713 = vmatpush1.bf16.msra.mxu0 0
  %1714 = vmatprep.subr.bf16.mxu0 0
  %1715 = vmatpush1.bf16.msra.mxu0 0
  %1716 = vmatprep.subr.bf16.mxu0 0
  %1717 = vmatpush1.bf16.msra.mxu0 0
  %1718 = vmatprep.mubr.bf16.mxu0 0
  %1719 = vmatmul.mubr.bf16.gmra.mrb[0].mxu0 %v1566
  %v1720 = vpop.f32.mrb[0].mxu0
  %v1721 = vadd.f32 %v1563, %v1720
  %v1722 = vpop.f32.mrb[0].mxu0
  %v1723 = vadd.f32 %v1563, %v1722
  %v1724 = vpop.f32.mrb[0].mxu0
  %v1725 = vpop.f32.mrb[0].mxu0
  %1726 = vdwg.mxu0
  %1727 = vmatprep.subr.bf16.mxu0 %v1590
  %1728 = vmatpush1.bf16.msra.mxu0 %v1587
  %1729 = vmatprep.subr.bf16.mxu0 0
  %1730 = vmatpush1.bf16.msra.mxu0 0
  %1731 = vmatprep.subr.bf16.mxu0 0
  %1732 = vmatpush1.bf16.msra.mxu0 0
  %1733 = vmatprep.subr.bf16.mxu0 0
  %1734 = vmatpush1.bf16.msra.mxu0 0
  %1735 = vmatprep.subr.bf16.mxu0 0
  %1736 = vmatpush1.bf16.msra.mxu0 0
  %1737 = vmatprep.subr.bf16.mxu0 0
  %1738 = vmatpush1.bf16.msra.mxu0 0
  %1739 = vmatprep.subr.bf16.mxu0 0
  %1740 = vmatpush1.bf16.msra.mxu0 0
  %1741 = vmatprep.subr.bf16.mxu0 0
  %1742 = vmatpush1.bf16.msra.mxu0 0
  %1743 = vmatprep.subr.bf16.mxu0 0
  %1744 = vmatpush1.bf16.msra.mxu0 0
  %1745 = vmatprep.subr.bf16.mxu0 0
  %1746 = vmatpush1.bf16.msra.mxu0 0
  %1747 = vmatprep.subr.bf16.mxu0 0
  %1748 = vmatpush1.bf16.msra.mxu0 0
  %1749 = vmatprep.subr.bf16.mxu0 0
  %1750 = vmatpush1.bf16.msra.mxu0 0
  %1751 = vmatprep.subr.bf16.mxu0 0
  %1752 = vmatpush1.bf16.msra.mxu0 0
  %1753 = vmatprep.subr.bf16.mxu0 0
  %1754 = vmatpush1.bf16.msra.mxu0 0
  %1755 = vmatprep.subr.bf16.mxu0 0
  %1756 = vmatpush1.bf16.msra.mxu0 0
  %1757 = vmatprep.subr.bf16.mxu0 0
  %1758 = vmatpush1.bf16.msra.mxu0 0
  %1759 = vmatprep.mubr.bf16.mxu0 0
  %1760 = vmatmul.mubr.bf16.gmra.mrb[0].mxu0 %v1566
  %v1761 = vpop.f32.mrb[0].mxu0
  %v1762 = vadd.f32 %v1563, %v1761
  %v1763 = vpop.f32.mrb[0].mxu0
  %v1764 = vadd.f32 %v1563, %v1763
  %v1765 = vpop.f32.mrb[0].mxu0
  %v1766 = vpop.f32.mrb[0].mxu0
  %1767 = vdwg.mxu0
  %1768 = vmatprep.subr.bf16.mxu0 %v1596
  %1769 = vmatpush1.bf16.msra.mxu0 %v1593
  %1770 = vmatprep.subr.bf16.mxu0 0
  %1771 = vmatpush1.bf16.msra.mxu0 0
  %1772 = vmatprep.subr.bf16.mxu0 0
  %1773 = vmatpush1.bf16.msra.mxu0 0
  %1774 = vmatprep.subr.bf16.mxu0 0
  %1775 = vmatpush1.bf16.msra.mxu0 0
  %1776 = vmatprep.subr.bf16.mxu0 0
  %1777 = vmatpush1.bf16.msra.mxu0 0
  %1778 = vmatprep.subr.bf16.mxu0 0
  %1779 = vmatpush1.bf16.msra.mxu0 0
  %1780 = vmatprep.subr.bf16.mxu0 0
  %1781 = vmatpush1.bf16.msra.mxu0 0
  %1782 = vmatprep.subr.bf16.mxu0 0
  %1783 = vmatpush1.bf16.msra.mxu0 0
  %1784 = vmatprep.subr.bf16.mxu0 0
  %1785 = vmatpush1.bf16.msra.mxu0 0
  %1786 = vmatprep.subr.bf16.mxu0 0
  %1787 = vmatpush1.bf16.msra.mxu0 0
  %1788 = vmatprep.subr.bf16.mxu0 0
  %1789 = vmatpush1.bf16.msra.mxu0 0
  %1790 = vmatprep.subr.bf16.mxu0 0
  %1791 = vmatpush1.bf16.msra.mxu0 0
  %1792 = vmatprep.subr.bf16.mxu0 0
  %1793 = vmatpush1.bf16.msra.mxu0 0
  %1794 = vmatprep.subr.bf16.mxu0 0
  %1795 = vmatpush1.bf16.msra.mxu0 0
  %1796 = vmatprep.subr.bf16.mxu0 0
  %1797 = vmatpush1.bf16.msra.mxu0 0
  %1798 = vmatprep.subr.bf16.mxu0 0
  %1799 = vmatpush1.bf16.msra.mxu0 0
  %1800 = vmatprep.mubr.bf16.mxu0 0
  %1801 = vmatmul.mubr.bf16.gmra.mrb[0].mxu0 %v1566
  %v1802 = vpop.f32.mrb[0].mxu0
  %v1803 = vadd.f32 %v1563, %v1802
  %v1804 = vpop.f32.mrb[0].mxu0
  %v1805 = vadd.f32 %v1563, %v1804
  %v1806 = vpop.f32.mrb[0].mxu0
  %v1807 = vpop.f32.mrb[0].mxu0
  %1808 = vdwg.mxu0
  %1809 = vmatprep.subr.bf16.mxu0 %v1602
  %1810 = vmatpush1.bf16.msra.mxu0 %v1599
  %1811 = vmatprep.subr.bf16.mxu0 0
  %1812 = vmatpush1.bf16.msra.mxu0 0
  %1813 = vmatprep.subr.bf16.mxu0 0
  %1814 = vmatpush1.bf16.msra.mxu0 0
  %1815 = vmatprep.subr.bf16.mxu0 0
  %1816 = vmatpush1.bf16.msra.mxu0 0
  %1817 = vmatprep.subr.bf16.mxu0 0
  %1818 = vmatpush1.bf16.msra.mxu0 0
  %1819 = vmatprep.subr.bf16.mxu0 0
  %1820 = vmatpush1.bf16.msra.mxu0 0
  %1821 = vmatprep.subr.bf16.mxu0 0
  %1822 = vmatpush1.bf16.msra.mxu0 0
  %1823 = vmatprep.subr.bf16.mxu0 0
  %1824 = vmatpush1.bf16.msra.mxu0 0
  %1825 = vmatprep.subr.bf16.mxu0 0
  %1826 = vmatpush1.bf16.msra.mxu0 0
  %1827 = vmatprep.subr.bf16.mxu0 0
  %1828 = vmatpush1.bf16.msra.mxu0 0
  %1829 = vmatprep.subr.bf16.mxu0 0
  %1830 = vmatpush1.bf16.msra.mxu0 0
  %1831 = vmatprep.subr.bf16.mxu0 0
  %1832 = vmatpush1.bf16.msra.mxu0 0
  %1833 = vmatprep.subr.bf16.mxu0 0
  %1834 = vmatpush1.bf16.msra.mxu0 0
  %1835 = vmatprep.subr.bf16.mxu0 0
  %1836 = vmatpush1.bf16.msra.mxu0 0
  %1837 = vmatprep.subr.bf16.mxu0 0
  %1838 = vmatpush1.bf16.msra.mxu0 0
  %1839 = vmatprep.subr.bf16.mxu0 0
  %1840 = vmatpush1.bf16.msra.mxu0 0
  %1841 = vmatprep.mubr.bf16.mxu0 0
  %1842 = vmatmul.mubr.bf16.gmra.mrb[0].mxu0 %v1566
  %v1843 = vpop.f32.mrb[0].mxu0
  %v1844 = vadd.f32 %v1563, %v1843
  %v1845 = vpop.f32.mrb[0].mxu0
  %v1846 = vadd.f32 %v1563, %v1845
  %v1847 = vpop.f32.mrb[0].mxu0
  %v1848 = vpop.f32.mrb[0].mxu0
  %1849 = vdwg.mxu0
  %v1850 = vadd.f32 %v603, %v1639
  %v1851 = vadd.f32 %v604, %v1641
  %v1852 = vadd.f32 %v605, %v1680
  %v1853 = vadd.f32 %v606, %v1682
  %v1854 = vadd.f32 %v607, %v1721
  %v1855 = vadd.f32 %v608, %v1723
  %v1856 = vadd.f32 %v609, %v1762
  %v1857 = vadd.f32 %v610, %v1764
  %v1858 = vadd.f32 %v611, %v1803
  %v1859 = vadd.f32 %v612, %v1805
  %v1860 = vadd.f32 %v613, %v1844
  %v1861 = vadd.f32 %v614, %v1846
  %1862 = vst [vmem:[%s10] sm:$0xff] %v1850
  %1863 = vst [vmem:[%s10 + $0x8] sm:$0xff] %v1851
  %1864 = vst [vmem:[%s10 + $0x10] sm:$0xff] %v1852
  %1865 = vst [vmem:[%s10 + $0x18] sm:$0xff] %v1853
  %1866 = vst [vmem:[%s10 + $0x20] sm:$0xff] %v1854
  %1867 = vst [vmem:[%s10 + $0x28] sm:$0xff] %v1855
  %1868 = vst [vmem:[%s10 + $0x30] sm:$0xff] %v1856
  %1869 = vst [vmem:[%s10 + $0x38] sm:$0xff] %v1857
  %1870 = vst [vmem:[%s10 + $0x40] sm:$0xff] %v1858
  %1871 = vst [vmem:[%s10 + $0x48] sm:$0xff] %v1859
  %1872 = vst [vmem:[%s10 + $0x50] sm:$0xff] %v1860
  %1873 = vst [vmem:[%s10 + $0x58] sm:$0xff] %v1861
  // Predicated region
  $region38: #{tst_forward.5} parent=0 // pred_check
    _
  $region39: #{tst_forward.5} parent=0 // pred_check_branch
    %1875 = sbr.rel (0) target = $region41
  $region40: #{tst_forward.5} parent=0 // pred_region
    _
  $region41: #{tst_forward.5} parent=0 // pred_fallthru
    _
  // Predicated region
  $region42: #{tst_forward.5} parent=0 // pred_check
    _
  $region43: #{tst_forward.5} parent=0 // pred_check_branch
    %1877 = sbr.rel (0) target = $region45
  $region44: #{tst_forward.5} parent=0 // pred_region
    _
  $region45: #{tst_forward.5} parent=0 // pred_fallthru
    _
  // Predicated region
  $region46: #{tst_forward.5} parent=0 // pred_check
    _
  $region47: #{tst_forward.5} parent=0 // pred_check_branch
    %1879 = sbr.rel (0) target = $region49
  $region48: #{tst_forward.5} parent=0 // pred_region
    _
  $region49: #{tst_forward.5} parent=0 // pred_fallthru
    _
  // Predicated region
  $region50: #{tst_forward.5} parent=0 // pred_check
    _
  $region51: #{tst_forward.5} parent=0 // pred_check_branch
    %1881 = sbr.rel (0) target = $region53
  $region52: #{tst_forward.5} parent=0 // pred_region
    _
  $region53: #{tst_forward.5} parent=0 // pred_fallthru
    _

// kernel: tst_forward.6
$region0: #{tst_forward.6}
  #allocation0 [shape = 'u32[]', space=smem, size = 0x4, offset = 0x4, fixed_abs, tag = 'smem constant byte address 0x4 - core index']
  #allocation1 [shape = 'u32[144,128]{1,0:T(1,128)}', space=vmem, size = 0x12000, scoped, tag = 'internal scratch']
  %s0 = inlined_call_operand.vmem [shape: f32[32,384], index: 0, kind: input, shape index: {}]
  %s1 = inlined_call_operand.vmem [shape: bf16[16,32], index: 1, kind: input, shape index: {}]
  %s2 = inlined_call_operand.vmem [shape: f32[16,1], index: 2, kind: input, shape index: {}]
  %s3 = inlined_call_operand.vmem [shape: bf16[48,16], index: 3, kind: input, shape index: {}]
  %s4 = inlined_call_operand.vmem [shape: f32[48,1], index: 4, kind: input, shape index: {}]
  %s5 = inlined_call_operand.vmem [shape: bf16[16,16], index: 5, kind: input, shape index: {}]
  %s6 = inlined_call_operand.vmem [shape: f32[16,1], index: 6, kind: input, shape index: {}]
  %s7 = inlined_call_operand.vmem [shape: f32[16,384], index: 7, kind: output, shape index: {0}]
  %s8 = inlined_call_operand.vmem [shape: f32[16,384], index: 8, kind: output, shape index: {1}]
  %9 = xla_tuple %s7, %s8
  %s10 = sld [smem:[#allocation0]]
  $region46: #{tst_forward.6} parent=0
    _
  %s12 = ssub.s32 1, %s10
  %s13 = scalar_select 0, %s12, %s10
  // Predicated region
  $region2: #{tst_forward.6} parent=0 // pred_check
    _
  $region3: #{tst_forward.6} parent=0 // pred_check_branch
    %15 = sbr.rel (0) target = $region5
  $region4: #{tst_forward.6} parent=0 // pred_region
    _
  $region5: #{tst_forward.6} parent=0 // pred_fallthru
    _
  // Predicated region
  $region6: #{tst_forward.6} parent=0 // pred_check
    _
  $region7: #{tst_forward.6} parent=0 // pred_check_branch
    %17 = sbr.rel (0) target = $region9
  $region8: #{tst_forward.6} parent=0 // pred_region
    _
  $region9: #{tst_forward.6} parent=0 // pred_fallthru
    _
  // Predicated region
  $region10: #{tst_forward.6} parent=0 // pred_check
    _
  $region11: #{tst_forward.6} parent=0 // pred_check_branch
    %19 = sbr.rel (0) target = $region13
  $region12: #{tst_forward.6} parent=0 // pred_region
    _
  $region13: #{tst_forward.6} parent=0 // pred_fallthru
    _
  // Predicated region
  $region14: #{tst_forward.6} parent=0 // pred_check
    _
  $region15: #{tst_forward.6} parent=0 // pred_check_branch
    %21 = sbr.rel (0) target = $region17
  $region16: #{tst_forward.6} parent=0 // pred_region
    _
  $region17: #{tst_forward.6} parent=0 // pred_fallthru
    _
  // Predicated region
  $region18: #{tst_forward.6} parent=0 // pred_check
    _
  $region19: #{tst_forward.6} parent=0 // pred_check_branch
    %23 = sbr.rel (0) target = $region21
  $region20: #{tst_forward.6} parent=0 // pred_region
    _
  $region21: #{tst_forward.6} parent=0 // pred_fallthru
    _
  // Predicated region
  $region22: #{tst_forward.6} parent=0 // pred_check
    _
  $region23: #{tst_forward.6} parent=0 // pred_check_branch
    %25 = sbr.rel (0) target = $region25
  $region24: #{tst_forward.6} parent=0 // pred_region
    _
  $region25: #{tst_forward.6} parent=0 // pred_fallthru
    _
  // Predicated region
  $region26: #{tst_forward.6} parent=0 // pred_check
    _
  $region27: #{tst_forward.6} parent=0 // pred_check_branch
    %27 = sbr.rel (0) target = $region29
  $region28: #{tst_forward.6} parent=0 // pred_region
    _
  $region29: #{tst_forward.6} parent=0 // pred_fallthru
    _
  %v29 = vld [vmem:[%s1] sm:$0xf]
  %v30 = vld [vmem:[%s1 + $0x4] sm:$0xf]
  %v31 = vld [vmem:[%s0] sm:$0xff]
  %v32 = vld [vmem:[%s0 + $0x8] sm:$0xff]
  %v33 = vld [vmem:[%s0 + $0x10] sm:$0xff]
  %v34 = vld [vmem:[%s0 + $0x18] sm:$0xff]
  %v35 = vld [vmem:[%s0 + $0x20] sm:$0xff]
  %v36 = vld [vmem:[%s0 + $0x28] sm:$0xff]
  %v37 = vld [vmem:[%s0 + $0x30] sm:$0xff]
  %v38 = vld [vmem:[%s0 + $0x38] sm:$0xff]
  %v39 = vld [vmem:[%s0 + $0x40] sm:$0xff]
  %v40 = vld [vmem:[%s0 + $0x48] sm:$0xff]
  %v41 = vld [vmem:[%s0 + $0x50] sm:$0xff]
  %v42 = vld [vmem:[%s0 + $0x58] sm:$0xff]
  %v43 = vpack.c.bf16 %v34, %v31
  %v44 = vpack.c.bf16 %v35, %v32
  %v45 = vpack.c.bf16 %v36, %v33
  %v46 = vpack.c.bf16 %v40, %v37
  %v47 = vpack.c.bf16 %v41, %v38
  %v48 = vpack.c.bf16 %v42, %v39
  %v49 = vld [vmem:[%s2] sm:$0xff]
  %v50 = vld [vmem:[%s2 + $0x8] sm:$0xff]
  %52 = vset.pattern.permute.xlu0 0
  %53 = vperm.xlu0 %52, %v49
  %v54 = vpop.permute.xlu0 %53
  %57 = vset.pattern.permute.xlu0 0
  %58 = vperm.xlu0 %57, %v50
  %v59 = vpop.permute.xlu0 %58
  %v63 = vunpack.c.l.b16 %v29
  %v64 = vunpack.c.l.b16 %v30
  %v65 = vpack.c.b16 %v64, %v63
  %vm66 = vcmask 261120
  %v68 = vsel %vm66, %v65, 0
  %70 = vmatprep.subr.bf16.mxu0 %v44
  %71 = vmatpush1.bf16.msra.mxu0 %v43
  %72 = vmatprep.subr.bf16.mxu0 %v47
  %73 = vmatpush1.bf16.msra.mxu0 %v46
  %74 = vmatprep.subr.bf16.mxu0 0
  %75 = vmatpush1.bf16.msra.mxu0 0
  %76 = vmatprep.subr.bf16.mxu0 0
  %77 = vmatpush1.bf16.msra.mxu0 0
  %78 = vmatprep.subr.bf16.mxu0 0
  %79 = vmatpush1.bf16.msra.mxu0 0
  %80 = vmatprep.subr.bf16.mxu0 0
  %81 = vmatpush1.bf16.msra.mxu0 0
  %82 = vmatprep.subr.bf16.mxu0 0
  %83 = vmatpush1.bf16.msra.mxu0 0
  %84 = vmatprep.subr.bf16.mxu0 0
  %85 = vmatpush1.bf16.msra.mxu0 0
  %86 = vmatprep.subr.bf16.mxu0 0
  %87 = vmatpush1.bf16.msra.mxu0 0
  %88 = vmatprep.subr.bf16.mxu0 0
  %89 = vmatpush1.bf16.msra.mxu0 0
  %90 = vmatprep.subr.bf16.mxu0 0
  %91 = vmatpush1.bf16.msra.mxu0 0
  %92 = vmatprep.subr.bf16.mxu0 0
  %93 = vmatpush1.bf16.msra.mxu0 0
  %94 = vmatprep.subr.bf16.mxu0 0
  %95 = vmatpush1.bf16.msra.mxu0 0
  %96 = vmatprep.subr.bf16.mxu0 0
  %97 = vmatpush1.bf16.msra.mxu0 0
  %98 = vmatprep.subr.bf16.mxu0 0
  %99 = vmatpush1.bf16.msra.mxu0 0
  %100 = vmatprep.subr.bf16.mxu0 0
  %101 = vmatpush1.bf16.msra.mxu0 0
  %102 = vmatprep.mubr.bf16.mxu0 0
  %103 = vmatmul.mubr.bf16.gmra.mrb[0].mxu0 %v68
  %v104 = vpop.f32.mrb[0].mxu0
  %v105 = vadd.f32 %v54, %v104
  %v106 = vpop.f32.mrb[0].mxu0
  %v107 = vadd.f32 %v54, %v106
  %v108 = vpop.f32.mrb[0].mxu0
  %v109 = vadd.f32 %v59, %v108
  %v110 = vpop.f32.mrb[0].mxu0
  %v111 = vadd.f32 %v59, %v110
  %112 = vdwg.mxu0
  %113 = vmatprep.subr.bf16.mxu0 0
  %114 = vmatpush1.bf16.msra.mxu0 %v45
  %115 = vmatprep.subr.bf16.mxu0 0
  %116 = vmatpush1.bf16.msra.mxu0 %v48
  %117 = vmatprep.subr.bf16.mxu0 0
  %118 = vmatpush1.bf16.msra.mxu0 0
  %119 = vmatprep.subr.bf16.mxu0 0
  %120 = vmatpush1.bf16.msra.mxu0 0
  %121 = vmatprep.subr.bf16.mxu0 0
  %122 = vmatpush1.bf16.msra.mxu0 0
  %123 = vmatprep.subr.bf16.mxu0 0
  %124 = vmatpush1.bf16.msra.mxu0 0
  %125 = vmatprep.subr.bf16.mxu0 0
  %126 = vmatpush1.bf16.msra.mxu0 0
  %127 = vmatprep.subr.bf16.mxu0 0
  %128 = vmatpush1.bf16.msra.mxu0 0
  %129 = vmatprep.subr.bf16.mxu0 0
  %130 = vmatpush1.bf16.msra.mxu0 0
  %131 = vmatprep.subr.bf16.mxu0 0
  %132 = vmatpush1.bf16.msra.mxu0 0
  %133 = vmatprep.subr.bf16.mxu0 0
  %134 = vmatpush1.bf16.msra.mxu0 0
  %135 = vmatprep.subr.bf16.mxu0 0
  %136 = vmatpush1.bf16.msra.mxu0 0
  %137 = vmatprep.subr.bf16.mxu0 0
  %138 = vmatpush1.bf16.msra.mxu0 0
  %139 = vmatprep.subr.bf16.mxu0 0
  %140 = vmatpush1.bf16.msra.mxu0 0
  %141 = vmatprep.subr.bf16.mxu0 0
  %142 = vmatpush1.bf16.msra.mxu0 0
  %143 = vmatprep.subr.bf16.mxu0 0
  %144 = vmatpush1.bf16.msra.mxu0 0
  %145 = vmatprep.mubr.bf16.mxu0 0
  %146 = vmatmul.mubr.bf16.gmra.mrb[0].mxu0 %v68
  %v147 = vpop.f32.mrb[0].mxu0
  %v148 = vadd.f32 %v54, %v147
  %v149 = vpop.f32.mrb[0].mxu0
  %v150 = vpop.f32.mrb[0].mxu0
  %v151 = vadd.f32 %v59, %v150
  %v152 = vpop.f32.mrb[0].mxu0
  %153 = vdwg.mxu0
  %v154 = vmax.f32 %v105, 0.0
  %v155 = vmax.f32 %v107, 0.0
  %v156 = vmax.f32 %v148, 0.0
  %v157 = vmax.f32 %v109, 0.0
  %v158 = vmax.f32 %v111, 0.0
  %v159 = vmax.f32 %v151, 0.0
  %160 = vst [vmem:[%s7] sm:$0xff] %v154
  %161 = vst [vmem:[%s7 + $0x8] sm:$0xff] %v155
  %162 = vst [vmem:[%s7 + $0x10] sm:$0xff] %v156
  %163 = vst [vmem:[%s7 + $0x18] sm:$0xff] %v157
  %164 = vst [vmem:[%s7 + $0x20] sm:$0xff] %v158
  %165 = vst [vmem:[%s7 + $0x28] sm:$0xff] %v159
  %v166 = vld [vmem:[%s3] sm:$0xf]
  %v167 = vld [vmem:[%s3 + $0x4] sm:$0xf]
  %v168 = vld [vmem:[%s3 + $0x8] sm:$0xf]
  %v169 = vld [vmem:[%s3 + $0xc] sm:$0xf]
  %v170 = vld [vmem:[%s3 + $0x10] sm:$0xf]
  %v171 = vld [vmem:[%s3 + $0x14] sm:$0xf]
  %v172 = vpack.c.bf16 %v157, %v154
  %v173 = vpack.c.bf16 %v158, %v155
  %v174 = vpack.c.bf16 %v159, %v156
  %v175 = vld [vmem:[%s4] sm:$0xff]
  %v176 = vld [vmem:[%s4 + $0x8] sm:$0xff]
  %v177 = vld [vmem:[%s4 + $0x10] sm:$0xff]
  %v178 = vld [vmem:[%s4 + $0x18] sm:$0xff]
  %v179 = vld [vmem:[%s4 + $0x20] sm:$0xff]
  %v180 = vld [vmem:[%s4 + $0x28] sm:$0xff]
  %182 = vset.pattern.permute.xlu0 0
  %183 = vperm.xlu0 %182, %v175
  %v184 = vpop.permute.xlu0 %183
  %187 = vset.pattern.permute.xlu0 0
  %188 = vperm.xlu0 %187, %v176
  %v189 = vpop.permute.xlu0 %188
  %192 = vset.pattern.permute.xlu0 0
  %193 = vperm.xlu0 %192, %v177
  %v194 = vpop.permute.xlu0 %193
  %197 = vset.pattern.permute.xlu0 0
  %198 = vperm.xlu0 %197, %v178
  %v199 = vpop.permute.xlu0 %198
  %202 = vset.pattern.permute.xlu0 0
  %203 = vperm.xlu0 %202, %v179
  %v204 = vpop.permute.xlu0 %203
  %207 = vset.pattern.permute.xlu0 0
  %208 = vperm.xlu0 %207, %v180
  %v209 = vpop.permute.xlu0 %208
  %v217 = vunpack.c.l.b16 %v166
  %v218 = vunpack.c.l.b16 %v167
  %v219 = vunpack.c.l.b16 %v168
  %v220 = vunpack.c.l.b16 %v169
  %v221 = vunpack.c.l.b16 %v170
  %v222 = vunpack.c.l.b16 %v171
  %v223 = vpack.c.b16 %v218, %v217
  %v224 = vpack.c.b16 %v220, %v219
  %v225 = vpack.c.b16 %v222, %v221
  %vm226 = vcmask 130048
  %v228 = vsel %vm226, %v223, 0
  %v231 = vsel %vm226, %v224, 0
  %v234 = vsel %vm226, %v225, 0
  %236 = vmatprep.subr.bf16.mxu0 %v173
  %237 = vmatpush1.bf16.msra.mxu0 %v172
  %238 = vmatprep.subr.bf16.mxu0 0
  %239 = vmatpush1.bf16.msra.mxu0 0
  %240 = vmatprep.subr.bf16.mxu0 0
  %241 = vmatpush1.bf16.msra.mxu0 0
  %242 = vmatprep.subr.bf16.mxu0 0
  %243 = vmatpush1.bf16.msra.mxu0 0
  %244 = vmatprep.subr.bf16.mxu0 0
  %245 = vmatpush1.bf16.msra.mxu0 0
  %246 = vmatprep.subr.bf16.mxu0 0
  %247 = vmatpush1.bf16.msra.mxu0 0
  %248 = vmatprep.subr.bf16.mxu0 0
  %249 = vmatpush1.bf16.msra.mxu0 0
  %250 = vmatprep.subr.bf16.mxu0 0
  %251 = vmatpush1.bf16.msra.mxu0 0
  %252 = vmatprep.subr.bf16.mxu0 0
  %253 = vmatpush1.bf16.msra.mxu0 0
  %254 = vmatprep.subr.bf16.mxu0 0
  %255 = vmatpush1.bf16.msra.mxu0 0
  %256 = vmatprep.subr.bf16.mxu0 0
  %257 = vmatpush1.bf16.msra.mxu0 0
  %258 = vmatprep.subr.bf16.mxu0 0
  %259 = vmatpush1.bf16.msra.mxu0 0
  %260 = vmatprep.subr.bf16.mxu0 0
  %261 = vmatpush1.bf16.msra.mxu0 0
  %262 = vmatprep.subr.bf16.mxu0 0
  %263 = vmatpush1.bf16.msra.mxu0 0
  %264 = vmatprep.subr.bf16.mxu0 0
  %265 = vmatpush1.bf16.msra.mxu0 0
  %266 = vmatprep.subr.bf16.mxu0 0
  %267 = vmatpush1.bf16.msra.mxu0 0
  %268 = vmatprep.mubr.bf16.mxu0 0
  %269 = vmatmul.mubr.bf16.gmra.mrb[0].mxu0 %v228
  %v270 = vpop.f32.mrb[0].mxu0
  %v271 = vadd.f32 %v184, %v270
  %v272 = vpop.f32.mrb[0].mxu0
  %v273 = vadd.f32 %v184, %v272
  %v274 = vpop.f32.mrb[0].mxu0
  %v275 = vadd.f32 %v189, %v274
  %v276 = vpop.f32.mrb[0].mxu0
  %v277 = vadd.f32 %v189, %v276
  %278 = vmatprep.mubr.bf16.mxu0 0
  %279 = vmatmul.mubr.bf16.gmra.mrb[0].mxu0 %v231
  %v280 = vpop.f32.mrb[0].mxu0
  %v281 = vadd.f32 %v194, %v280
  %v282 = vpop.f32.mrb[0].mxu0
  %v283 = vadd.f32 %v194, %v282
  %v284 = vpop.f32.mrb[0].mxu0
  %v285 = vadd.f32 %v199, %v284
  %v286 = vpop.f32.mrb[0].mxu0
  %v287 = vadd.f32 %v199, %v286
  %288 = vmatprep.mubr.bf16.mxu0 0
  %289 = vmatmul.mubr.bf16.gmra.mrb[0].mxu0 %v234
  %v290 = vpop.f32.mrb[0].mxu0
  %v291 = vadd.f32 %v204, %v290
  %v292 = vpop.f32.mrb[0].mxu0
  %v293 = vadd.f32 %v204, %v292
  %v294 = vpop.f32.mrb[0].mxu0
  %v295 = vadd.f32 %v209, %v294
  %v296 = vpop.f32.mrb[0].mxu0
  %v297 = vadd.f32 %v209, %v296
  %298 = vdwg.mxu0
  %299 = vmatprep.subr.bf16.mxu0 0
  %300 = vmatpush1.bf16.msra.mxu0 %v174
  %301 = vmatprep.subr.bf16.mxu0 0
  %302 = vmatpush1.bf16.msra.mxu0 0
  %303 = vmatprep.subr.bf16.mxu0 0
  %304 = vmatpush1.bf16.msra.mxu0 0
  %305 = vmatprep.subr.bf16.mxu0 0
  %306 = vmatpush1.bf16.msra.mxu0 0
  %307 = vmatprep.subr.bf16.mxu0 0
  %308 = vmatpush1.bf16.msra.mxu0 0
  %309 = vmatprep.subr.bf16.mxu0 0
  %310 = vmatpush1.bf16.msra.mxu0 0
  %311 = vmatprep.subr.bf16.mxu0 0
  %312 = vmatpush1.bf16.msra.mxu0 0
  %313 = vmatprep.subr.bf16.mxu0 0
  %314 = vmatpush1.bf16.msra.mxu0 0
  %315 = vmatprep.subr.bf16.mxu0 0
  %316 = vmatpush1.bf16.msra.mxu0 0
  %317 = vmatprep.subr.bf16.mxu0 0
  %318 = vmatpush1.bf16.msra.mxu0 0
  %319 = vmatprep.subr.bf16.mxu0 0
  %320 = vmatpush1.bf16.msra.mxu0 0
  %321 = vmatprep.subr.bf16.mxu0 0
  %322 = vmatpush1.bf16.msra.mxu0 0
  %323 = vmatprep.subr.bf16.mxu0 0
  %324 = vmatpush1.bf16.msra.mxu0 0
  %325 = vmatprep.subr.bf16.mxu0 0
  %326 = vmatpush1.bf16.msra.mxu0 0
  %327 = vmatprep.subr.bf16.mxu0 0
  %328 = vmatpush1.bf16.msra.mxu0 0
  %329 = vmatprep.subr.bf16.mxu0 0
  %330 = vmatpush1.bf16.msra.mxu0 0
  %331 = vmatprep.mubr.bf16.mxu0 0
  %332 = vmatmul.mubr.bf16.gmra.mrb[0].mxu0 %v228
  %v333 = vpop.f32.mrb[0].mxu0
  %v334 = vadd.f32 %v184, %v333
  %v335 = vpop.f32.mrb[0].mxu0
  %v336 = vpop.f32.mrb[0].mxu0
  %v337 = vadd.f32 %v189, %v336
  %v338 = vpop.f32.mrb[0].mxu0
  %339 = vmatprep.mubr.bf16.mxu0 0
  %340 = vmatmul.mubr.bf16.gmra.mrb[0].mxu0 %v231
  %v341 = vpop.f32.mrb[0].mxu0
  %v342 = vadd.f32 %v194, %v341
  %v343 = vpop.f32.mrb[0].mxu0
  %v344 = vpop.f32.mrb[0].mxu0
  %v345 = vadd.f32 %v199, %v344
  %v346 = vpop.f32.mrb[0].mxu0
  %347 = vmatprep.mubr.bf16.mxu0 0
  %348 = vmatmul.mubr.bf16.gmra.mrb[0].mxu0 %v234
  %v349 = vpop.f32.mrb[0].mxu0
  %v350 = vadd.f32 %v204, %v349
  %v351 = vpop.f32.mrb[0].mxu0
  %v352 = vpop.f32.mrb[0].mxu0
  %v353 = vadd.f32 %v209, %v352
  %v354 = vpop.f32.mrb[0].mxu0
  %355 = vdwg.mxu0
  %v356 = vmul.f32 %v271, 0.25
  %v357 = vmul.f32 %v275, 0.25
  %v358 = vmul.f32 %v273, 0.25
  %v359 = vmul.f32 %v277, 0.25
  %v360 = vmul.f32 %v334, 0.25
  %v361 = vmul.f32 %v337, 0.25
  %v362 = vmul.f32 %v356, %v281
  %v363 = vmul.f32 %v357, %v285
  %v364 = vadd.f32 %v362, %v363
  %v365 = vrot.slane %v364, 4
  %v366 = vadd.f32 %v364, %v365
  %v367 = vrot.slane %v366, 2
  %v368 = vadd.f32 %v366, %v367
  %v369 = vrot.slane %v368, 1
  %v370 = vadd.f32 %v368, %v369
  %v371 = vmul.f32 %v356, %v283
  %v372 = vmul.f32 %v357, %v287
  %v373 = vadd.f32 %v371, %v372
  %v374 = vrot.slane %v373, 4
  %v375 = vadd.f32 %v373, %v374
  %v376 = vrot.slane %v375, 2
  %v377 = vadd.f32 %v375, %v376
  %v378 = vrot.slane %v377, 1
  %v379 = vadd.f32 %v377, %v378
  %v380 = vmul.f32 %v356, %v342
  %v381 = vmul.f32 %v357, %v345
  %v382 = vadd.f32 %v380, %v381
  %v383 = vrot.slane %v382, 4
  %v384 = vadd.f32 %v382, %v383
  %v385 = vrot.slane %v384, 2
  %v386 = vadd.f32 %v384, %v385
  %v387 = vrot.slane %v386, 1
  %v388 = vadd.f32 %v386, %v387
  %v389 = vmax.f32 %v370, %v379
  %v390 = vmax.f32 %v389, %v388
  %v391 = vsub.f32 %v370, %v390
  %v392 = vmul.f32 %v391, 1.442695
  %v393 = vpow.pop %v392
  %v394 = vsub.f32 %v379, %v390
  %v395 = vmul.f32 %v394, 1.442695
  %v396 = vpow.pop %v395
  %v397 = vsub.f32 %v388, %v390
  %v398 = vmul.f32 %v397, 1.442695
  %v399 = vpow.pop %v398
  %v400 = vadd.f32 %v393, %v396
  %v401 = vadd.f32 %v400, %v399
  %v402 = vrcp.pop %v401
  %v403 = vmul.f32 %v393, %v402
  %v404 = vmul.f32 %v403, %v291
  %v405 = vmul.f32 %v403, %v295
  %v406 = vmul.f32 %v396, %v402
  %v407 = vmul.f32 %v406, %v293
  %v408 = vmul.f32 %v406, %v297
  %v409 = vadd.f32 %v404, %v407
  %v410 = vadd.f32 %v405, %v408
  %v411 = vmul.f32 %v399, %v402
  %v412 = vmul.f32 %v411, %v350
  %v413 = vmul.f32 %v411, %v353
  %v414 = vadd.f32 %v409, %v412
  %v415 = vadd.f32 %v410, %v413
  %v416 = vmul.f32 %v358, %v281
  %v417 = vmul.f32 %v359, %v285
  %v418 = vadd.f32 %v416, %v417
  %v419 = vrot.slane %v418, 4
  %v420 = vadd.f32 %v418, %v419
  %v421 = vrot.slane %v420, 2
  %v422 = vadd.f32 %v420, %v421
  %v423 = vrot.slane %v422, 1
  %v424 = vadd.f32 %v422, %v423
  %v425 = vmul.f32 %v358, %v283
  %v426 = vmul.f32 %v359, %v287
  %v427 = vadd.f32 %v425, %v426
  %v428 = vrot.slane %v427, 4
  %v429 = vadd.f32 %v427, %v428
  %v430 = vrot.slane %v429, 2
  %v431 = vadd.f32 %v429, %v430
  %v432 = vrot.slane %v431, 1
  %v433 = vadd.f32 %v431, %v432
  %v434 = vmul.f32 %v358, %v342
  %v435 = vmul.f32 %v359, %v345
  %v436 = vadd.f32 %v434, %v435
  %v437 = vrot.slane %v436, 4
  %v438 = vadd.f32 %v436, %v437
  %v439 = vrot.slane %v438, 2
  %v440 = vadd.f32 %v438, %v439
  %v441 = vrot.slane %v440, 1
  %v442 = vadd.f32 %v440, %v441
  %v443 = vmax.f32 %v424, %v433
  %v444 = vmax.f32 %v443, %v442
  %v445 = vsub.f32 %v424, %v444
  %v446 = vmul.f32 %v445, 1.442695
  %v447 = vpow.pop %v446
  %v448 = vsub.f32 %v433, %v444
  %v449 = vmul.f32 %v448, 1.442695
  %v450 = vpow.pop %v449
  %v451 = vsub.f32 %v442, %v444
  %v452 = vmul.f32 %v451, 1.442695
  %v453 = vpow.pop %v452
  %v454 = vadd.f32 %v447, %v450
  %v455 = vadd.f32 %v454, %v453
  %v456 = vrcp.pop %v455
  %v457 = vmul.f32 %v447, %v456
  %v458 = vmul.f32 %v457, %v291
  %v459 = vmul.f32 %v457, %v295
  %v460 = vmul.f32 %v450, %v456
  %v461 = vmul.f32 %v460, %v293
  %v462 = vmul.f32 %v460, %v297
  %v463 = vadd.f32 %v458, %v461
  %v464 = vadd.f32 %v459, %v462
  %v465 = vmul.f32 %v453, %v456
  %v466 = vmul.f32 %v465, %v350
  %v467 = vmul.f32 %v465, %v353
  %v468 = vadd.f32 %v463, %v466
  %v469 = vadd.f32 %v464, %v467
  %v470 = vmul.f32 %v360, %v281
  %v471 = vmul.f32 %v361, %v285
  %v472 = vadd.f32 %v470, %v471
  %v473 = vrot.slane %v472, 4
  %v474 = vadd.f32 %v472, %v473
  %v475 = vrot.slane %v474, 2
  %v476 = vadd.f32 %v474, %v475
  %v477 = vrot.slane %v476, 1
  %v478 = vadd.f32 %v476, %v477
  %v479 = vmul.f32 %v360, %v283
  %v480 = vmul.f32 %v361, %v287
  %v481 = vadd.f32 %v479, %v480
  %v482 = vrot.slane %v481, 4
  %v483 = vadd.f32 %v481, %v482
  %v484 = vrot.slane %v483, 2
  %v485 = vadd.f32 %v483, %v484
  %v486 = vrot.slane %v485, 1
  %v487 = vadd.f32 %v485, %v486
  %v488 = vmul.f32 %v360, %v342
  %v489 = vmul.f32 %v361, %v345
  %v490 = vadd.f32 %v488, %v489
  %v491 = vrot.slane %v490, 4
  %v492 = vadd.f32 %v490, %v491
  %v493 = vrot.slane %v492, 2
  %v494 = vadd.f32 %v492, %v493
  %v495 = vrot.slane %v494, 1
  %v496 = vadd.f32 %v494, %v495
  %v497 = vmax.f32 %v478, %v487
  %v498 = vmax.f32 %v497, %v496
  %v499 = vsub.f32 %v478, %v498
  %v500 = vmul.f32 %v499, 1.442695
  %v501 = vpow.pop %v500
  %v502 = vsub.f32 %v487, %v498
  %v503 = vmul.f32 %v502, 1.442695
  %v504 = vpow.pop %v503
  %v505 = vsub.f32 %v496, %v498
  %v506 = vmul.f32 %v505, 1.442695
  %v507 = vpow.pop %v506
  %v508 = vadd.f32 %v501, %v504
  %v509 = vadd.f32 %v508, %v507
  %v510 = vrcp.pop %v509
  %v511 = vmul.f32 %v501, %v510
  %v512 = vmul.f32 %v511, %v291
  %v513 = vmul.f32 %v511, %v295
  %v514 = vmul.f32 %v504, %v510
  %v515 = vmul.f32 %v514, %v293
  %v516 = vmul.f32 %v514, %v297
  %v517 = vadd.f32 %v512, %v515
  %v518 = vadd.f32 %v513, %v516
  %v519 = vmul.f32 %v507, %v510
  %v520 = vmul.f32 %v519, %v350
  %v521 = vmul.f32 %v519, %v353
  %v522 = vadd.f32 %v517, %v520
  %v523 = vadd.f32 %v518, %v521
  %v524 = vld [vmem:[%s5] sm:$0xf]
  %v525 = vld [vmem:[%s5 + $0x4] sm:$0xf]
  %v526 = vpack.c.bf16 %v415, %v414
  %v527 = vpack.c.bf16 %v469, %v468
  %v528 = vpack.c.bf16 %v523, %v522
  %v529 = vld [vmem:[%s6] sm:$0xff]
  %v530 = vld [vmem:[%s6 + $0x8] sm:$0xff]
  %532 = vset.pattern.permute.xlu0 0
  %533 = vperm.xlu0 %532, %v529
  %v534 = vpop.permute.xlu0 %533
  %537 = vset.pattern.permute.xlu0 0
  %538 = vperm.xlu0 %537, %v530
  %v539 = vpop.permute.xlu0 %538
  %v543 = vunpack.c.l.b16 %v524
  %v544 = vunpack.c.l.b16 %v525
  %v545 = vpack.c.b16 %v544, %v543
  %v547 = vsel %vm226, %v545, 0
  %549 = vmatprep.subr.bf16.mxu0 %v527
  %550 = vmatpush1.bf16.msra.mxu0 %v526
  %551 = vmatprep.subr.bf16.mxu0 0
  %552 = vmatpush1.bf16.msra.mxu0 0
  %553 = vmatprep.subr.bf16.mxu0 0
  %554 = vmatpush1.bf16.msra.mxu0 0
  %555 = vmatprep.subr.bf16.mxu0 0
  %556 = vmatpush1.bf16.msra.mxu0 0
  %557 = vmatprep.subr.bf16.mxu0 0
  %558 = vmatpush1.bf16.msra.mxu0 0
  %559 = vmatprep.subr.bf16.mxu0 0
  %560 = vmatpush1.bf16.msra.mxu0 0
  %561 = vmatprep.subr.bf16.mxu0 0
  %562 = vmatpush1.bf16.msra.mxu0 0
  %563 = vmatprep.subr.bf16.mxu0 0
  %564 = vmatpush1.bf16.msra.mxu0 0
  %565 = vmatprep.subr.bf16.mxu0 0
  %566 = vmatpush1.bf16.msra.mxu0 0
  %567 = vmatprep.subr.bf16.mxu0 0
  %568 = vmatpush1.bf16.msra.mxu0 0
  %569 = vmatprep.subr.bf16.mxu0 0
  %570 = vmatpush1.bf16.msra.mxu0 0
  %571 = vmatprep.subr.bf16.mxu0 0
  %572 = vmatpush1.bf16.msra.mxu0 0
  %573 = vmatprep.subr.bf16.mxu0 0
  %574 = vmatpush1.bf16.msra.mxu0 0
  %575 = vmatprep.subr.bf16.mxu0 0
  %576 = vmatpush1.bf16.msra.mxu0 0
  %577 = vmatprep.subr.bf16.mxu0 0
  %578 = vmatpush1.bf16.msra.mxu0 0
  %579 = vmatprep.subr.bf16.mxu0 0
  %580 = vmatpush1.bf16.msra.mxu0 0
  %581 = vmatprep.mubr.bf16.mxu0 0
  %582 = vmatmul.mubr.bf16.gmra.mrb[0].mxu0 %v547
  %v583 = vpop.f32.mrb[0].mxu0
  %v584 = vadd.f32 %v534, %v583
  %v585 = vpop.f32.mrb[0].mxu0
  %v586 = vadd.f32 %v534, %v585
  %v587 = vpop.f32.mrb[0].mxu0
  %v588 = vadd.f32 %v539, %v587
  %v589 = vpop.f32.mrb[0].mxu0
  %v590 = vadd.f32 %v539, %v589
  %591 = vdwg.mxu0
  %592 = vmatprep.subr.bf16.mxu0 0
  %593 = vmatpush1.bf16.msra.mxu0 %v528
  %594 = vmatprep.subr.bf16.mxu0 0
  %595 = vmatpush1.bf16.msra.mxu0 0
  %596 = vmatprep.subr.bf16.mxu0 0
  %597 = vmatpush1.bf16.msra.mxu0 0
  %598 = vmatprep.subr.bf16.mxu0 0
  %599 = vmatpush1.bf16.msra.mxu0 0
  %600 = vmatprep.subr.bf16.mxu0 0
  %601 = vmatpush1.bf16.msra.mxu0 0
  %602 = vmatprep.subr.bf16.mxu0 0
  %603 = vmatpush1.bf16.msra.mxu0 0
  %604 = vmatprep.subr.bf16.mxu0 0
  %605 = vmatpush1.bf16.msra.mxu0 0
  %606 = vmatprep.subr.bf16.mxu0 0
  %607 = vmatpush1.bf16.msra.mxu0 0
  %608 = vmatprep.subr.bf16.mxu0 0
  %609 = vmatpush1.bf16.msra.mxu0 0
  %610 = vmatprep.subr.bf16.mxu0 0
  %611 = vmatpush1.bf16.msra.mxu0 0
  %612 = vmatprep.subr.bf16.mxu0 0
  %613 = vmatpush1.bf16.msra.mxu0 0
  %614 = vmatprep.subr.bf16.mxu0 0
  %615 = vmatpush1.bf16.msra.mxu0 0
  %616 = vmatprep.subr.bf16.mxu0 0
  %617 = vmatpush1.bf16.msra.mxu0 0
  %618 = vmatprep.subr.bf16.mxu0 0
  %619 = vmatpush1.bf16.msra.mxu0 0
  %620 = vmatprep.subr.bf16.mxu0 0
  %621 = vmatpush1.bf16.msra.mxu0 0
  %622 = vmatprep.subr.bf16.mxu0 0
  %623 = vmatpush1.bf16.msra.mxu0 0
  %624 = vmatprep.mubr.bf16.mxu0 0
  %625 = vmatmul.mubr.bf16.gmra.mrb[0].mxu0 %v547
  %v626 = vpop.f32.mrb[0].mxu0
  %v627 = vadd.f32 %v534, %v626
  %v628 = vpop.f32.mrb[0].mxu0
  %v629 = vpop.f32.mrb[0].mxu0
  %v630 = vadd.f32 %v539, %v629
  %v631 = vpop.f32.mrb[0].mxu0
  %632 = vdwg.mxu0
  %v633 = vadd.f32 %v154, %v584
  %v634 = vadd.f32 %v155, %v586
  %v635 = vadd.f32 %v156, %v627
  %v636 = vadd.f32 %v157, %v588
  %v637 = vadd.f32 %v158, %v590
  %v638 = vadd.f32 %v159, %v630
  %639 = vst [vmem:[%s8] sm:$0xff] %v633
  %640 = vst [vmem:[%s8 + $0x8] sm:$0xff] %v634
  %641 = vst [vmem:[%s8 + $0x10] sm:$0xff] %v635
  %642 = vst [vmem:[%s8 + $0x18] sm:$0xff] %v636
  %643 = vst [vmem:[%s8 + $0x20] sm:$0xff] %v637
  %644 = vst [vmem:[%s8 + $0x28] sm:$0xff] %v638
  // Predicated region
  $region30: #{tst_forward.6} parent=0 // pred_check
    _
  $region31: #{tst_forward.6} parent=0 // pred_check_branch
    %646 = sbr.rel (0) target = $region33
  $region32: #{tst_forward.6} parent=0 // pred_region
    _
  $region33: #{tst_forward.6} parent=0 // pred_fallthru
    _
  // Predicated region
  $region34: #{tst_forward.6} parent=0 // pred_check
    _
  $region35: #{tst_forward.6} parent=0 // pred_check_branch
    %648 = sbr.rel (0) target = $region37
  $region36: #{tst_forward.6} parent=0 // pred_region
    _
  $region37: #{tst_forward.6} parent=0 // pred_fallthru
    _
  // Predicated region
  $region38: #{tst_forward.6} parent=0 // pred_check
    _
  $region39: #{tst_forward.6} parent=0 // pred_check_branch
    %650 = sbr.rel (0) target = $region41
  $region40: #{tst_forward.6} parent=0 // pred_region
    _
  $region41: #{tst_forward.6} parent=0 // pred_fallthru
    _
  // Predicated region
  $region42: #{tst_forward.6} parent=0 // pred_check
    _
  $region43: #{tst_forward.6} parent=0 // pred_check_branch
    %652 = sbr.rel (0) target = $region45
  $region44: #{tst_forward.6} parent=0 // pred_region
    _
  $region45: #{tst_forward.6} parent=0 // pred_fallthru
    _

// kernel: tst_forward.7
$region0: #{tst_forward.7}
  #allocation0 [shape = 'u32[]', space=smem, size = 0x4, offset = 0x4, fixed_abs, tag = 'smem constant byte address 0x4 - core index']
  #allocation1 [shape = 'u32[144,128]{1,0:T(1,128)}', space=vmem, size = 0x12000, scoped, tag = 'internal scratch']
  %s0 = inlined_call_operand.vmem [shape: f32[64,96], index: 0, kind: input, shape index: {}]
  %s1 = inlined_call_operand.vmem [shape: bf16[32,64], index: 1, kind: input, shape index: {}]
  %s2 = inlined_call_operand.vmem [shape: f32[32,1], index: 2, kind: input, shape index: {}]
  %s3 = inlined_call_operand.vmem [shape: f32[32,96], index: 3, kind: output, shape index: {}]
  %s4 = sld [smem:[#allocation0]]
  $region22: #{tst_forward.7} parent=0
    _
  %s6 = ssub.s32 1, %s4
  %s7 = scalar_select 0, %s6, %s4
  // Predicated region
  $region2: #{tst_forward.7} parent=0 // pred_check
    _
  $region3: #{tst_forward.7} parent=0 // pred_check_branch
    %9 = sbr.rel (0) target = $region5
  $region4: #{tst_forward.7} parent=0 // pred_region
    _
  $region5: #{tst_forward.7} parent=0 // pred_fallthru
    _
  // Predicated region
  $region6: #{tst_forward.7} parent=0 // pred_check
    _
  $region7: #{tst_forward.7} parent=0 // pred_check_branch
    %11 = sbr.rel (0) target = $region9
  $region8: #{tst_forward.7} parent=0 // pred_region
    _
  $region9: #{tst_forward.7} parent=0 // pred_fallthru
    _
  // Predicated region
  $region10: #{tst_forward.7} parent=0 // pred_check
    _
  $region11: #{tst_forward.7} parent=0 // pred_check_branch
    %13 = sbr.rel (0) target = $region13
  $region12: #{tst_forward.7} parent=0 // pred_region
    _
  $region13: #{tst_forward.7} parent=0 // pred_fallthru
    _
  %v15 = vld [vmem:[%s1] sm:$0xf]
  %v16 = vld [vmem:[%s1 + $0x4] sm:$0xf]
  %v17 = vld [vmem:[%s1 + $0x8] sm:$0xf]
  %v18 = vld [vmem:[%s1 + $0xc] sm:$0xf]
  %v19 = vld [vmem:[%s0] sm:$0xff]
  %v20 = vld [vmem:[%s0 + $0x8] sm:$0xff]
  %v21 = vld [vmem:[%s0 + $0x10] sm:$0xff]
  %v22 = vld [vmem:[%s0 + $0x18] sm:$0xff]
  %v23 = vld [vmem:[%s0 + $0x20] sm:$0xff]
  %v24 = vld [vmem:[%s0 + $0x28] sm:$0xff]
  %v25 = vld [vmem:[%s0 + $0x30] sm:$0xff]
  %v26 = vld [vmem:[%s0 + $0x38] sm:$0xff]
  %v27 = vpack.c.bf16 %v20, %v19
  %v28 = vpack.c.bf16 %v22, %v21
  %v29 = vpack.c.bf16 %v24, %v23
  %v30 = vpack.c.bf16 %v26, %v25
  %v31 = vld [vmem:[%s2] sm:$0xff]
  %v32 = vld [vmem:[%s2 + $0x8] sm:$0xff]
  %v33 = vld [vmem:[%s2 + $0x10] sm:$0xff]
  %v34 = vld [vmem:[%s2 + $0x18] sm:$0xff]
  %36 = vset.pattern.permute.xlu0 0
  %37 = vperm.xlu0 %36, %v31
  %v38 = vpop.permute.xlu0 %37
  %41 = vset.pattern.permute.xlu0 0
  %42 = vperm.xlu0 %41, %v32
  %v43 = vpop.permute.xlu0 %42
  %46 = vset.pattern.permute.xlu0 0
  %47 = vperm.xlu0 %46, %v33
  %v48 = vpop.permute.xlu0 %47
  %51 = vset.pattern.permute.xlu0 0
  %52 = vperm.xlu0 %51, %v34
  %v53 = vpop.permute.xlu0 %52
  %v59 = vunpack.c.l.b16 %v15
  %v60 = vunpack.c.l.b16 %v16
  %v61 = vunpack.c.l.b16 %v17
  %v62 = vunpack.c.l.b16 %v18
  %v63 = vpack.c.b16 %v60, %v59
  %v64 = vpack.c.b16 %v62, %v61
  %vm65 = vcmask 523264
  %v67 = vsel %vm65, %v63, 0
  %v70 = vsel %vm65, %v64, 0
  %72 = vmatprep.subr.bf16.mxu0 0
  %73 = vmatpush1.bf16.msra.mxu0 %v27
  %74 = vmatprep.subr.bf16.mxu0 0
  %75 = vmatpush1.bf16.msra.mxu0 %v28
  %76 = vmatprep.subr.bf16.mxu0 0
  %77 = vmatpush1.bf16.msra.mxu0 %v29
  %78 = vmatprep.subr.bf16.mxu0 0
  %79 = vmatpush1.bf16.msra.mxu0 %v30
  %80 = vmatprep.subr.bf16.mxu0 0
  %81 = vmatpush1.bf16.msra.mxu0 0
  %82 = vmatprep.subr.bf16.mxu0 0
  %83 = vmatpush1.bf16.msra.mxu0 0
  %84 = vmatprep.subr.bf16.mxu0 0
  %85 = vmatpush1.bf16.msra.mxu0 0
  %86 = vmatprep.subr.bf16.mxu0 0
  %87 = vmatpush1.bf16.msra.mxu0 0
  %88 = vmatprep.subr.bf16.mxu0 0
  %89 = vmatpush1.bf16.msra.mxu0 0
  %90 = vmatprep.subr.bf16.mxu0 0
  %91 = vmatpush1.bf16.msra.mxu0 0
  %92 = vmatprep.subr.bf16.mxu0 0
  %93 = vmatpush1.bf16.msra.mxu0 0
  %94 = vmatprep.subr.bf16.mxu0 0
  %95 = vmatpush1.bf16.msra.mxu0 0
  %96 = vmatprep.subr.bf16.mxu0 0
  %97 = vmatpush1.bf16.msra.mxu0 0
  %98 = vmatprep.subr.bf16.mxu0 0
  %99 = vmatpush1.bf16.msra.mxu0 0
  %100 = vmatprep.subr.bf16.mxu0 0
  %101 = vmatpush1.bf16.msra.mxu0 0
  %102 = vmatprep.subr.bf16.mxu0 0
  %103 = vmatpush1.bf16.msra.mxu0 0
  %104 = vmatprep.mubr.bf16.mxu0 0
  %105 = vmatmul.mubr.bf16.gmra.mrb[0].mxu0 %v67
  %v106 = vpop.f32.mrb[0].mxu0
  %v107 = vadd.f32 %v38, %v106
  %v108 = vpop.f32.mrb[0].mxu0
  %v109 = vpop.f32.mrb[0].mxu0
  %v110 = vadd.f32 %v43, %v109
  %v111 = vpop.f32.mrb[0].mxu0
  %112 = vmatprep.mubr.bf16.mxu0 0
  %113 = vmatmul.mubr.bf16.gmra.mrb[0].mxu0 %v70
  %v114 = vpop.f32.mrb[0].mxu0
  %v115 = vadd.f32 %v48, %v114
  %v116 = vpop.f32.mrb[0].mxu0
  %v117 = vpop.f32.mrb[0].mxu0
  %v118 = vadd.f32 %v53, %v117
  %v119 = vpop.f32.mrb[0].mxu0
  %120 = vdwg.mxu0
  %v121 = vmax.f32 %v107, 0.0
  %v122 = vmax.f32 %v110, 0.0
  %v123 = vmax.f32 %v115, 0.0
  %v124 = vmax.f32 %v118, 0.0
  %vm125 = vcmask 785408
  %126 = vst.msk [vmem:[%s3] sm:$0xff] %vm125, %v121
  %127 = vst.msk [vmem:[%s3 + $0x8] sm:$0xff] %vm125, %v122
  %128 = vst.msk [vmem:[%s3 + $0x10] sm:$0xff] %vm125, %v123
  %129 = vst.msk [vmem:[%s3 + $0x18] sm:$0xff] %vm125, %v124
  // Predicated region
  $region14: #{tst_forward.7} parent=0 // pred_check
    _
  $region15: #{tst_forward.7} parent=0 // pred_check_branch
    %131 = sbr.rel (0) target = $region17
  $region16: #{tst_forward.7} parent=0 // pred_region
    _
  $region17: #{tst_forward.7} parent=0 // pred_fallthru
    _
  // Predicated region
  $region18: #{tst_forward.7} parent=0 // pred_check
    _
  $region19: #{tst_forward.7} parent=0 // pred_check_branch
    %133 = sbr.rel (0) target = $region21
  $region20: #{tst_forward.7} parent=0 // pred_region
    _
  $region21: #{tst_forward.7} parent=0 // pred_fallthru
    _

// kernel: tst_forward.8
$region0: #{tst_forward.8}
  #allocation0 [shape = 'u32[]', space=smem, size = 0x4, offset = 0x4, fixed_abs, tag = 'smem constant byte address 0x4 - core index']
  #allocation1 [shape = 'u32[144,128]{1,0:T(1,128)}', space=vmem, size = 0x12000, scoped, tag = 'internal scratch']
  %s0 = inlined_call_operand.vmem [shape: f32[128,96], index: 0, kind: input, shape index: {}]
  %s1 = inlined_call_operand.vmem [shape: bf16[64,128], index: 1, kind: input, shape index: {}]
  %s2 = inlined_call_operand.vmem [shape: f32[64,1], index: 2, kind: input, shape index: {}]
  %s3 = inlined_call_operand.vmem [shape: f32[64,96], index: 3, kind: input, shape index: {}]
  %s4 = inlined_call_operand.vmem [shape: f32[64,96], index: 4, kind: output, shape index: {}]
  %s5 = sld [smem:[#allocation0]]
  $region26: #{tst_forward.8} parent=0
    _
  %s7 = ssub.s32 1, %s5
  %s8 = scalar_select 0, %s7, %s5
  // Predicated region
  $region2: #{tst_forward.8} parent=0 // pred_check
    _
  $region3: #{tst_forward.8} parent=0 // pred_check_branch
    %10 = sbr.rel (0) target = $region5
  $region4: #{tst_forward.8} parent=0 // pred_region
    _
  $region5: #{tst_forward.8} parent=0 // pred_fallthru
    _
  // Predicated region
  $region6: #{tst_forward.8} parent=0 // pred_check
    _
  $region7: #{tst_forward.8} parent=0 // pred_check_branch
    %12 = sbr.rel (0) target = $region9
  $region8: #{tst_forward.8} parent=0 // pred_region
    _
  $region9: #{tst_forward.8} parent=0 // pred_fallthru
    _
  // Predicated region
  $region10: #{tst_forward.8} parent=0 // pred_check
    _
  $region11: #{tst_forward.8} parent=0 // pred_check_branch
    %14 = sbr.rel (0) target = $region13
  $region12: #{tst_forward.8} parent=0 // pred_region
    _
  $region13: #{tst_forward.8} parent=0 // pred_fallthru
    _
  // Predicated region
  $region14: #{tst_forward.8} parent=0 // pred_check
    _
  $region15: #{tst_forward.8} parent=0 // pred_check_branch
    %16 = sbr.rel (0) target = $region17
  $region16: #{tst_forward.8} parent=0 // pred_region
    _
  $region17: #{tst_forward.8} parent=0 // pred_fallthru
    _
  %v18 = vld [vmem:[%s1] sm:$0xf]
  %v19 = vld [vmem:[%s1 + $0x4] sm:$0xf]
  %v20 = vld [vmem:[%s1 + $0x8] sm:$0xf]
  %v21 = vld [vmem:[%s1 + $0xc] sm:$0xf]
  %v22 = vld [vmem:[%s1 + $0x10] sm:$0xf]
  %v23 = vld [vmem:[%s1 + $0x14] sm:$0xf]
  %v24 = vld [vmem:[%s1 + $0x18] sm:$0xf]
  %v25 = vld [vmem:[%s1 + $0x1c] sm:$0xf]
  %v26 = vld [vmem:[%s0] sm:$0xff]
  %v27 = vld [vmem:[%s0 + $0x8] sm:$0xff]
  %v28 = vld [vmem:[%s0 + $0x10] sm:$0xff]
  %v29 = vld [vmem:[%s0 + $0x18] sm:$0xff]
  %v30 = vld [vmem:[%s0 + $0x20] sm:$0xff]
  %v31 = vld [vmem:[%s0 + $0x28] sm:$0xff]
  %v32 = vld [vmem:[%s0 + $0x30] sm:$0xff]
  %v33 = vld [vmem:[%s0 + $0x38] sm:$0xff]
  %v34 = vld [vmem:[%s0 + $0x40] sm:$0xff]
  %v35 = vld [vmem:[%s0 + $0x48] sm:$0xff]
  %v36 = vld [vmem:[%s0 + $0x50] sm:$0xff]
  %v37 = vld [vmem:[%s0 + $0x58] sm:$0xff]
  %v38 = vld [vmem:[%s0 + $0x60] sm:$0xff]
  %v39 = vld [vmem:[%s0 + $0x68] sm:$0xff]
  %v40 = vld [vmem:[%s0 + $0x70] sm:$0xff]
  %v41 = vld [vmem:[%s0 + $0x78] sm:$0xff]
  %v42 = vpack.c.bf16 %v27, %v26
  %v43 = vpack.c.bf16 %v29, %v28
  %v44 = vpack.c.bf16 %v31, %v30
  %v45 = vpack.c.bf16 %v33, %v32
  %v46 = vpack.c.bf16 %v35, %v34
  %v47 = vpack.c.bf16 %v37, %v36
  %v48 = vpack.c.bf16 %v39, %v38
  %v49 = vpack.c.bf16 %v41, %v40
  %v50 = vld [vmem:[%s2] sm:$0xff]
  %v51 = vld [vmem:[%s2 + $0x8] sm:$0xff]
  %v52 = vld [vmem:[%s2 + $0x10] sm:$0xff]
  %v53 = vld [vmem:[%s2 + $0x18] sm:$0xff]
  %v54 = vld [vmem:[%s2 + $0x20] sm:$0xff]
  %v55 = vld [vmem:[%s2 + $0x28] sm:$0xff]
  %v56 = vld [vmem:[%s2 + $0x30] sm:$0xff]
  %v57 = vld [vmem:[%s2 + $0x38] sm:$0xff]
  %59 = vset.pattern.permute.xlu0 0
  %60 = vperm.xlu0 %59, %v50
  %v61 = vpop.permute.xlu0 %60
  %64 = vset.pattern.permute.xlu0 0
  %65 = vperm.xlu0 %64, %v51
  %v66 = vpop.permute.xlu0 %65
  %69 = vset.pattern.permute.xlu0 0
  %70 = vperm.xlu0 %69, %v52
  %v71 = vpop.permute.xlu0 %70
  %74 = vset.pattern.permute.xlu0 0
  %75 = vperm.xlu0 %74, %v53
  %v76 = vpop.permute.xlu0 %75
  %79 = vset.pattern.permute.xlu0 0
  %80 = vperm.xlu0 %79, %v54
  %v81 = vpop.permute.xlu0 %80
  %84 = vset.pattern.permute.xlu0 0
  %85 = vperm.xlu0 %84, %v55
  %v86 = vpop.permute.xlu0 %85
  %89 = vset.pattern.permute.xlu0 0
  %90 = vperm.xlu0 %89, %v56
  %v91 = vpop.permute.xlu0 %90
  %94 = vset.pattern.permute.xlu0 0
  %95 = vperm.xlu0 %94, %v57
  %v96 = vpop.permute.xlu0 %95
  %v106 = vunpack.c.l.b16 %v18
  %v107 = vunpack.c.l.b16 %v19
  %v108 = vunpack.c.l.b16 %v20
  %v109 = vunpack.c.l.b16 %v21
  %v110 = vunpack.c.l.b16 %v22
  %v111 = vunpack.c.l.b16 %v23
  %v112 = vunpack.c.l.b16 %v24
  %v113 = vunpack.c.l.b16 %v25
  %v114 = vpack.c.b16 %v107, %v106
  %v115 = vpack.c.b16 %v109, %v108
  %v116 = vpack.c.b16 %v111, %v110
  %v117 = vpack.c.b16 %v113, %v112
  %122 = vmatprep.subr.bf16.mxu0 0
  %123 = vmatpush1.bf16.msra.mxu0 %v42
  %124 = vmatprep.subr.bf16.mxu0 0
  %125 = vmatpush1.bf16.msra.mxu0 %v43
  %126 = vmatprep.subr.bf16.mxu0 0
  %127 = vmatpush1.bf16.msra.mxu0 %v44
  %128 = vmatprep.subr.bf16.mxu0 0
  %129 = vmatpush1.bf16.msra.mxu0 %v45
  %130 = vmatprep.subr.bf16.mxu0 0
  %131 = vmatpush1.bf16.msra.mxu0 %v46
  %132 = vmatprep.subr.bf16.mxu0 0
  %133 = vmatpush1.bf16.msra.mxu0 %v47
  %134 = vmatprep.subr.bf16.mxu0 0
  %135 = vmatpush1.bf16.msra.mxu0 %v48
  %136 = vmatprep.subr.bf16.mxu0 0
  %137 = vmatpush1.bf16.msra.mxu0 %v49
  %138 = vmatprep.subr.bf16.mxu0 0
  %139 = vmatpush1.bf16.msra.mxu0 0
  %140 = vmatprep.subr.bf16.mxu0 0
  %141 = vmatpush1.bf16.msra.mxu0 0
  %142 = vmatprep.subr.bf16.mxu0 0
  %143 = vmatpush1.bf16.msra.mxu0 0
  %144 = vmatprep.subr.bf16.mxu0 0
  %145 = vmatpush1.bf16.msra.mxu0 0
  %146 = vmatprep.subr.bf16.mxu0 0
  %147 = vmatpush1.bf16.msra.mxu0 0
  %148 = vmatprep.subr.bf16.mxu0 0
  %149 = vmatpush1.bf16.msra.mxu0 0
  %150 = vmatprep.subr.bf16.mxu0 0
  %151 = vmatpush1.bf16.msra.mxu0 0
  %152 = vmatprep.subr.bf16.mxu0 0
  %153 = vmatpush1.bf16.msra.mxu0 0
  %154 = vmatprep.mubr.bf16.mxu0 0
  %155 = vmatmul.mubr.bf16.gmra.mrb[0].mxu0 %v114
  %v156 = vpop.f32.mrb[0].mxu0
  %v157 = vadd.f32 %v61, %v156
  %v158 = vpop.f32.mrb[0].mxu0
  %v159 = vpop.f32.mrb[0].mxu0
  %v160 = vadd.f32 %v66, %v159
  %v161 = vpop.f32.mrb[0].mxu0
  %162 = vmatprep.mubr.bf16.mxu0 0
  %163 = vmatmul.mubr.bf16.gmra.mrb[0].mxu0 %v115
  %v164 = vpop.f32.mrb[0].mxu0
  %v165 = vadd.f32 %v71, %v164
  %v166 = vpop.f32.mrb[0].mxu0
  %v167 = vpop.f32.mrb[0].mxu0
  %v168 = vadd.f32 %v76, %v167
  %v169 = vpop.f32.mrb[0].mxu0
  %170 = vmatprep.mubr.bf16.mxu0 0
  %171 = vmatmul.mubr.bf16.gmra.mrb[0].mxu0 %v116
  %v172 = vpop.f32.mrb[0].mxu0
  %v173 = vadd.f32 %v81, %v172
  %v174 = vpop.f32.mrb[0].mxu0
  %v175 = vpop.f32.mrb[0].mxu0
  %v176 = vadd.f32 %v86, %v175
  %v177 = vpop.f32.mrb[0].mxu0
  %178 = vmatprep.mubr.bf16.mxu0 0
  %179 = vmatmul.mubr.bf16.gmra.mrb[0].mxu0 %v117
  %v180 = vpop.f32.mrb[0].mxu0
  %v181 = vadd.f32 %v91, %v180
  %v182 = vpop.f32.mrb[0].mxu0
  %v183 = vpop.f32.mrb[0].mxu0
  %v184 = vadd.f32 %v96, %v183
  %v185 = vpop.f32.mrb[0].mxu0
  %186 = vdwg.mxu0
  %v187 = vld [vmem:[%s3] sm:$0xff]
  %v188 = vld [vmem:[%s3 + $0x8] sm:$0xff]
  %v189 = vld [vmem:[%s3 + $0x10] sm:$0xff]
  %v190 = vld [vmem:[%s3 + $0x18] sm:$0xff]
  %v191 = vld [vmem:[%s3 + $0x20] sm:$0xff]
  %v192 = vld [vmem:[%s3 + $0x28] sm:$0xff]
  %v193 = vld [vmem:[%s3 + $0x30] sm:$0xff]
  %v194 = vld [vmem:[%s3 + $0x38] sm:$0xff]
  %v195 = vadd.f32 %v157, %v187
  %v196 = vadd.f32 %v160, %v188
  %v197 = vadd.f32 %v165, %v189
  %v198 = vadd.f32 %v168, %v190
  %v199 = vadd.f32 %v173, %v191
  %v200 = vadd.f32 %v176, %v192
  %v201 = vadd.f32 %v181, %v193
  %v202 = vadd.f32 %v184, %v194
  %vm203 = vcmask 785408
  %204 = vst.msk [vmem:[%s4] sm:$0xff] %vm203, %v195
  %205 = vst.msk [vmem:[%s4 + $0x8] sm:$0xff] %vm203, %v196
  %206 = vst.msk [vmem:[%s4 + $0x10] sm:$0xff] %vm203, %v197
  %207 = vst.msk [vmem:[%s4 + $0x18] sm:$0xff] %vm203, %v198
  %208 = vst.msk [vmem:[%s4 + $0x20] sm:$0xff] %vm203, %v199
  %209 = vst.msk [vmem:[%s4 + $0x28] sm:$0xff] %vm203, %v200
  %210 = vst.msk [vmem:[%s4 + $0x30] sm:$0xff] %vm203, %v201
  %211 = vst.msk [vmem:[%s4 + $0x38] sm:$0xff] %vm203, %v202
  // Predicated region
  $region18: #{tst_forward.8} parent=0 // pred_check
    _
  $region19: #{tst_forward.8} parent=0 // pred_check_branch
    %213 = sbr.rel (0) target = $region21
  $region20: #{tst_forward.8} parent=0 // pred_region
    _
  $region21: #{tst_forward.8} parent=0 // pred_fallthru
    _
  // Predicated region
  $region22: #{tst_forward.8} parent=0 // pred_check
    _
  $region23: #{tst_forward.8} parent=0 // pred_check_branch
    %215 = sbr.rel (0) target = $region25
  $region24: #{tst_forward.8} parent=0 // pred_region
    _
  $region25: #{tst_forward.8} parent=0 // pred_fallthru
    _

// kernel: tst_forward.9
$region0: #{tst_forward.9}
  #allocation0 [shape = 'u32[]', space=smem, size = 0x4, offset = 0x4, fixed_abs, tag = 'smem constant byte address 0x4 - core index']
  #allocation1 [shape = 'u32[144,128]{1,0:T(1,128)}', space=vmem, size = 0x12000, scoped, tag = 'internal scratch']
  %s0 = inlined_call_operand.vmem [shape: f32[64,384], index: 0, kind: input, shape index: {}]
  %s1 = inlined_call_operand.vmem [shape: bf16[32,64], index: 1, kind: input, shape index: {}]
  %s2 = inlined_call_operand.vmem [shape: f32[32,1], index: 2, kind: input, shape index: {}]
  %s3 = inlined_call_operand.vmem [shape: f32[32,384], index: 3, kind: input, shape index: {}]
  %s4 = inlined_call_operand.vmem [shape: bf16[3,32,8], index: 4, kind: input, shape index: {}]
  %s5 = inlined_call_operand.vmem [shape: f32[32,1], index: 5, kind: input, shape index: {}]
  %s6 = inlined_call_operand.vmem [shape: f32[32,512], index: 6, kind: output, shape index: {}]
  %s7 = sld [smem:[#allocation0]]
  $region34: #{tst_forward.9} parent=0
    _
  %s9 = ssub.s32 1, %s7
  %s10 = scalar_select 0, %s9, %s7
  // Predicated region
  $region2: #{tst_forward.9} parent=0 // pred_check
    _
  $region3: #{tst_forward.9} parent=0 // pred_check_branch
    %12 = sbr.rel (0) target = $region5
  $region4: #{tst_forward.9} parent=0 // pred_region
    _
  $region5: #{tst_forward.9} parent=0 // pred_fallthru
    _
  // Predicated region
  $region6: #{tst_forward.9} parent=0 // pred_check
    _
  $region7: #{tst_forward.9} parent=0 // pred_check_branch
    %14 = sbr.rel (0) target = $region9
  $region8: #{tst_forward.9} parent=0 // pred_region
    _
  $region9: #{tst_forward.9} parent=0 // pred_fallthru
    _
  // Predicated region
  $region10: #{tst_forward.9} parent=0 // pred_check
    _
  $region11: #{tst_forward.9} parent=0 // pred_check_branch
    %16 = sbr.rel (0) target = $region13
  $region12: #{tst_forward.9} parent=0 // pred_region
    _
  $region13: #{tst_forward.9} parent=0 // pred_fallthru
    _
  // Predicated region
  $region14: #{tst_forward.9} parent=0 // pred_check
    _
  $region15: #{tst_forward.9} parent=0 // pred_check_branch
    %18 = sbr.rel (0) target = $region17
  $region16: #{tst_forward.9} parent=0 // pred_region
    _
  $region17: #{tst_forward.9} parent=0 // pred_fallthru
    _
  // Predicated region
  $region18: #{tst_forward.9} parent=0 // pred_check
    _
  $region19: #{tst_forward.9} parent=0 // pred_check_branch
    %20 = sbr.rel (0) target = $region21
  $region20: #{tst_forward.9} parent=0 // pred_region
    _
  $region21: #{tst_forward.9} parent=0 // pred_fallthru
    _
  // Predicated region
  $region22: #{tst_forward.9} parent=0 // pred_check
    _
  $region23: #{tst_forward.9} parent=0 // pred_check_branch
    %22 = sbr.rel (0) target = $region25
  $region24: #{tst_forward.9} parent=0 // pred_region
    _
  $region25: #{tst_forward.9} parent=0 // pred_fallthru
    _
  %v24 = vld [vmem:[%s1] sm:$0xf]
  %v25 = vld [vmem:[%s1 + $0x4] sm:$0xf]
  %v26 = vld [vmem:[%s1 + $0x8] sm:$0xf]
  %v27 = vld [vmem:[%s1 + $0xc] sm:$0xf]
  %v28 = vld [vmem:[%s0] sm:$0xff]
  %v29 = vld [vmem:[%s0 + $0x8] sm:$0xff]
  %v30 = vld [vmem:[%s0 + $0x10] sm:$0xff]
  %v31 = vld [vmem:[%s0 + $0x18] sm:$0xff]
  %v32 = vld [vmem:[%s0 + $0x20] sm:$0xff]
  %v33 = vld [vmem:[%s0 + $0x28] sm:$0xff]
  %v34 = vld [vmem:[%s0 + $0x30] sm:$0xff]
  %v35 = vld [vmem:[%s0 + $0x38] sm:$0xff]
  %v36 = vld [vmem:[%s0 + $0x40] sm:$0xff]
  %v37 = vld [vmem:[%s0 + $0x48] sm:$0xff]
  %v38 = vld [vmem:[%s0 + $0x50] sm:$0xff]
  %v39 = vld [vmem:[%s0 + $0x58] sm:$0xff]
  %v40 = vld [vmem:[%s0 + $0x60] sm:$0xff]
  %v41 = vld [vmem:[%s0 + $0x68] sm:$0xff]
  %v42 = vld [vmem:[%s0 + $0x70] sm:$0xff]
  %v43 = vld [vmem:[%s0 + $0x78] sm:$0xff]
  %v44 = vld [vmem:[%s0 + $0x80] sm:$0xff]
  %v45 = vld [vmem:[%s0 + $0x88] sm:$0xff]
  %v46 = vld [vmem:[%s0 + $0x90] sm:$0xff]
  %v47 = vld [vmem:[%s0 + $0x98] sm:$0xff]
  %v48 = vld [vmem:[%s0 + $0xa0] sm:$0xff]
  %v49 = vld [vmem:[%s0 + $0xa8] sm:$0xff]
  %v50 = vld [vmem:[%s0 + $0xb0] sm:$0xff]
  %v51 = vld [vmem:[%s0 + $0xb8] sm:$0xff]
  %v52 = vpack.c.bf16 %v31, %v28
  %v53 = vpack.c.bf16 %v32, %v29
  %v54 = vpack.c.bf16 %v33, %v30
  %v55 = vpack.c.bf16 %v37, %v34
  %v56 = vpack.c.bf16 %v38, %v35
  %v57 = vpack.c.bf16 %v39, %v36
  %v58 = vpack.c.bf16 %v43, %v40
  %v59 = vpack.c.bf16 %v44, %v41
  %v60 = vpack.c.bf16 %v45, %v42
  %v61 = vpack.c.bf16 %v49, %v46
  %v62 = vpack.c.bf16 %v50, %v47
  %v63 = vpack.c.bf16 %v51, %v48
  %v64 = vld [vmem:[%s2] sm:$0xff]
  %v65 = vld [vmem:[%s2 + $0x8] sm:$0xff]
  %v66 = vld [vmem:[%s2 + $0x10] sm:$0xff]
  %v67 = vld [vmem:[%s2 + $0x18] sm:$0xff]
  %69 = vset.pattern.permute.xlu0 0
  %70 = vperm.xlu0 %69, %v64
  %v71 = vpop.permute.xlu0 %70
  %74 = vset.pattern.permute.xlu0 0
  %75 = vperm.xlu0 %74, %v65
  %v76 = vpop.permute.xlu0 %75
  %79 = vset.pattern.permute.xlu0 0
  %80 = vperm.xlu0 %79, %v66
  %v81 = vpop.permute.xlu0 %80
  %84 = vset.pattern.permute.xlu0 0
  %85 = vperm.xlu0 %84, %v67
  %v86 = vpop.permute.xlu0 %85
  %v92 = vunpack.c.l.b16 %v24
  %v93 = vunpack.c.l.b16 %v25
  %v94 = vunpack.c.l.b16 %v26
  %v95 = vunpack.c.l.b16 %v27
  %v96 = vpack.c.b16 %v93, %v92
  %v97 = vpack.c.b16 %v95, %v94
  %vm98 = vcmask 523264
  %v100 = vsel %vm98, %v96, 0
  %v103 = vsel %vm98, %v97, 0
  %105 = vmatprep.subr.bf16.mxu0 %v53
  %106 = vmatpush1.bf16.msra.mxu0 %v52
  %107 = vmatprep.subr.bf16.mxu0 %v56
  %108 = vmatpush1.bf16.msra.mxu0 %v55
  %109 = vmatprep.subr.bf16.mxu0 %v59
  %110 = vmatpush1.bf16.msra.mxu0 %v58
  %111 = vmatprep.subr.bf16.mxu0 %v62
  %112 = vmatpush1.bf16.msra.mxu0 %v61
  %113 = vmatprep.subr.bf16.mxu0 0
  %114 = vmatpush1.bf16.msra.mxu0 0
  %115 = vmatprep.subr.bf16.mxu0 0
  %116 = vmatpush1.bf16.msra.mxu0 0
  %117 = vmatprep.subr.bf16.mxu0 0
  %118 = vmatpush1.bf16.msra.mxu0 0
  %119 = vmatprep.subr.bf16.mxu0 0
  %120 = vmatpush1.bf16.msra.mxu0 0
  %121 = vmatprep.subr.bf16.mxu0 0
  %122 = vmatpush1.bf16.msra.mxu0 0
  %123 = vmatprep.subr.bf16.mxu0 0
  %124 = vmatpush1.bf16.msra.mxu0 0
  %125 = vmatprep.subr.bf16.mxu0 0
  %126 = vmatpush1.bf16.msra.mxu0 0
  %127 = vmatprep.subr.bf16.mxu0 0
  %128 = vmatpush1.bf16.msra.mxu0 0
  %129 = vmatprep.subr.bf16.mxu0 0
  %130 = vmatpush1.bf16.msra.mxu0 0
  %131 = vmatprep.subr.bf16.mxu0 0
  %132 = vmatpush1.bf16.msra.mxu0 0
  %133 = vmatprep.subr.bf16.mxu0 0
  %134 = vmatpush1.bf16.msra.mxu0 0
  %135 = vmatprep.subr.bf16.mxu0 0
  %136 = vmatpush1.bf16.msra.mxu0 0
  %137 = vmatprep.mubr.bf16.mxu0 0
  %138 = vmatmul.mubr.bf16.gmra.mrb[0].mxu0 %v100
  %v139 = vpop.f32.mrb[0].mxu0
  %v140 = vadd.f32 %v71, %v139
  %v141 = vpop.f32.mrb[0].mxu0
  %v142 = vadd.f32 %v71, %v141
  %v143 = vpop.f32.mrb[0].mxu0
  %v144 = vadd.f32 %v76, %v143
  %v145 = vpop.f32.mrb[0].mxu0
  %v146 = vadd.f32 %v76, %v145
  %147 = vmatprep.mubr.bf16.mxu0 0
  %148 = vmatmul.mubr.bf16.gmra.mrb[0].mxu0 %v103
  %v149 = vpop.f32.mrb[0].mxu0
  %v150 = vadd.f32 %v81, %v149
  %v151 = vpop.f32.mrb[0].mxu0
  %v152 = vadd.f32 %v81, %v151
  %v153 = vpop.f32.mrb[0].mxu0
  %v154 = vadd.f32 %v86, %v153
  %v155 = vpop.f32.mrb[0].mxu0
  %v156 = vadd.f32 %v86, %v155
  %157 = vdwg.mxu0
  %158 = vmatprep.subr.bf16.mxu0 0
  %159 = vmatpush1.bf16.msra.mxu0 %v54
  %160 = vmatprep.subr.bf16.mxu0 0
  %161 = vmatpush1.bf16.msra.mxu0 %v57
  %162 = vmatprep.subr.bf16.mxu0 0
  %163 = vmatpush1.bf16.msra.mxu0 %v60
  %164 = vmatprep.subr.bf16.mxu0 0
  %165 = vmatpush1.bf16.msra.mxu0 %v63
  %166 = vmatprep.subr.bf16.mxu0 0
  %167 = vmatpush1.bf16.msra.mxu0 0
  %168 = vmatprep.subr.bf16.mxu0 0
  %169 = vmatpush1.bf16.msra.mxu0 0
  %170 = vmatprep.subr.bf16.mxu0 0
  %171 = vmatpush1.bf16.msra.mxu0 0
  %172 = vmatprep.subr.bf16.mxu0 0
  %173 = vmatpush1.bf16.msra.mxu0 0
  %174 = vmatprep.subr.bf16.mxu0 0
  %175 = vmatpush1.bf16.msra.mxu0 0
  %176 = vmatprep.subr.bf16.mxu0 0
  %177 = vmatpush1.bf16.msra.mxu0 0
  %178 = vmatprep.subr.bf16.mxu0 0
  %179 = vmatpush1.bf16.msra.mxu0 0
  %180 = vmatprep.subr.bf16.mxu0 0
  %181 = vmatpush1.bf16.msra.mxu0 0
  %182 = vmatprep.subr.bf16.mxu0 0
  %183 = vmatpush1.bf16.msra.mxu0 0
  %184 = vmatprep.subr.bf16.mxu0 0
  %185 = vmatpush1.bf16.msra.mxu0 0
  %186 = vmatprep.subr.bf16.mxu0 0
  %187 = vmatpush1.bf16.msra.mxu0 0
  %188 = vmatprep.subr.bf16.mxu0 0
  %189 = vmatpush1.bf16.msra.mxu0 0
  %190 = vmatprep.mubr.bf16.mxu0 0
  %191 = vmatmul.mubr.bf16.gmra.mrb[0].mxu0 %v100
  %v192 = vpop.f32.mrb[0].mxu0
  %v193 = vadd.f32 %v71, %v192
  %v194 = vpop.f32.mrb[0].mxu0
  %v195 = vpop.f32.mrb[0].mxu0
  %v196 = vadd.f32 %v76, %v195
  %v197 = vpop.f32.mrb[0].mxu0
  %198 = vmatprep.mubr.bf16.mxu0 0
  %199 = vmatmul.mubr.bf16.gmra.mrb[0].mxu0 %v103
  %v200 = vpop.f32.mrb[0].mxu0
  %v201 = vadd.f32 %v81, %v200
  %v202 = vpop.f32.mrb[0].mxu0
  %v203 = vpop.f32.mrb[0].mxu0
  %v204 = vadd.f32 %v86, %v203
  %v205 = vpop.f32.mrb[0].mxu0
  %206 = vdwg.mxu0
  %v207 = vld [vmem:[%s3] sm:$0xff]
  %v208 = vld [vmem:[%s3 + $0x8] sm:$0xff]
  %v209 = vld [vmem:[%s3 + $0x10] sm:$0xff]
  %v210 = vld [vmem:[%s3 + $0x18] sm:$0xff]
  %v211 = vld [vmem:[%s3 + $0x20] sm:$0xff]
  %v212 = vld [vmem:[%s3 + $0x28] sm:$0xff]
  %v213 = vld [vmem:[%s3 + $0x30] sm:$0xff]
  %v214 = vld [vmem:[%s3 + $0x38] sm:$0xff]
  %v215 = vld [vmem:[%s3 + $0x40] sm:$0xff]
  %v216 = vld [vmem:[%s3 + $0x48] sm:$0xff]
  %v217 = vld [vmem:[%s3 + $0x50] sm:$0xff]
  %v218 = vld [vmem:[%s3 + $0x58] sm:$0xff]
  %v219 = vadd.f32 %v140, %v207
  %v220 = vadd.f32 %v142, %v208
  %v221 = vadd.f32 %v193, %v209
  %v222 = vadd.f32 %v144, %v210
  %v223 = vadd.f32 %v146, %v211
  %v224 = vadd.f32 %v196, %v212
  %v225 = vadd.f32 %v150, %v213
  %v226 = vadd.f32 %v152, %v214
  %v227 = vadd.f32 %v201, %v215
  %v228 = vadd.f32 %v154, %v216
  %v229 = vadd.f32 %v156, %v217
  %v230 = vadd.f32 %v204, %v218
  %v231 = vpack.c.bf16 %v219, %v219
  %v232 = vpack.c.bf16 %v222, %v222
  %v233 = vpack.c.bf16 %v225, %v225
  %v234 = vpack.c.bf16 %v228, %v228
  %v235 = vld [vmem:[%s4] sm:$0xf]
  %v236 = vld [vmem:[%s4 + $0x4] sm:$0xf]
  %v237 = vld [vmem:[%s4 + $0x8] sm:$0xf]
  %v238 = vld [vmem:[%s4 + $0xc] sm:$0xf]
  %v239 = vpack.c.bf16 %v220, %v220
  %v240 = vpack.c.bf16 %v223, %v223
  %v241 = vpack.c.bf16 %v226, %v226
  %v242 = vpack.c.bf16 %v229, %v229
  %s243 = scalar_lea.vmem %s4, 16
  %v244 = vld [vmem:[%s243] sm:$0xf]
  %v245 = vld [vmem:[%s243 + $0x4] sm:$0xf]
  %v246 = vld [vmem:[%s243 + $0x8] sm:$0xf]
  %v247 = vld [vmem:[%s243 + $0xc] sm:$0xf]
  %v252 = vunpack.c.l.b16 %v244
  %v253 = vunpack.c.l.b16 %v245
  %v254 = vunpack.c.l.b16 %v246
  %v255 = vunpack.c.l.b16 %v247
  %v256 = vpack.c.b16 %v253, %v252
  %v257 = vpack.c.b16 %v255, %v254
  %vm258 = vcmask 64512
  %v260 = vsel %vm258, %v256, 0
  %v263 = vsel %vm258, %v257, 0
  %vm265 = vcmask 1043456
  %v267 = vsel %vm265, %v239, 0
  %v270 = vsel %vm265, %v240, 0
  %v273 = vsel %vm265, %v241, 0
  %v276 = vsel %vm265, %v242, 0
  %278 = vmatprep.subr.bf16.mxu0 %v270
  %279 = vmatpush1.bf16.msra.mxu0 %v267
  %280 = vmatprep.subr.bf16.mxu0 0
  %281 = vmatpush1.bf16.msra.mxu0 0
  %282 = vmatprep.subr.bf16.mxu0 0
  %283 = vmatpush1.bf16.msra.mxu0 0
  %284 = vmatprep.subr.bf16.mxu0 0
  %285 = vmatpush1.bf16.msra.mxu0 0
  %286 = vmatprep.subr.bf16.mxu0 0
  %287 = vmatpush1.bf16.msra.mxu0 0
  %288 = vmatprep.subr.bf16.mxu0 0
  %289 = vmatpush1.bf16.msra.mxu0 0
  %290 = vmatprep.subr.bf16.mxu0 0
  %291 = vmatpush1.bf16.msra.mxu0 0
  %292 = vmatprep.subr.bf16.mxu0 0
  %293 = vmatpush1.bf16.msra.mxu0 0
  %294 = vmatprep.subr.bf16.mxu0 0
  %295 = vmatpush1.bf16.msra.mxu0 0
  %296 = vmatprep.subr.bf16.mxu0 0
  %297 = vmatpush1.bf16.msra.mxu0 0
  %298 = vmatprep.subr.bf16.mxu0 0
  %299 = vmatpush1.bf16.msra.mxu0 0
  %300 = vmatprep.subr.bf16.mxu0 0
  %301 = vmatpush1.bf16.msra.mxu0 0
  %302 = vmatprep.subr.bf16.mxu0 0
  %303 = vmatpush1.bf16.msra.mxu0 0
  %304 = vmatprep.subr.bf16.mxu0 0
  %305 = vmatpush1.bf16.msra.mxu0 0
  %306 = vmatprep.subr.bf16.mxu0 0
  %307 = vmatpush1.bf16.msra.mxu0 0
  %308 = vmatprep.subr.bf16.mxu0 0
  %309 = vmatpush1.bf16.msra.mxu0 0
  %310 = vmatprep.mubr.bf16.mxu0 0
  %311 = vmatmul.mubr.bf16.gmra.mrb[0].mxu0 %v260
  %v312 = vpop.f32.mrb[0].mxu0
  %v313 = vadd.f32 0.0, %v312
  %v314 = vpop.f32.mrb[0].mxu0
  %v315 = vadd.f32 0.0, %v314
  %v316 = vpop.f32.mrb[0].mxu0
  %v317 = vadd.f32 0.0, %v316
  %v318 = vpop.f32.mrb[0].mxu0
  %v319 = vadd.f32 0.0, %v318
  %320 = vmatprep.mubr.bf16.mxu0 0
  %321 = vmatmul.mubr.bf16.gmra.mrb[0].mxu0 %v263
  %v322 = vpop.f32.mrb[0].mxu0
  %v323 = vadd.f32 0.0, %v322
  %v324 = vpop.f32.mrb[0].mxu0
  %v325 = vadd.f32 0.0, %v324
  %v326 = vpop.f32.mrb[0].mxu0
  %v327 = vadd.f32 0.0, %v326
  %v328 = vpop.f32.mrb[0].mxu0
  %v329 = vadd.f32 0.0, %v328
  %330 = vdwg.mxu0
  %331 = vmatprep.subr.bf16.mxu0 %v276
  %332 = vmatpush1.bf16.msra.mxu0 %v273
  %333 = vmatprep.subr.bf16.mxu0 0
  %334 = vmatpush1.bf16.msra.mxu0 0
  %335 = vmatprep.subr.bf16.mxu0 0
  %336 = vmatpush1.bf16.msra.mxu0 0
  %337 = vmatprep.subr.bf16.mxu0 0
  %338 = vmatpush1.bf16.msra.mxu0 0
  %339 = vmatprep.subr.bf16.mxu0 0
  %340 = vmatpush1.bf16.msra.mxu0 0
  %341 = vmatprep.subr.bf16.mxu0 0
  %342 = vmatpush1.bf16.msra.mxu0 0
  %343 = vmatprep.subr.bf16.mxu0 0
  %344 = vmatpush1.bf16.msra.mxu0 0
  %345 = vmatprep.subr.bf16.mxu0 0
  %346 = vmatpush1.bf16.msra.mxu0 0
  %347 = vmatprep.subr.bf16.mxu0 0
  %348 = vmatpush1.bf16.msra.mxu0 0
  %349 = vmatprep.subr.bf16.mxu0 0
  %350 = vmatpush1.bf16.msra.mxu0 0
  %351 = vmatprep.subr.bf16.mxu0 0
  %352 = vmatpush1.bf16.msra.mxu0 0
  %353 = vmatprep.subr.bf16.mxu0 0
  %354 = vmatpush1.bf16.msra.mxu0 0
  %355 = vmatprep.subr.bf16.mxu0 0
  %356 = vmatpush1.bf16.msra.mxu0 0
  %357 = vmatprep.subr.bf16.mxu0 0
  %358 = vmatpush1.bf16.msra.mxu0 0
  %359 = vmatprep.subr.bf16.mxu0 0
  %360 = vmatpush1.bf16.msra.mxu0 0
  %361 = vmatprep.subr.bf16.mxu0 0
  %362 = vmatpush1.bf16.msra.mxu0 0
  %363 = vmatprep.mubr.bf16.mxu0 0
  %364 = vmatmul.mubr.bf16.gmra.mrb[0].mxu0 %v260
  %v365 = vpop.f32.mrb[0].mxu0
  %v366 = vadd.f32 0.0, %v365
  %v367 = vpop.f32.mrb[0].mxu0
  %v368 = vadd.f32 0.0, %v367
  %v369 = vpop.f32.mrb[0].mxu0
  %v370 = vadd.f32 0.0, %v369
  %v371 = vpop.f32.mrb[0].mxu0
  %v372 = vadd.f32 0.0, %v371
  %373 = vmatprep.mubr.bf16.mxu0 0
  %374 = vmatmul.mubr.bf16.gmra.mrb[0].mxu0 %v263
  %v375 = vpop.f32.mrb[0].mxu0
  %v376 = vadd.f32 0.0, %v375
  %v377 = vpop.f32.mrb[0].mxu0
  %v378 = vadd.f32 0.0, %v377
  %v379 = vpop.f32.mrb[0].mxu0
  %v380 = vadd.f32 0.0, %v379
  %v381 = vpop.f32.mrb[0].mxu0
  %v382 = vadd.f32 0.0, %v381
  %383 = vdwg.mxu0
  %v388 = vunpack.c.l.b16 %v235
  %v389 = vunpack.c.l.b16 %v236
  %v390 = vunpack.c.l.b16 %v237
  %v391 = vunpack.c.l.b16 %v238
  %v392 = vpack.c.b16 %v389, %v388
  %v393 = vpack.c.b16 %v391, %v390
  %v395 = vsel %vm258, %v392, 0
  %v398 = vsel %vm258, %v393, 0
  %v401 = vsel %vm265, %v231, 0
  %v404 = vsel %vm265, %v232, 0
  %v407 = vsel %vm265, %v233, 0
  %v410 = vsel %vm265, %v234, 0
  %412 = vmatprep.subr.bf16.mxu0 %v404
  %413 = vmatpush1.bf16.msra.mxu0 %v401
  %414 = vmatprep.subr.bf16.mxu0 0
  %415 = vmatpush1.bf16.msra.mxu0 0
  %416 = vmatprep.subr.bf16.mxu0 0
  %417 = vmatpush1.bf16.msra.mxu0 0
  %418 = vmatprep.subr.bf16.mxu0 0
  %419 = vmatpush1.bf16.msra.mxu0 0
  %420 = vmatprep.subr.bf16.mxu0 0
  %421 = vmatpush1.bf16.msra.mxu0 0
  %422 = vmatprep.subr.bf16.mxu0 0
  %423 = vmatpush1.bf16.msra.mxu0 0
  %424 = vmatprep.subr.bf16.mxu0 0
  %425 = vmatpush1.bf16.msra.mxu0 0
  %426 = vmatprep.subr.bf16.mxu0 0
  %427 = vmatpush1.bf16.msra.mxu0 0
  %428 = vmatprep.subr.bf16.mxu0 0
  %429 = vmatpush1.bf16.msra.mxu0 0
  %430 = vmatprep.subr.bf16.mxu0 0
  %431 = vmatpush1.bf16.msra.mxu0 0
  %432 = vmatprep.subr.bf16.mxu0 0
  %433 = vmatpush1.bf16.msra.mxu0 0
  %434 = vmatprep.subr.bf16.mxu0 0
  %435 = vmatpush1.bf16.msra.mxu0 0
  %436 = vmatprep.subr.bf16.mxu0 0
  %437 = vmatpush1.bf16.msra.mxu0 0
  %438 = vmatprep.subr.bf16.mxu0 0
  %439 = vmatpush1.bf16.msra.mxu0 0
  %440 = vmatprep.subr.bf16.mxu0 0
  %441 = vmatpush1.bf16.msra.mxu0 0
  %442 = vmatprep.subr.bf16.mxu0 0
  %443 = vmatpush1.bf16.msra.mxu0 0
  %444 = vmatprep.mubr.bf16.mxu0 0
  %445 = vmatmul.mubr.bf16.gmra.mrb[0].mxu0 %v395
  %v446 = vpop.f32.mrb[0].mxu0
  %v447 = vadd.f32 %v313, %v446
  %v448 = vpop.f32.mrb[0].mxu0
  %v449 = vadd.f32 %v315, %v448
  %v450 = vpop.f32.mrb[0].mxu0
  %v451 = vadd.f32 %v317, %v450
  %v452 = vpop.f32.mrb[0].mxu0
  %v453 = vadd.f32 %v319, %v452
  %454 = vmatprep.mubr.bf16.mxu0 0
  %455 = vmatmul.mubr.bf16.gmra.mrb[0].mxu0 %v398
  %v456 = vpop.f32.mrb[0].mxu0
  %v457 = vadd.f32 %v323, %v456
  %v458 = vpop.f32.mrb[0].mxu0
  %v459 = vadd.f32 %v325, %v458
  %v460 = vpop.f32.mrb[0].mxu0
  %v461 = vadd.f32 %v327, %v460
  %v462 = vpop.f32.mrb[0].mxu0
  %v463 = vadd.f32 %v329, %v462
  %464 = vdwg.mxu0
  %465 = vmatprep.subr.bf16.mxu0 %v410
  %466 = vmatpush1.bf16.msra.mxu0 %v407
  %467 = vmatprep.subr.bf16.mxu0 0
  %468 = vmatpush1.bf16.msra.mxu0 0
  %469 = vmatprep.subr.bf16.mxu0 0
  %470 = vmatpush1.bf16.msra.mxu0 0
  %471 = vmatprep.subr.bf16.mxu0 0
  %472 = vmatpush1.bf16.msra.mxu0 0
  %473 = vmatprep.subr.bf16.mxu0 0
  %474 = vmatpush1.bf16.msra.mxu0 0
  %475 = vmatprep.subr.bf16.mxu0 0
  %476 = vmatpush1.bf16.msra.mxu0 0
  %477 = vmatprep.subr.bf16.mxu0 0
  %478 = vmatpush1.bf16.msra.mxu0 0
  %479 = vmatprep.subr.bf16.mxu0 0
  %480 = vmatpush1.bf16.msra.mxu0 0
  %481 = vmatprep.subr.bf16.mxu0 0
  %482 = vmatpush1.bf16.msra.mxu0 0
  %483 = vmatprep.subr.bf16.mxu0 0
  %484 = vmatpush1.bf16.msra.mxu0 0
  %485 = vmatprep.subr.bf16.mxu0 0
  %486 = vmatpush1.bf16.msra.mxu0 0
  %487 = vmatprep.subr.bf16.mxu0 0
  %488 = vmatpush1.bf16.msra.mxu0 0
  %489 = vmatprep.subr.bf16.mxu0 0
  %490 = vmatpush1.bf16.msra.mxu0 0
  %491 = vmatprep.subr.bf16.mxu0 0
  %492 = vmatpush1.bf16.msra.mxu0 0
  %493 = vmatprep.subr.bf16.mxu0 0
  %494 = vmatpush1.bf16.msra.mxu0 0
  %495 = vmatprep.subr.bf16.mxu0 0
  %496 = vmatpush1.bf16.msra.mxu0 0
  %497 = vmatprep.mubr.bf16.mxu0 0
  %498 = vmatmul.mubr.bf16.gmra.mrb[0].mxu0 %v395
  %v499 = vpop.f32.mrb[0].mxu0
  %v500 = vadd.f32 %v366, %v499
  %v501 = vpop.f32.mrb[0].mxu0
  %v502 = vadd.f32 %v368, %v501
  %v503 = vpop.f32.mrb[0].mxu0
  %v504 = vadd.f32 %v370, %v503
  %v505 = vpop.f32.mrb[0].mxu0
  %v506 = vadd.f32 %v372, %v505
  %507 = vmatprep.mubr.bf16.mxu0 0
  %508 = vmatmul.mubr.bf16.gmra.mrb[0].mxu0 %v398
  %v509 = vpop.f32.mrb[0].mxu0
  %v510 = vadd.f32 %v376, %v509
  %v511 = vpop.f32.mrb[0].mxu0
  %v512 = vadd.f32 %v378, %v511
  %v513 = vpop.f32.mrb[0].mxu0
  %v514 = vadd.f32 %v380, %v513
  %v515 = vpop.f32.mrb[0].mxu0
  %v516 = vadd.f32 %v382, %v515
  %517 = vdwg.mxu0
  %v518 = vpack.c.bf16 %v221, %v221
  %v519 = vpack.c.bf16 %v224, %v224
  %v520 = vpack.c.bf16 %v227, %v227
  %v521 = vpack.c.bf16 %v230, %v230
  %s522 = scalar_lea.vmem %s4, 32
  %v523 = vld [vmem:[%s522] sm:$0xf]
  %v524 = vld [vmem:[%s522 + $0x4] sm:$0xf]
  %v525 = vld [vmem:[%s522 + $0x8] sm:$0xf]
  %v526 = vld [vmem:[%s522 + $0xc] sm:$0xf]
  %v531 = vunpack.c.l.b16 %v523
  %v532 = vunpack.c.l.b16 %v524
  %v533 = vunpack.c.l.b16 %v525
  %v534 = vunpack.c.l.b16 %v526
  %v535 = vpack.c.b16 %v532, %v531
  %v536 = vpack.c.b16 %v534, %v533
  %v538 = vsel %vm258, %v535, 0
  %v541 = vsel %vm258, %v536, 0
  %v544 = vsel %vm265, %v518, 0
  %v547 = vsel %vm265, %v519, 0
  %v550 = vsel %vm265, %v520, 0
  %v553 = vsel %vm265, %v521, 0
  %555 = vmatprep.subr.bf16.mxu0 %v547
  %556 = vmatpush1.bf16.msra.mxu0 %v544
  %557 = vmatprep.subr.bf16.mxu0 0
  %558 = vmatpush1.bf16.msra.mxu0 0
  %559 = vmatprep.subr.bf16.mxu0 0
  %560 = vmatpush1.bf16.msra.mxu0 0
  %561 = vmatprep.subr.bf16.mxu0 0
  %562 = vmatpush1.bf16.msra.mxu0 0
  %563 = vmatprep.subr.bf16.mxu0 0
  %564 = vmatpush1.bf16.msra.mxu0 0
  %565 = vmatprep.subr.bf16.mxu0 0
  %566 = vmatpush1.bf16.msra.mxu0 0
  %567 = vmatprep.subr.bf16.mxu0 0
  %568 = vmatpush1.bf16.msra.mxu0 0
  %569 = vmatprep.subr.bf16.mxu0 0
  %570 = vmatpush1.bf16.msra.mxu0 0
  %571 = vmatprep.subr.bf16.mxu0 0
  %572 = vmatpush1.bf16.msra.mxu0 0
  %573 = vmatprep.subr.bf16.mxu0 0
  %574 = vmatpush1.bf16.msra.mxu0 0
  %575 = vmatprep.subr.bf16.mxu0 0
  %576 = vmatpush1.bf16.msra.mxu0 0
  %577 = vmatprep.subr.bf16.mxu0 0
  %578 = vmatpush1.bf16.msra.mxu0 0
  %579 = vmatprep.subr.bf16.mxu0 0
  %580 = vmatpush1.bf16.msra.mxu0 0
  %581 = vmatprep.subr.bf16.mxu0 0
  %582 = vmatpush1.bf16.msra.mxu0 0
  %583 = vmatprep.subr.bf16.mxu0 0
  %584 = vmatpush1.bf16.msra.mxu0 0
  %585 = vmatprep.subr.bf16.mxu0 0
  %586 = vmatpush1.bf16.msra.mxu0 0
  %587 = vmatprep.mubr.bf16.mxu0 0
  %588 = vmatmul.mubr.bf16.gmra.mrb[0].mxu0 %v538
  %v589 = vpop.f32.mrb[0].mxu0
  %v590 = vadd.f32 0.0, %v589
  %v591 = vpop.f32.mrb[0].mxu0
  %v592 = vadd.f32 0.0, %v591
  %v593 = vpop.f32.mrb[0].mxu0
  %v594 = vadd.f32 0.0, %v593
  %v595 = vpop.f32.mrb[0].mxu0
  %v596 = vadd.f32 0.0, %v595
  %597 = vmatprep.mubr.bf16.mxu0 0
  %598 = vmatmul.mubr.bf16.gmra.mrb[0].mxu0 %v541
  %v599 = vpop.f32.mrb[0].mxu0
  %v600 = vadd.f32 0.0, %v599
  %v601 = vpop.f32.mrb[0].mxu0
  %v602 = vadd.f32 0.0, %v601
  %v603 = vpop.f32.mrb[0].mxu0
  %v604 = vadd.f32 0.0, %v603
  %v605 = vpop.f32.mrb[0].mxu0
  %v606 = vadd.f32 0.0, %v605
  %607 = vdwg.mxu0
  %608 = vmatprep.subr.bf16.mxu0 %v553
  %609 = vmatpush1.bf16.msra.mxu0 %v550
  %610 = vmatprep.subr.bf16.mxu0 0
  %611 = vmatpush1.bf16.msra.mxu0 0
  %612 = vmatprep.subr.bf16.mxu0 0
  %613 = vmatpush1.bf16.msra.mxu0 0
  %614 = vmatprep.subr.bf16.mxu0 0
  %615 = vmatpush1.bf16.msra.mxu0 0
  %616 = vmatprep.subr.bf16.mxu0 0
  %617 = vmatpush1.bf16.msra.mxu0 0
  %618 = vmatprep.subr.bf16.mxu0 0
  %619 = vmatpush1.bf16.msra.mxu0 0
  %620 = vmatprep.subr.bf16.mxu0 0
  %621 = vmatpush1.bf16.msra.mxu0 0
  %622 = vmatprep.subr.bf16.mxu0 0
  %623 = vmatpush1.bf16.msra.mxu0 0
  %624 = vmatprep.subr.bf16.mxu0 0
  %625 = vmatpush1.bf16.msra.mxu0 0
  %626 = vmatprep.subr.bf16.mxu0 0
  %627 = vmatpush1.bf16.msra.mxu0 0
  %628 = vmatprep.subr.bf16.mxu0 0
  %629 = vmatpush1.bf16.msra.mxu0 0
  %630 = vmatprep.subr.bf16.mxu0 0
  %631 = vmatpush1.bf16.msra.mxu0 0
  %632 = vmatprep.subr.bf16.mxu0 0
  %633 = vmatpush1.bf16.msra.mxu0 0
  %634 = vmatprep.subr.bf16.mxu0 0
  %635 = vmatpush1.bf16.msra.mxu0 0
  %636 = vmatprep.subr.bf16.mxu0 0
  %637 = vmatpush1.bf16.msra.mxu0 0
  %638 = vmatprep.subr.bf16.mxu0 0
  %639 = vmatpush1.bf16.msra.mxu0 0
  %640 = vmatprep.mubr.bf16.mxu0 0
  %641 = vmatmul.mubr.bf16.gmra.mrb[0].mxu0 %v538
  %v642 = vpop.f32.mrb[0].mxu0
  %v643 = vadd.f32 0.0, %v642
  %v644 = vpop.f32.mrb[0].mxu0
  %v645 = vadd.f32 0.0, %v644
  %v646 = vpop.f32.mrb[0].mxu0
  %v647 = vadd.f32 0.0, %v646
  %v648 = vpop.f32.mrb[0].mxu0
  %v649 = vadd.f32 0.0, %v648
  %650 = vmatprep.mubr.bf16.mxu0 0
  %651 = vmatmul.mubr.bf16.gmra.mrb[0].mxu0 %v541
  %v652 = vpop.f32.mrb[0].mxu0
  %v653 = vadd.f32 0.0, %v652
  %v654 = vpop.f32.mrb[0].mxu0
  %v655 = vadd.f32 0.0, %v654
  %v656 = vpop.f32.mrb[0].mxu0
  %v657 = vadd.f32 0.0, %v656
  %v658 = vpop.f32.mrb[0].mxu0
  %v659 = vadd.f32 0.0, %v658
  %660 = vdwg.mxu0
  %v661 = vadd.f32 %v447, %v590
  %v662 = vadd.f32 %v449, %v592
  %v663 = vadd.f32 %v500, %v643
  %v664 = vadd.f32 %v502, %v645
  %v665 = vadd.f32 %v451, %v594
  %v666 = vadd.f32 %v453, %v596
  %v667 = vadd.f32 %v504, %v647
  %v668 = vadd.f32 %v506, %v649
  %v669 = vadd.f32 %v457, %v600
  %v670 = vadd.f32 %v459, %v602
  %v671 = vadd.f32 %v510, %v653
  %v672 = vadd.f32 %v512, %v655
  %v673 = vadd.f32 %v461, %v604
  %v674 = vadd.f32 %v463, %v606
  %v675 = vadd.f32 %v514, %v657
  %v676 = vadd.f32 %v516, %v659
  %v677 = vld [vmem:[%s5] sm:$0xff]
  %v678 = vld [vmem:[%s5 + $0x8] sm:$0xff]
  %v679 = vld [vmem:[%s5 + $0x10] sm:$0xff]
  %v680 = vld [vmem:[%s5 + $0x18] sm:$0xff]
  %682 = vset.pattern.permute.xlu0 0
  %683 = vperm.xlu0 %682, %v677
  %v684 = vpop.permute.xlu0 %683
  %687 = vset.pattern.permute.xlu0 0
  %688 = vperm.xlu0 %687, %v678
  %v689 = vpop.permute.xlu0 %688
  %692 = vset.pattern.permute.xlu0 0
  %693 = vperm.xlu0 %692, %v679
  %v694 = vpop.permute.xlu0 %693
  %697 = vset.pattern.permute.xlu0 0
  %698 = vperm.xlu0 %697, %v680
  %v699 = vpop.permute.xlu0 %698
  %v701 = vadd.f32 %v661, %v684
  %v702 = vadd.f32 %v662, %v684
  %v703 = vadd.f32 %v663, %v684
  %v704 = vadd.f32 %v664, %v684
  %v705 = vadd.f32 %v665, %v689
  %v706 = vadd.f32 %v666, %v689
  %v707 = vadd.f32 %v667, %v689
  %v708 = vadd.f32 %v668, %v689
  %v709 = vadd.f32 %v669, %v694
  %v710 = vadd.f32 %v670, %v694
  %v711 = vadd.f32 %v671, %v694
  %v712 = vadd.f32 %v672, %v694
  %v713 = vadd.f32 %v673, %v699
  %v714 = vadd.f32 %v674, %v699
  %v715 = vadd.f32 %v675, %v699
  %v716 = vadd.f32 %v676, %v699
  %717 = vst [vmem:[%s6] sm:$0xff] %v701
  %718 = vst [vmem:[%s6 + $0x8] sm:$0xff] %v702
  %719 = vst [vmem:[%s6 + $0x10] sm:$0xff] %v703
  %720 = vst [vmem:[%s6 + $0x18] sm:$0xff] %v704
  %721 = vst [vmem:[%s6 + $0x20] sm:$0xff] %v705
  %722 = vst [vmem:[%s6 + $0x28] sm:$0xff] %v706
  %723 = vst [vmem:[%s6 + $0x30] sm:$0xff] %v707
  %724 = vst [vmem:[%s6 + $0x38] sm:$0xff] %v708
  %725 = vst [vmem:[%s6 + $0x40] sm:$0xff] %v709
  %726 = vst [vmem:[%s6 + $0x48] sm:$0xff] %v710
  %727 = vst [vmem:[%s6 + $0x50] sm:$0xff] %v711
  %728 = vst [vmem:[%s6 + $0x58] sm:$0xff] %v712
  %729 = vst [vmem:[%s6 + $0x60] sm:$0xff] %v713
  %730 = vst [vmem:[%s6 + $0x68] sm:$0xff] %v714
  %731 = vst [vmem:[%s6 + $0x70] sm:$0xff] %v715
  %732 = vst [vmem:[%s6 + $0x78] sm:$0xff] %v716
  // Predicated region
  $region26: #{tst_forward.9} parent=0 // pred_check
    _
  $region27: #{tst_forward.9} parent=0 // pred_check_branch
    %734 = sbr.rel (0) target = $region29
  $region28: #{tst_forward.9} parent=0 // pred_region
    _
  $region29: #{tst_forward.9} parent=0 // pred_fallthru
    _
  // Predicated region
  $region30: #{tst_forward.9} parent=0 // pred_check
    _
  $region31: #{tst_forward.9} parent=0 // pred_check_branch
    %736 = sbr.rel (0) target = $region33
  $region32: #{tst_forward.9} parent=0 // pred_region
    _
  $region33: #{tst_forward.9} parent=0 // pred_fallthru
    _

</llo_original>
